<compile_context>
chip_gen: v7x
topology: tpu7x:2x2x1
jax: 0.10.0
libtpu: 0.0.40
codegen_flags: <defaults>
</compile_context>

<pallas_src>
import functools
from math import sqrt

import jax
import jax.numpy as jnp
from jax import lax
from jax.experimental import pallas as pl
from jax.experimental.pallas import tpu as pltpu


def _mha_flash_kernel(xq_ref, xkv_ref, wq_ref, bq_ref, wk_ref, bk_ref,
                      wv_ref, bv_ref, wo_ref, bo_ref, o_ref,
                      q_scr, m_scr, l_scr, acc_scr,
                      *, num_heads, head_dim, scale):
    """Grid point = (batch b, query tile qi, kv tile ki); kv axis is the reduction.

    xq_ref  : (1, TQ, E) query-rows tile of x
    xkv_ref : (1, TK, E) key/value-rows tile of x
    wq/wk/wv/wo : (E, E) bf16 fused weights ; bq/bk/bv/bo : (1, E) fp32 biases
    o_ref   : (1, TQ, E) output tile (written only on last kv step)
    q_scr   : (TQ, E) bf16   pre-scaled Q slab (all heads)
    m_scr   : (H, TQ, 1) f32 running max per head
    l_scr   : (H, TQ, 1) f32 running sum per head
    acc_scr : (TQ, E) f32    unnormalized attention output slab (all heads)
    """
    ki = pl.program_id(2)

    @pl.when(ki == 0)
    def _init():
        xq = xq_ref[0].astype(jnp.bfloat16)                       # (TQ, E)
        q = jnp.dot(xq, wq_ref[...], preferred_element_type=jnp.float32) + bq_ref[...]
        q_scr[...] = (q * scale).astype(q_scr.dtype)              # fold 1/sqrt(Dh) into Q
        m_scr[...] = jnp.full(m_scr.shape, -jnp.inf, m_scr.dtype)
        l_scr[...] = jnp.zeros(l_scr.shape, l_scr.dtype)
        acc_scr[...] = jnp.zeros(acc_scr.shape, acc_scr.dtype)

    # K / V for this KV tile, all heads at once (lane-dense matmuls).
    xkv = xkv_ref[0].astype(jnp.bfloat16)                         # (TK, E)
    k = (jnp.dot(xkv, wk_ref[...], preferred_element_type=jnp.float32)
         + bk_ref[...]).astype(jnp.bfloat16)                      # (TK, E)
    v = (jnp.dot(xkv, wv_ref[...], preferred_element_type=jnp.float32)
         + bv_ref[...]).astype(jnp.bfloat16)                      # (TK, E)

    # Online softmax per head; accumulate into the (TQ, E) slab at column h*Dh.
    for h in range(num_heads):
        col = pl.ds(h * head_dim, head_dim)
        q_h = q_scr[:, col]                                       # (TQ, Dh) bf16 (pre-scaled)
        k_h = k[:, h * head_dim:(h + 1) * head_dim]               # (TK, Dh) bf16
        v_h = v[:, h * head_dim:(h + 1) * head_dim]               # (TK, Dh) bf16

        # scores = Q_h @ K_h^T without materializing a transpose.
        s = lax.dot_general(q_h, k_h, (((1,), (1,)), ((), ())),
                            preferred_element_type=jnp.float32)   # (TQ, TK) f32

        m_prev = m_scr[h]                                         # (TQ, 1)
        m_new = jnp.maximum(m_prev, jnp.max(s, axis=-1, keepdims=True))
        alpha = jnp.exp(m_prev - m_new)                           # rescale of old state
        p = jnp.exp(s - m_new)                                    # (TQ, TK) f32

        l_scr[h] = alpha * l_scr[h] + jnp.sum(p, axis=-1, keepdims=True)
        acc_scr[:, col] = alpha * acc_scr[:, col] + jnp.dot(
            p.astype(jnp.bfloat16), v_h, preferred_element_type=jnp.float32)
        m_scr[h] = m_new

    @pl.when(ki == pl.num_programs(2) - 1)
    def _finalize():
        # Normalize each head's columns, then fused output projection.
        for h in range(num_heads):
            col = pl.ds(h * head_dim, head_dim)
            acc_scr[:, col] = acc_scr[:, col] * pl.reciprocal(l_scr[h], approx=True)
        out = jnp.dot(acc_scr[...].astype(jnp.bfloat16), wo_ref[...],
                      preferred_element_type=jnp.float32) + bo_ref[...]
        o_ref[0] = out.astype(o_ref.dtype)


def multi_head_attention(x, params, *, num_heads, tq=128, tk=128):
    """x: (B, S, E) float32. params: dict of fused weights. Returns (B, S, E) float32."""
    B, S, E = x.shape
    head_dim = E // num_heads
    assert E % num_heads == 0
    assert S % tq == 0 and S % tk == 0, "sequence must be divisible by tile sizes"
    assert E % 128 == 0, "embed dim must be lane-aligned (multiple of 128)"

    # bf16 MXU operands (also halves resident weight VMEM); biases stay fp32.
    wq = params["wq"].astype(jnp.bfloat16)
    wk = params["wk"].astype(jnp.bfloat16)
    wv = params["wv"].astype(jnp.bfloat16)
    wo = params["wo"].astype(jnp.bfloat16)
    bq = params["bq"].astype(jnp.float32)
    bk = params["bk"].astype(jnp.float32)
    bv = params["bv"].astype(jnp.float32)
    bo = params["bo"].astype(jnp.float32)

    n_q = S // tq
    n_kv = S // tk

    kernel = functools.partial(_mha_flash_kernel, num_heads=num_heads,
                               head_dim=head_dim, scale=1.0 / sqrt(head_dim))

    w_spec = pl.BlockSpec((E, E), lambda b, qi, ki: (0, 0))
    b_spec = pl.BlockSpec((1, E), lambda b, qi, ki: (0, 0))

    # Advisory cost hint: 4 projections + QK^T + PV.
    flops = 8 * B * S * E * E + 4 * B * S * S * E
    cost = pl.CostEstimate(
        flops=flops,
        transcendentals=B * num_heads * S * S,
        bytes_accessed=2 * B * S * E * 4 + 4 * E * E * 2 + 4 * E * 4,
    )

    return pl.pallas_call(
        kernel,
        out_shape=jax.ShapeDtypeStruct((B, S, E), x.dtype),
        grid_spec=pltpu.PrefetchScalarGridSpec(
            num_scalar_prefetch=0,
            grid=(B, n_q, n_kv),
            in_specs=[
                pl.BlockSpec((1, tq, E), lambda b, qi, ki: (b, qi, 0)),   # x (query rows)
                pl.BlockSpec((1, tk, E), lambda b, qi, ki: (b, ki, 0)),   # x (kv rows)
                w_spec, b_spec,                                            # wq, bq
                w_spec, b_spec,                                            # wk, bk
                w_spec, b_spec,                                            # wv, bv
                w_spec, b_spec,                                            # wo, bo
            ],
            out_specs=pl.BlockSpec((1, tq, E), lambda b, qi, ki: (b, qi, 0)),
            scratch_shapes=[
                pltpu.VMEM((tq, E), jnp.bfloat16),             # pre-scaled Q slab
                pltpu.VMEM((num_heads, tq, 1), jnp.float32),   # running max per head
                pltpu.VMEM((num_heads, tq, 1), jnp.float32),   # running sum per head
                pltpu.VMEM((tq, E), jnp.float32),              # output accumulator slab
            ],
        ),
        compiler_params=pltpu.CompilerParams(
            dimension_semantics=("parallel", "parallel", "arbitrary")),
        cost_estimate=cost,
    )(x, x, wq, bq, wk, bk, wv, bv, wo, bo)


def _reference(x, params, *, num_heads):
    """Pure-JAX fp32 reference matching the PyTorch module semantics."""
    E = x.shape[-1]
    Dh = E // num_heads
    q = x @ params["wq"] + params["bq"]
    k = x @ params["wk"] + params["bk"]
    v = x @ params["wv"] + params["bv"]
    outs = []
    for h in range(num_heads):
        sl = slice(h * Dh, (h + 1) * Dh)
        scores = jnp.einsum("bqd,bkd->bqk", q[..., sl], k[..., sl]) / sqrt(Dh)
        w = jax.nn.softmax(scores, axis=-1)
        outs.append(jnp.einsum("bqk,bkd->bqd", w, v[..., sl]))
    concat = jnp.concatenate(outs, axis=-1)
    return concat @ params["wo"] + params["bo"]


def init_params(key, embed_dim, num_heads):
    """Fused-layout params: per-head weights stacked along columns (h*Dh : (h+1)*Dh)."""
    ks = jax.random.split(key, 8)
    scale = 0.02
    return {
        "wq": scale * jax.random.normal(ks[0], (embed_dim, embed_dim), jnp.float32),
        "bq": scale * jax.random.normal(ks[1], (1, embed_dim), jnp.float32),
        "wk": scale * jax.random.normal(ks[2], (embed_dim, embed_dim), jnp.float32),
        "bk": scale * jax.random.normal(ks[3], (1, embed_dim), jnp.float32),
        "wv": scale * jax.random.normal(ks[4], (embed_dim, embed_dim), jnp.float32),
        "bv": scale * jax.random.normal(ks[5], (1, embed_dim), jnp.float32),
        "wo": scale * jax.random.normal(ks[6], (embed_dim, embed_dim), jnp.float32),
        "bo": scale * jax.random.normal(ks[7], (1, embed_dim), jnp.float32),
    }


if __name__ == "__main__":
    # Small but TPU-tile-aligned shapes: 2 query tiles x 2 kv tiles exercise the
    # online-softmax accumulation path.
    batch, seq, hidden, num_heads = 2, 256, 128, 4

    key = jax.random.PRNGKey(0)
    k_x, k_p = jax.random.split(key)
    x = jax.random.normal(k_x, (batch, seq, hidden), jnp.float32)
    params = init_params(k_p, hidden, num_heads)

    out = multi_head_attention(x, params, num_heads=num_heads, tq=128, tk=128)
    out = jax.block_until_ready(out)

    ref = _reference(x, params, num_heads=num_heads)
    assert out.shape == (batch, seq, hidden)
    # bf16 MXU operands => compare with mixed-precision tolerance.
    max_err = float(jnp.max(jnp.abs(out - ref)))
    assert jnp.allclose(out, ref, atol=2e-2, rtol=2e-2), f"mismatch vs reference (max abs err {max_err})"

    print("KERNEL_OK")
</pallas_src>

<mosaic_0001>
module attributes {stable_mosaic.version = 11 : i64} {
  func.func @_mha_flash_kernel(%arg0: i32, %arg1: i32, %arg2: i32, %arg3: memref<1x128x128xf32, #tpu.memory_space<vmem>>, %arg4: memref<1x128x128xf32, #tpu.memory_space<vmem>>, %arg5: memref<128x128xbf16, #tpu.memory_space<vmem>>, %arg6: memref<1x128xf32, #tpu.memory_space<vmem>>, %arg7: memref<128x128xbf16, #tpu.memory_space<vmem>>, %arg8: memref<1x128xf32, #tpu.memory_space<vmem>>, %arg9: memref<128x128xbf16, #tpu.memory_space<vmem>>, %arg10: memref<1x128xf32, #tpu.memory_space<vmem>>, %arg11: memref<128x128xbf16, #tpu.memory_space<vmem>>, %arg12: memref<1x128xf32, #tpu.memory_space<vmem>>, %arg13: memref<1x128x128xf32, #tpu.memory_space<vmem>>, %arg14: memref<128x128xbf16, #tpu.memory_space<vmem>>, %arg15: memref<4x128x1xf32, #tpu.memory_space<vmem>>, %arg16: memref<4x128x1xf32, #tpu.memory_space<vmem>>, %arg17: memref<128x128xf32, #tpu.memory_space<vmem>>) attributes {dimension_semantics = [#tpu.dimension_semantics<parallel>, #tpu.dimension_semantics<parallel>, #tpu.dimension_semantics<arbitrary>], iteration_bounds = array<i64: 2, 2, 2>, scalar_prefetch = 0 : i64, scratch_operands = 4 : i64, tpu.core_type = #tpu.core_type<tc>, window_params = [{transform_indices = @transform_0, window_bounds = array<i64: 1, 128, 128>}, {transform_indices = @transform_1, window_bounds = array<i64: 1, 128, 128>}, {pipeline_mode = #tpu.pipeline_mode<synchronous>, transform_indices = @transform_2, window_bounds = array<i64: 128, 128>}, {pipeline_mode = #tpu.pipeline_mode<synchronous>, transform_indices = @transform_3, window_bounds = array<i64: 1, 128>}, {pipeline_mode = #tpu.pipeline_mode<synchronous>, transform_indices = @transform_4, window_bounds = array<i64: 128, 128>}, {pipeline_mode = #tpu.pipeline_mode<synchronous>, transform_indices = @transform_5, window_bounds = array<i64: 1, 128>}, {pipeline_mode = #tpu.pipeline_mode<synchronous>, transform_indices = @transform_6, window_bounds = array<i64: 128, 128>}, {pipeline_mode = #tpu.pipeline_mode<synchronous>, transform_indices = @transform_7, window_bounds = array<i64: 1, 128>}, {pipeline_mode = #tpu.pipeline_mode<synchronous>, transform_indices = @transform_8, window_bounds = array<i64: 128, 128>}, {pipeline_mode = #tpu.pipeline_mode<synchronous>, transform_indices = @transform_9, window_bounds = array<i64: 1, 128>}, {transform_indices = @transform_10, window_bounds = array<i64: 1, 128, 128>}]} {
    %c0_i32 = arith.constant 0 : i32
    %0 = arith.cmpi eq, %arg2, %c0_i32 : i32
    %1 = arith.extui %0 : i1 to i32
    %c0_i32_0 = arith.constant 0 : i32
    %2 = arith.cmpi ne, %1, %c0_i32_0 : i32
    scf.if %2 {
      %c0_95 = arith.constant 0 : index
      %c0_96 = arith.constant 0 : index
      %c0_97 = arith.constant 0 : index
      %153 = vector.load %arg3[%c0_95, %c0_96, %c0_97] : memref<1x128x128xf32, #tpu.memory_space<vmem>>, vector<1x128x128xf32>
      %154 = vector.shape_cast %153 : vector<1x128x128xf32> to vector<128x128xf32>
      %155 = arith.truncf %154 : vector<128x128xf32> to vector<128x128xbf16>
      %c0_98 = arith.constant 0 : index
      %c0_99 = arith.constant 0 : index
      %156 = vector.load %arg5[%c0_98, %c0_99] : memref<128x128xbf16, #tpu.memory_space<vmem>>, vector<128x128xbf16>
      %cst_100 = arith.constant dense<0.000000e+00> : vector<128x128xf32>
      %157 = tpu.matmul %155, %156, %cst_100 {dimension_numbers = #tpu.dot_dimension_numbers<[1], [0], [0], [1], [0, 0, 1, 1], [], []>} : vector<128x128xbf16>, vector<128x128xbf16>, vector<128x128xf32> -> vector<128x128xf32>
      %c0_101 = arith.constant 0 : index
      %c0_102 = arith.constant 0 : index
      %158 = vector.load %arg6[%c0_101, %c0_102] : memref<1x128xf32, #tpu.memory_space<vmem>>, vector<1x128xf32>
      %159 = vector.broadcast %158 : vector<1x128xf32> to vector<128x128xf32>
      %160 = arith.addf %157, %159 : vector<128x128xf32>
      %cst_103 = arith.constant 0.176776692 : f32
      %161 = vector.broadcast %cst_103 : f32 to vector<128x128xf32>
      %162 = arith.mulf %160, %161 : vector<128x128xf32>
      %163 = arith.truncf %162 : vector<128x128xf32> to vector<128x128xbf16>
      %c0_104 = arith.constant 0 : index
      %c0_105 = arith.constant 0 : index
      %164 = vector.load %arg14[%c0_104, %c0_105] : memref<128x128xbf16, #tpu.memory_space<vmem>>, vector<128x128xbf16>
      tpu.vector_store %arg14[%c0_104, %c0_105], %163 {strides = array<i32>} : memref<128x128xbf16, #tpu.memory_space<vmem>>, vector<128x128xbf16>,
      %cst_106 = arith.constant 0xFF800000 : f32
      %165 = vector.broadcast %cst_106 : f32 to vector<4x128x1xf32>
      %c0_107 = arith.constant 0 : index
      %c0_108 = arith.constant 0 : index
      %c0_109 = arith.constant 0 : index
      %166 = vector.load %arg15[%c0_107, %c0_108, %c0_109] : memref<4x128x1xf32, #tpu.memory_space<vmem>>, vector<4x128x1xf32>
      tpu.vector_store %arg15[%c0_107, %c0_108, %c0_109], %165 {strides = array<i32>} : memref<4x128x1xf32, #tpu.memory_space<vmem>>, vector<4x128x1xf32>,
      %cst_110 = arith.constant 0.000000e+00 : f32
      %167 = vector.broadcast %cst_110 : f32 to vector<4x128x1xf32>
      %c0_111 = arith.constant 0 : index
      %c0_112 = arith.constant 0 : index
      %c0_113 = arith.constant 0 : index
      %168 = vector.load %arg16[%c0_111, %c0_112, %c0_113] : memref<4x128x1xf32, #tpu.memory_space<vmem>>, vector<4x128x1xf32>
      tpu.vector_store %arg16[%c0_111, %c0_112, %c0_113], %167 {strides = array<i32>} : memref<4x128x1xf32, #tpu.memory_space<vmem>>, vector<4x128x1xf32>,
      %cst_114 = arith.constant 0.000000e+00 : f32
      %169 = vector.broadcast %cst_114 : f32 to vector<128x128xf32>
      %c0_115 = arith.constant 0 : index
      %c0_116 = arith.constant 0 : index
      %170 = vector.load %arg17[%c0_115, %c0_116] : memref<128x128xf32, #tpu.memory_space<vmem>>, vector<128x128xf32>
      tpu.vector_store %arg17[%c0_115, %c0_116], %169 {strides = array<i32>} : memref<128x128xf32, #tpu.memory_space<vmem>>, vector<128x128xf32>,
    } else {
    }
    %c0 = arith.constant 0 : index
    %c0_1 = arith.constant 0 : index
    %c0_2 = arith.constant 0 : index
    %3 = vector.load %arg4[%c0, %c0_1, %c0_2] : memref<1x128x128xf32, #tpu.memory_space<vmem>>, vector<1x128x128xf32>
    %4 = vector.shape_cast %3 : vector<1x128x128xf32> to vector<128x128xf32>
    %5 = arith.truncf %4 : vector<128x128xf32> to vector<128x128xbf16>
    %c0_3 = arith.constant 0 : index
    %c0_4 = arith.constant 0 : index
    %6 = vector.load %arg7[%c0_3, %c0_4] : memref<128x128xbf16, #tpu.memory_space<vmem>>, vector<128x128xbf16>
    %cst = arith.constant dense<0.000000e+00> : vector<128x128xf32>
    %7 = tpu.matmul %5, %6, %cst {dimension_numbers = #tpu.dot_dimension_numbers<[1], [0], [0], [1], [0, 0, 1, 1], [], []>} : vector<128x128xbf16>, vector<128x128xbf16>, vector<128x128xf32> -> vector<128x128xf32>
    %c0_5 = arith.constant 0 : index
    %c0_6 = arith.constant 0 : index
    %8 = vector.load %arg8[%c0_5, %c0_6] : memref<1x128xf32, #tpu.memory_space<vmem>>, vector<1x128xf32>
    %9 = vector.broadcast %8 : vector<1x128xf32> to vector<128x128xf32>
    %10 = arith.addf %7, %9 : vector<128x128xf32>
    %11 = arith.truncf %10 : vector<128x128xf32> to vector<128x128xbf16>
    %c0_7 = arith.constant 0 : index
    %c0_8 = arith.constant 0 : index
    %12 = vector.load %arg9[%c0_7, %c0_8] : memref<128x128xbf16, #tpu.memory_space<vmem>>, vector<128x128xbf16>
    %cst_9 = arith.constant dense<0.000000e+00> : vector<128x128xf32>
    %13 = tpu.matmul %5, %12, %cst_9 {dimension_numbers = #tpu.dot_dimension_numbers<[1], [0], [0], [1], [0, 0, 1, 1], [], []>} : vector<128x128xbf16>, vector<128x128xbf16>, vector<128x128xf32> -> vector<128x128xf32>
    %c0_10 = arith.constant 0 : index
    %c0_11 = arith.constant 0 : index
    %14 = vector.load %arg10[%c0_10, %c0_11] : memref<1x128xf32, #tpu.memory_space<vmem>>, vector<1x128xf32>
    %15 = vector.broadcast %14 : vector<1x128xf32> to vector<128x128xf32>
    %16 = arith.addf %13, %15 : vector<128x128xf32>
    %17 = arith.truncf %16 : vector<128x128xf32> to vector<128x128xbf16>
    %c0_12 = arith.constant 0 : index
    %c0_13 = arith.constant 0 : index
    %18 = vector.load %arg14[%c0_12, %c0_13] : memref<128x128xbf16, #tpu.memory_space<vmem>>, vector<128x32xbf16>
    %19 = vector.extract_strided_slice %11 {offsets = [0, 0], sizes = [128, 32], strides = [1, 1]} : vector<128x128xbf16> to vector<128x32xbf16>
    %20 = vector.extract_strided_slice %17 {offsets = [0, 0], sizes = [128, 32], strides = [1, 1]} : vector<128x128xbf16> to vector<128x32xbf16>
    %cst_14 = arith.constant dense<0.000000e+00> : vector<128x128xf32>
    %21 = tpu.matmul %18, %19, %cst_14 {dimension_numbers = #tpu.dot_dimension_numbers<[1], [1], [0], [0], [0, 0, 1, 0], [], []>} : vector<128x32xbf16>, vector<128x32xbf16>, vector<128x128xf32> -> vector<128x128xf32>
    %c0_15 = arith.constant 0 : index
    %c0_16 = arith.constant 0 : index
    %c0_17 = arith.constant 0 : index
    %22 = vector.load %arg15[%c0_15, %c0_16, %c0_17] : memref<4x128x1xf32, #tpu.memory_space<vmem>>, vector<1x128x1xf32>
    %23 = vector.shape_cast %22 : vector<1x128x1xf32> to vector<128x1xf32>
    %cst_18 = arith.constant dense<0xFF800000> : vector<128xf32>
    %24 = vector.multi_reduction <maximumf>, %21, %cst_18 [1] : vector<128x128xf32> to vector<128xf32>
    %25 = vector.shape_cast %24 : vector<128xf32> to vector<128x1xf32>
    %26 = arith.maximumf %23, %25 : vector<128x1xf32>
    %27 = arith.subf %23, %26 : vector<128x1xf32>
    %28 = math.exp %27 : vector<128x1xf32>
    %29 = vector.broadcast %26 : vector<128x1xf32> to vector<128x128xf32>
    %30 = arith.subf %21, %29 : vector<128x128xf32>
    %31 = math.exp %30 : vector<128x128xf32>
    %c0_19 = arith.constant 0 : index
    %c0_20 = arith.constant 0 : index
    %c0_21 = arith.constant 0 : index
    %32 = vector.load %arg16[%c0_19, %c0_20, %c0_21] : memref<4x128x1xf32, #tpu.memory_space<vmem>>, vector<1x128x1xf32>
    %33 = vector.shape_cast %32 : vector<1x128x1xf32> to vector<128x1xf32>
    %34 = arith.mulf %28, %33 : vector<128x1xf32>
    %cst_22 = arith.constant dense<0.000000e+00> : vector<128xf32>
    %35 = vector.multi_reduction <add>, %31, %cst_22 [1] : vector<128x128xf32> to vector<128xf32>
    %36 = vector.shape_cast %35 : vector<128xf32> to vector<128x1xf32>
    %37 = arith.addf %34, %36 : vector<128x1xf32>
    %c0_23 = arith.constant 0 : index
    %c0_24 = arith.constant 0 : index
    %c0_25 = arith.constant 0 : index
    %38 = vector.load %arg16[%c0_23, %c0_24, %c0_25] : memref<4x128x1xf32, #tpu.memory_space<vmem>>, vector<1x128x1xf32>
    %39 = vector.shape_cast %38 : vector<1x128x1xf32> to vector<128x1xf32>
    %40 = vector.shape_cast %37 : vector<128x1xf32> to vector<1x128x1xf32>
    tpu.vector_store %arg16[%c0_23, %c0_24, %c0_25], %40 {strides = array<i32>} : memref<4x128x1xf32, #tpu.memory_space<vmem>>, vector<1x128x1xf32>,
    %c0_26 = arith.constant 0 : index
    %c0_27 = arith.constant 0 : index
    %41 = vector.load %arg17[%c0_26, %c0_27] : memref<128x128xf32, #tpu.memory_space<vmem>>, vector<128x32xf32>
    %42 = vector.broadcast %28 : vector<128x1xf32> to vector<128x32xf32>
    %43 = arith.mulf %42, %41 : vector<128x32xf32>
    %44 = arith.truncf %31 : vector<128x128xf32> to vector<128x128xbf16>
    %cst_28 = arith.constant dense<0.000000e+00> : vector<128x32xf32>
    %45 = tpu.matmul %44, %20, %cst_28 {dimension_numbers = #tpu.dot_dimension_numbers<[1], [0], [0], [1], [0, 0, 1, 1], [], []>} : vector<128x128xbf16>, vector<128x32xbf16>, vector<128x32xf32> -> vector<128x32xf32>
    %46 = arith.addf %43, %45 : vector<128x32xf32>
    %c0_29 = arith.constant 0 : index
    %c0_30 = arith.constant 0 : index
    %47 = vector.load %arg17[%c0_29, %c0_30] : memref<128x128xf32, #tpu.memory_space<vmem>>, vector<128x32xf32>
    tpu.vector_store %arg17[%c0_29, %c0_30], %46 {strides = array<i32>} : memref<128x128xf32, #tpu.memory_space<vmem>>, vector<128x32xf32>,
    %c0_31 = arith.constant 0 : index
    %c0_32 = arith.constant 0 : index
    %c0_33 = arith.constant 0 : index
    %48 = vector.load %arg15[%c0_31, %c0_32, %c0_33] : memref<4x128x1xf32, #tpu.memory_space<vmem>>, vector<1x128x1xf32>
    %49 = vector.shape_cast %48 : vector<1x128x1xf32> to vector<128x1xf32>
    %50 = vector.shape_cast %26 : vector<128x1xf32> to vector<1x128x1xf32>
    tpu.vector_store %arg15[%c0_31, %c0_32, %c0_33], %50 {strides = array<i32>} : memref<4x128x1xf32, #tpu.memory_space<vmem>>, vector<1x128x1xf32>,
    %c0_34 = arith.constant 0 : index
    %c32 = arith.constant 32 : index
    %51 = vector.load %arg14[%c0_34, %c32] : memref<128x128xbf16, #tpu.memory_space<vmem>>, vector<128x32xbf16>
    %52 = vector.extract_strided_slice %11 {offsets = [0, 32], sizes = [128, 32], strides = [1, 1]} : vector<128x128xbf16> to vector<128x32xbf16>
    %53 = vector.extract_strided_slice %17 {offsets = [0, 32], sizes = [128, 32], strides = [1, 1]} : vector<128x128xbf16> to vector<128x32xbf16>
    %cst_35 = arith.constant dense<0.000000e+00> : vector<128x128xf32>
    %54 = tpu.matmul %51, %52, %cst_35 {dimension_numbers = #tpu.dot_dimension_numbers<[1], [1], [0], [0], [0, 0, 1, 0], [], []>} : vector<128x32xbf16>, vector<128x32xbf16>, vector<128x128xf32> -> vector<128x128xf32>
    %c1 = arith.constant 1 : index
    %c0_36 = arith.constant 0 : index
    %c0_37 = arith.constant 0 : index
    %55 = vector.load %arg15[%c1, %c0_36, %c0_37] : memref<4x128x1xf32, #tpu.memory_space<vmem>>, vector<1x128x1xf32>
    %56 = vector.shape_cast %55 : vector<1x128x1xf32> to vector<128x1xf32>
    %cst_38 = arith.constant dense<0xFF800000> : vector<128xf32>
    %57 = vector.multi_reduction <maximumf>, %54, %cst_38 [1] : vector<128x128xf32> to vector<128xf32>
    %58 = vector.shape_cast %57 : vector<128xf32> to vector<128x1xf32>
    %59 = arith.maximumf %56, %58 : vector<128x1xf32>
    %60 = arith.subf %56, %59 : vector<128x1xf32>
    %61 = math.exp %60 : vector<128x1xf32>
    %62 = vector.broadcast %59 : vector<128x1xf32> to vector<128x128xf32>
    %63 = arith.subf %54, %62 : vector<128x128xf32>
    %64 = math.exp %63 : vector<128x128xf32>
    %c1_39 = arith.constant 1 : index
    %c0_40 = arith.constant 0 : index
    %c0_41 = arith.constant 0 : index
    %65 = vector.load %arg16[%c1_39, %c0_40, %c0_41] : memref<4x128x1xf32, #tpu.memory_space<vmem>>, vector<1x128x1xf32>
    %66 = vector.shape_cast %65 : vector<1x128x1xf32> to vector<128x1xf32>
    %67 = arith.mulf %61, %66 : vector<128x1xf32>
    %cst_42 = arith.constant dense<0.000000e+00> : vector<128xf32>
    %68 = vector.multi_reduction <add>, %64, %cst_42 [1] : vector<128x128xf32> to vector<128xf32>
    %69 = vector.shape_cast %68 : vector<128xf32> to vector<128x1xf32>
    %70 = arith.addf %67, %69 : vector<128x1xf32>
    %c1_43 = arith.constant 1 : index
    %c0_44 = arith.constant 0 : index
    %c0_45 = arith.constant 0 : index
    %71 = vector.load %arg16[%c1_43, %c0_44, %c0_45] : memref<4x128x1xf32, #tpu.memory_space<vmem>>, vector<1x128x1xf32>
    %72 = vector.shape_cast %71 : vector<1x128x1xf32> to vector<128x1xf32>
    %73 = vector.shape_cast %70 : vector<128x1xf32> to vector<1x128x1xf32>
    tpu.vector_store %arg16[%c1_43, %c0_44, %c0_45], %73 {strides = array<i32>} : memref<4x128x1xf32, #tpu.memory_space<vmem>>, vector<1x128x1xf32>,
    %c0_46 = arith.constant 0 : index
    %c32_47 = arith.constant 32 : index
    %74 = vector.load %arg17[%c0_46, %c32_47] : memref<128x128xf32, #tpu.memory_space<vmem>>, vector<128x32xf32>
    %75 = vector.broadcast %61 : vector<128x1xf32> to vector<128x32xf32>
    %76 = arith.mulf %75, %74 : vector<128x32xf32>
    %77 = arith.truncf %64 : vector<128x128xf32> to vector<128x128xbf16>
    %cst_48 = arith.constant dense<0.000000e+00> : vector<128x32xf32>
    %78 = tpu.matmul %77, %53, %cst_48 {dimension_numbers = #tpu.dot_dimension_numbers<[1], [0], [0], [1], [0, 0, 1, 1], [], []>} : vector<128x128xbf16>, vector<128x32xbf16>, vector<128x32xf32> -> vector<128x32xf32>
    %79 = arith.addf %76, %78 : vector<128x32xf32>
    %c0_49 = arith.constant 0 : index
    %c32_50 = arith.constant 32 : index
    %80 = vector.load %arg17[%c0_49, %c32_50] : memref<128x128xf32, #tpu.memory_space<vmem>>, vector<128x32xf32>
    tpu.vector_store %arg17[%c0_49, %c32_50], %79 {strides = array<i32>} : memref<128x128xf32, #tpu.memory_space<vmem>>, vector<128x32xf32>,
    %c1_51 = arith.constant 1 : index
    %c0_52 = arith.constant 0 : index
    %c0_53 = arith.constant 0 : index
    %81 = vector.load %arg15[%c1_51, %c0_52, %c0_53] : memref<4x128x1xf32, #tpu.memory_space<vmem>>, vector<1x128x1xf32>
    %82 = vector.shape_cast %81 : vector<1x128x1xf32> to vector<128x1xf32>
    %83 = vector.shape_cast %59 : vector<128x1xf32> to vector<1x128x1xf32>
    tpu.vector_store %arg15[%c1_51, %c0_52, %c0_53], %83 {strides = array<i32>} : memref<4x128x1xf32, #tpu.memory_space<vmem>>, vector<1x128x1xf32>,
    %c0_54 = arith.constant 0 : index
    %c64 = arith.constant 64 : index
    %84 = vector.load %arg14[%c0_54, %c64] : memref<128x128xbf16, #tpu.memory_space<vmem>>, vector<128x32xbf16>
    %85 = vector.extract_strided_slice %11 {offsets = [0, 64], sizes = [128, 32], strides = [1, 1]} : vector<128x128xbf16> to vector<128x32xbf16>
    %86 = vector.extract_strided_slice %17 {offsets = [0, 64], sizes = [128, 32], strides = [1, 1]} : vector<128x128xbf16> to vector<128x32xbf16>
    %cst_55 = arith.constant dense<0.000000e+00> : vector<128x128xf32>
    %87 = tpu.matmul %84, %85, %cst_55 {dimension_numbers = #tpu.dot_dimension_numbers<[1], [1], [0], [0], [0, 0, 1, 0], [], []>} : vector<128x32xbf16>, vector<128x32xbf16>, vector<128x128xf32> -> vector<128x128xf32>
    %c2 = arith.constant 2 : index
    %c0_56 = arith.constant 0 : index
    %c0_57 = arith.constant 0 : index
    %88 = vector.load %arg15[%c2, %c0_56, %c0_57] : memref<4x128x1xf32, #tpu.memory_space<vmem>>, vector<1x128x1xf32>
    %89 = vector.shape_cast %88 : vector<1x128x1xf32> to vector<128x1xf32>
    %cst_58 = arith.constant dense<0xFF800000> : vector<128xf32>
    %90 = vector.multi_reduction <maximumf>, %87, %cst_58 [1] : vector<128x128xf32> to vector<128xf32>
    %91 = vector.shape_cast %90 : vector<128xf32> to vector<128x1xf32>
    %92 = arith.maximumf %89, %91 : vector<128x1xf32>
    %93 = arith.subf %89, %92 : vector<128x1xf32>
    %94 = math.exp %93 : vector<128x1xf32>
    %95 = vector.broadcast %92 : vector<128x1xf32> to vector<128x128xf32>
    %96 = arith.subf %87, %95 : vector<128x128xf32>
    %97 = math.exp %96 : vector<128x128xf32>
    %c2_59 = arith.constant 2 : index
    %c0_60 = arith.constant 0 : index
    %c0_61 = arith.constant 0 : index
    %98 = vector.load %arg16[%c2_59, %c0_60, %c0_61] : memref<4x128x1xf32, #tpu.memory_space<vmem>>, vector<1x128x1xf32>
    %99 = vector.shape_cast %98 : vector<1x128x1xf32> to vector<128x1xf32>
    %100 = arith.mulf %94, %99 : vector<128x1xf32>
    %cst_62 = arith.constant dense<0.000000e+00> : vector<128xf32>
    %101 = vector.multi_reduction <add>, %97, %cst_62 [1] : vector<128x128xf32> to vector<128xf32>
    %102 = vector.shape_cast %101 : vector<128xf32> to vector<128x1xf32>
    %103 = arith.addf %100, %102 : vector<128x1xf32>
    %c2_63 = arith.constant 2 : index
    %c0_64 = arith.constant 0 : index
    %c0_65 = arith.constant 0 : index
    %104 = vector.load %arg16[%c2_63, %c0_64, %c0_65] : memref<4x128x1xf32, #tpu.memory_space<vmem>>, vector<1x128x1xf32>
    %105 = vector.shape_cast %104 : vector<1x128x1xf32> to vector<128x1xf32>
    %106 = vector.shape_cast %103 : vector<128x1xf32> to vector<1x128x1xf32>
    tpu.vector_store %arg16[%c2_63, %c0_64, %c0_65], %106 {strides = array<i32>} : memref<4x128x1xf32, #tpu.memory_space<vmem>>, vector<1x128x1xf32>,
    %c0_66 = arith.constant 0 : index
    %c64_67 = arith.constant 64 : index
    %107 = vector.load %arg17[%c0_66, %c64_67] : memref<128x128xf32, #tpu.memory_space<vmem>>, vector<128x32xf32>
    %108 = vector.broadcast %94 : vector<128x1xf32> to vector<128x32xf32>
    %109 = arith.mulf %108, %107 : vector<128x32xf32>
    %110 = arith.truncf %97 : vector<128x128xf32> to vector<128x128xbf16>
    %cst_68 = arith.constant dense<0.000000e+00> : vector<128x32xf32>
    %111 = tpu.matmul %110, %86, %cst_68 {dimension_numbers = #tpu.dot_dimension_numbers<[1], [0], [0], [1], [0, 0, 1, 1], [], []>} : vector<128x128xbf16>, vector<128x32xbf16>, vector<128x32xf32> -> vector<128x32xf32>
    %112 = arith.addf %109, %111 : vector<128x32xf32>
    %c0_69 = arith.constant 0 : index
    %c64_70 = arith.constant 64 : index
    %113 = vector.load %arg17[%c0_69, %c64_70] : memref<128x128xf32, #tpu.memory_space<vmem>>, vector<128x32xf32>
    tpu.vector_store %arg17[%c0_69, %c64_70], %112 {strides = array<i32>} : memref<128x128xf32, #tpu.memory_space<vmem>>, vector<128x32xf32>,
    %c2_71 = arith.constant 2 : index
    %c0_72 = arith.constant 0 : index
    %c0_73 = arith.constant 0 : index
    %114 = vector.load %arg15[%c2_71, %c0_72, %c0_73] : memref<4x128x1xf32, #tpu.memory_space<vmem>>, vector<1x128x1xf32>
    %115 = vector.shape_cast %114 : vector<1x128x1xf32> to vector<128x1xf32>
    %116 = vector.shape_cast %92 : vector<128x1xf32> to vector<1x128x1xf32>
    tpu.vector_store %arg15[%c2_71, %c0_72, %c0_73], %116 {strides = array<i32>} : memref<4x128x1xf32, #tpu.memory_space<vmem>>, vector<1x128x1xf32>,
    %c0_74 = arith.constant 0 : index
    %c96 = arith.constant 96 : index
    %117 = vector.load %arg14[%c0_74, %c96] : memref<128x128xbf16, #tpu.memory_space<vmem>>, vector<128x32xbf16>
    %118 = vector.extract_strided_slice %11 {offsets = [0, 96], sizes = [128, 32], strides = [1, 1]} : vector<128x128xbf16> to vector<128x32xbf16>
    %119 = vector.extract_strided_slice %17 {offsets = [0, 96], sizes = [128, 32], strides = [1, 1]} : vector<128x128xbf16> to vector<128x32xbf16>
    %cst_75 = arith.constant dense<0.000000e+00> : vector<128x128xf32>
    %120 = tpu.matmul %117, %118, %cst_75 {dimension_numbers = #tpu.dot_dimension_numbers<[1], [1], [0], [0], [0, 0, 1, 0], [], []>} : vector<128x32xbf16>, vector<128x32xbf16>, vector<128x128xf32> -> vector<128x128xf32>
    %c3 = arith.constant 3 : index
    %c0_76 = arith.constant 0 : index
    %c0_77 = arith.constant 0 : index
    %121 = vector.load %arg15[%c3, %c0_76, %c0_77] : memref<4x128x1xf32, #tpu.memory_space<vmem>>, vector<1x128x1xf32>
    %122 = vector.shape_cast %121 : vector<1x128x1xf32> to vector<128x1xf32>
    %cst_78 = arith.constant dense<0xFF800000> : vector<128xf32>
    %123 = vector.multi_reduction <maximumf>, %120, %cst_78 [1] : vector<128x128xf32> to vector<128xf32>
    %124 = vector.shape_cast %123 : vector<128xf32> to vector<128x1xf32>
    %125 = arith.maximumf %122, %124 : vector<128x1xf32>
    %126 = arith.subf %122, %125 : vector<128x1xf32>
    %127 = math.exp %126 : vector<128x1xf32>
    %128 = vector.broadcast %125 : vector<128x1xf32> to vector<128x128xf32>
    %129 = arith.subf %120, %128 : vector<128x128xf32>
    %130 = math.exp %129 : vector<128x128xf32>
    %c3_79 = arith.constant 3 : index
    %c0_80 = arith.constant 0 : index
    %c0_81 = arith.constant 0 : index
    %131 = vector.load %arg16[%c3_79, %c0_80, %c0_81] : memref<4x128x1xf32, #tpu.memory_space<vmem>>, vector<1x128x1xf32>
    %132 = vector.shape_cast %131 : vector<1x128x1xf32> to vector<128x1xf32>
    %133 = arith.mulf %127, %132 : vector<128x1xf32>
    %cst_82 = arith.constant dense<0.000000e+00> : vector<128xf32>
    %134 = vector.multi_reduction <add>, %130, %cst_82 [1] : vector<128x128xf32> to vector<128xf32>
    %135 = vector.shape_cast %134 : vector<128xf32> to vector<128x1xf32>
    %136 = arith.addf %133, %135 : vector<128x1xf32>
    %c3_83 = arith.constant 3 : index
    %c0_84 = arith.constant 0 : index
    %c0_85 = arith.constant 0 : index
    %137 = vector.load %arg16[%c3_83, %c0_84, %c0_85] : memref<4x128x1xf32, #tpu.memory_space<vmem>>, vector<1x128x1xf32>
    %138 = vector.shape_cast %137 : vector<1x128x1xf32> to vector<128x1xf32>
    %139 = vector.shape_cast %136 : vector<128x1xf32> to vector<1x128x1xf32>
    tpu.vector_store %arg16[%c3_83, %c0_84, %c0_85], %139 {strides = array<i32>} : memref<4x128x1xf32, #tpu.memory_space<vmem>>, vector<1x128x1xf32>,
    %c0_86 = arith.constant 0 : index
    %c96_87 = arith.constant 96 : index
    %140 = vector.load %arg17[%c0_86, %c96_87] : memref<128x128xf32, #tpu.memory_space<vmem>>, vector<128x32xf32>
    %141 = vector.broadcast %127 : vector<128x1xf32> to vector<128x32xf32>
    %142 = arith.mulf %141, %140 : vector<128x32xf32>
    %143 = arith.truncf %130 : vector<128x128xf32> to vector<128x128xbf16>
    %cst_88 = arith.constant dense<0.000000e+00> : vector<128x32xf32>
    %144 = tpu.matmul %143, %119, %cst_88 {dimension_numbers = #tpu.dot_dimension_numbers<[1], [0], [0], [1], [0, 0, 1, 1], [], []>} : vector<128x128xbf16>, vector<128x32xbf16>, vector<128x32xf32> -> vector<128x32xf32>
    %145 = arith.addf %142, %144 : vector<128x32xf32>
    %c0_89 = arith.constant 0 : index
    %c96_90 = arith.constant 96 : index
    %146 = vector.load %arg17[%c0_89, %c96_90] : memref<128x128xf32, #tpu.memory_space<vmem>>, vector<128x32xf32>
    tpu.vector_store %arg17[%c0_89, %c96_90], %145 {strides = array<i32>} : memref<128x128xf32, #tpu.memory_space<vmem>>, vector<128x32xf32>,
    %c3_91 = arith.constant 3 : index
    %c0_92 = arith.constant 0 : index
    %c0_93 = arith.constant 0 : index
    %147 = vector.load %arg15[%c3_91, %c0_92, %c0_93] : memref<4x128x1xf32, #tpu.memory_space<vmem>>, vector<1x128x1xf32>
    %148 = vector.shape_cast %147 : vector<1x128x1xf32> to vector<128x1xf32>
    %149 = vector.shape_cast %125 : vector<128x1xf32> to vector<1x128x1xf32>
    tpu.vector_store %arg15[%c3_91, %c0_92, %c0_93], %149 {strides = array<i32>} : memref<4x128x1xf32, #tpu.memory_space<vmem>>, vector<1x128x1xf32>,
    %c1_i32 = arith.constant 1 : i32
    %150 = arith.cmpi eq, %arg2, %c1_i32 : i32
    %151 = arith.extui %150 : i1 to i32
    %c0_i32_94 = arith.constant 0 : i32
    %152 = arith.cmpi ne, %151, %c0_i32_94 : i32
    scf.if %152 {
      %c0_95 = arith.constant 0 : index
      %c0_96 = arith.constant 0 : index
      %153 = vector.load %arg17[%c0_95, %c0_96] : memref<128x128xf32, #tpu.memory_space<vmem>>, vector<128x32xf32>
      %c0_97 = arith.constant 0 : index
      %c0_98 = arith.constant 0 : index
      %c0_99 = arith.constant 0 : index
      %154 = vector.load %arg16[%c0_97, %c0_98, %c0_99] : memref<4x128x1xf32, #tpu.memory_space<vmem>>, vector<1x128x1xf32>
      %155 = vector.shape_cast %154 : vector<1x128x1xf32> to vector<128x1xf32>
      %156 = tpu.reciprocal %155 {approx = true} : vector<128x1xf32> -> vector<128x1xf32>
      %157 = vector.broadcast %156 : vector<128x1xf32> to vector<128x32xf32>
      %158 = arith.mulf %153, %157 : vector<128x32xf32>
      %c0_100 = arith.constant 0 : index
      %c0_101 = arith.constant 0 : index
      %159 = vector.load %arg17[%c0_100, %c0_101] : memref<128x128xf32, #tpu.memory_space<vmem>>, vector<128x32xf32>
      tpu.vector_store %arg17[%c0_100, %c0_101], %158 {strides = array<i32>} : memref<128x128xf32, #tpu.memory_space<vmem>>, vector<128x32xf32>,
      %c0_102 = arith.constant 0 : index
      %c32_103 = arith.constant 32 : index
      %160 = vector.load %arg17[%c0_102, %c32_103] : memref<128x128xf32, #tpu.memory_space<vmem>>, vector<128x32xf32>
      %c1_104 = arith.constant 1 : index
      %c0_105 = arith.constant 0 : index
      %c0_106 = arith.constant 0 : index
      %161 = vector.load %arg16[%c1_104, %c0_105, %c0_106] : memref<4x128x1xf32, #tpu.memory_space<vmem>>, vector<1x128x1xf32>
      %162 = vector.shape_cast %161 : vector<1x128x1xf32> to vector<128x1xf32>
      %163 = tpu.reciprocal %162 {approx = true} : vector<128x1xf32> -> vector<128x1xf32>
      %164 = vector.broadcast %163 : vector<128x1xf32> to vector<128x32xf32>
      %165 = arith.mulf %160, %164 : vector<128x32xf32>
      %c0_107 = arith.constant 0 : index
      %c32_108 = arith.constant 32 : index
      %166 = vector.load %arg17[%c0_107, %c32_108] : memref<128x128xf32, #tpu.memory_space<vmem>>, vector<128x32xf32>
      tpu.vector_store %arg17[%c0_107, %c32_108], %165 {strides = array<i32>} : memref<128x128xf32, #tpu.memory_space<vmem>>, vector<128x32xf32>,
      %c0_109 = arith.constant 0 : index
      %c64_110 = arith.constant 64 : index
      %167 = vector.load %arg17[%c0_109, %c64_110] : memref<128x128xf32, #tpu.memory_space<vmem>>, vector<128x32xf32>
      %c2_111 = arith.constant 2 : index
      %c0_112 = arith.constant 0 : index
      %c0_113 = arith.constant 0 : index
      %168 = vector.load %arg16[%c2_111, %c0_112, %c0_113] : memref<4x128x1xf32, #tpu.memory_space<vmem>>, vector<1x128x1xf32>
      %169 = vector.shape_cast %168 : vector<1x128x1xf32> to vector<128x1xf32>
      %170 = tpu.reciprocal %169 {approx = true} : vector<128x1xf32> -> vector<128x1xf32>
      %171 = vector.broadcast %170 : vector<128x1xf32> to vector<128x32xf32>
      %172 = arith.mulf %167, %171 : vector<128x32xf32>
      %c0_114 = arith.constant 0 : index
      %c64_115 = arith.constant 64 : index
      %173 = vector.load %arg17[%c0_114, %c64_115] : memref<128x128xf32, #tpu.memory_space<vmem>>, vector<128x32xf32>
      tpu.vector_store %arg17[%c0_114, %c64_115], %172 {strides = array<i32>} : memref<128x128xf32, #tpu.memory_space<vmem>>, vector<128x32xf32>,
      %c0_116 = arith.constant 0 : index
      %c96_117 = arith.constant 96 : index
      %174 = vector.load %arg17[%c0_116, %c96_117] : memref<128x128xf32, #tpu.memory_space<vmem>>, vector<128x32xf32>
      %c3_118 = arith.constant 3 : index
      %c0_119 = arith.constant 0 : index
      %c0_120 = arith.constant 0 : index
      %175 = vector.load %arg16[%c3_118, %c0_119, %c0_120] : memref<4x128x1xf32, #tpu.memory_space<vmem>>, vector<1x128x1xf32>
      %176 = vector.shape_cast %175 : vector<1x128x1xf32> to vector<128x1xf32>
      %177 = tpu.reciprocal %176 {approx = true} : vector<128x1xf32> -> vector<128x1xf32>
      %178 = vector.broadcast %177 : vector<128x1xf32> to vector<128x32xf32>
      %179 = arith.mulf %174, %178 : vector<128x32xf32>
      %c0_121 = arith.constant 0 : index
      %c96_122 = arith.constant 96 : index
      %180 = vector.load %arg17[%c0_121, %c96_122] : memref<128x128xf32, #tpu.memory_space<vmem>>, vector<128x32xf32>
      tpu.vector_store %arg17[%c0_121, %c96_122], %179 {strides = array<i32>} : memref<128x128xf32, #tpu.memory_space<vmem>>, vector<128x32xf32>,
      %c0_123 = arith.constant 0 : index
      %c0_124 = arith.constant 0 : index
      %181 = vector.load %arg17[%c0_123, %c0_124] : memref<128x128xf32, #tpu.memory_space<vmem>>, vector<128x128xf32>
      %182 = arith.truncf %181 : vector<128x128xf32> to vector<128x128xbf16>
      %c0_125 = arith.constant 0 : index
      %c0_126 = arith.constant 0 : index
      %183 = vector.load %arg11[%c0_125, %c0_126] : memref<128x128xbf16, #tpu.memory_space<vmem>>, vector<128x128xbf16>
      %cst_127 = arith.constant dense<0.000000e+00> : vector<128x128xf32>
      %184 = tpu.matmul %182, %183, %cst_127 {dimension_numbers = #tpu.dot_dimension_numbers<[1], [0], [0], [1], [0, 0, 1, 1], [], []>} : vector<128x128xbf16>, vector<128x128xbf16>, vector<128x128xf32> -> vector<128x128xf32>
      %c0_128 = arith.constant 0 : index
      %c0_129 = arith.constant 0 : index
      %185 = vector.load %arg12[%c0_128, %c0_129] : memref<1x128xf32, #tpu.memory_space<vmem>>, vector<1x128xf32>
      %186 = vector.broadcast %185 : vector<1x128xf32> to vector<128x128xf32>
      %187 = arith.addf %184, %186 : vector<128x128xf32>
      %c0_130 = arith.constant 0 : index
      %c0_131 = arith.constant 0 : index
      %c0_132 = arith.constant 0 : index
      %188 = vector.load %arg13[%c0_130, %c0_131, %c0_132] : memref<1x128x128xf32, #tpu.memory_space<vmem>>, vector<1x128x128xf32>
      %189 = vector.shape_cast %188 : vector<1x128x128xf32> to vector<128x128xf32>
      %190 = vector.shape_cast %187 : vector<128x128xf32> to vector<1x128x128xf32>
      tpu.vector_store %arg13[%c0_130, %c0_131, %c0_132], %190 {strides = array<i32>} : memref<1x128x128xf32, #tpu.memory_space<vmem>>, vector<1x128x128xf32>,
    } else {
    }
    return
  }
  func.func @transform_0(%arg0: i32, %arg1: i32, %arg2: i32) -> (i32, i32, i32) {
    %c0_i32 = arith.constant 0 : i32
    %c0_i32_0 = arith.constant 0 : i32
    return %arg0, %arg1, %c0_i32 : i32, i32, i32
  }
  func.func @transform_1(%arg0: i32, %arg1: i32, %arg2: i32) -> (i32, i32, i32) {
    %c0_i32 = arith.constant 0 : i32
    %c0_i32_0 = arith.constant 0 : i32
    return %arg0, %arg2, %c0_i32 : i32, i32, i32
  }
  func.func @transform_2(%arg0: i32, %arg1: i32, %arg2: i32) -> (i32, i32) {
    %c0_i32 = arith.constant 0 : i32
    %c0_i32_0 = arith.constant 0 : i32
    %c0_i32_1 = arith.constant 0 : i32
    return %c0_i32, %c0_i32_0 : i32, i32
  }
  func.func @transform_3(%arg0: i32, %arg1: i32, %arg2: i32) -> (i32, i32) {
    %c0_i32 = arith.constant 0 : i32
    %c0_i32_0 = arith.constant 0 : i32
    %c0_i32_1 = arith.constant 0 : i32
    return %c0_i32, %c0_i32_0 : i32, i32
  }
  func.func @transform_4(%arg0: i32, %arg1: i32, %arg2: i32) -> (i32, i32) {
    %c0_i32 = arith.constant 0 : i32
    %c0_i32_0 = arith.constant 0 : i32
    %c0_i32_1 = arith.constant 0 : i32
    return %c0_i32, %c0_i32_0 : i32, i32
  }
  func.func @transform_5(%arg0: i32, %arg1: i32, %arg2: i32) -> (i32, i32) {
    %c0_i32 = arith.constant 0 : i32
    %c0_i32_0 = arith.constant 0 : i32
    %c0_i32_1 = arith.constant 0 : i32
    return %c0_i32, %c0_i32_0 : i32, i32
  }
  func.func @transform_6(%arg0: i32, %arg1: i32, %arg2: i32) -> (i32, i32) {
    %c0_i32 = arith.constant 0 : i32
    %c0_i32_0 = arith.constant 0 : i32
    %c0_i32_1 = arith.constant 0 : i32
    return %c0_i32, %c0_i32_0 : i32, i32
  }
  func.func @transform_7(%arg0: i32, %arg1: i32, %arg2: i32) -> (i32, i32) {
    %c0_i32 = arith.constant 0 : i32
    %c0_i32_0 = arith.constant 0 : i32
    %c0_i32_1 = arith.constant 0 : i32
    return %c0_i32, %c0_i32_0 : i32, i32
  }
  func.func @transform_8(%arg0: i32, %arg1: i32, %arg2: i32) -> (i32, i32) {
    %c0_i32 = arith.constant 0 : i32
    %c0_i32_0 = arith.constant 0 : i32
    %c0_i32_1 = arith.constant 0 : i32
    return %c0_i32, %c0_i32_0 : i32, i32
  }
  func.func @transform_9(%arg0: i32, %arg1: i32, %arg2: i32) -> (i32, i32) {
    %c0_i32 = arith.constant 0 : i32
    %c0_i32_0 = arith.constant 0 : i32
    %c0_i32_1 = arith.constant 0 : i32
    return %c0_i32, %c0_i32_0 : i32, i32
  }
  func.func @transform_10(%arg0: i32, %arg1: i32, %arg2: i32) -> (i32, i32, i32) {
    %c0_i32 = arith.constant 0 : i32
    %c0_i32_0 = arith.constant 0 : i32
    return %arg0, %arg1, %c0_i32 : i32, i32, i32
  }
}

</mosaic_0001>

<llo_original>
// kernel: tpu_custom_call.1
$region0: #{tpu_custom_call.1}
  #allocation0 [shape = 'u32[]', space=smem, size = 0x4, offset = 0x4, fixed_abs, tag = 'smem constant byte address 0x4 - core index']
  #allocation1 [shape = 'u32[144,128]{1,0:T(1,128)}', space=vmem, size = 0x12000, scoped, tag = 'internal scratch']
  #allocation2 [shape = 'bf16[128,128]{1,0:T(16,128)(2,1)}', space=vmem, size = 0x8000, scoped, tag = 'scratch operand']
  #allocation3 [shape = 'f32[4,128,1]{2,1,0:T(8,128)}', space=vmem, size = 0x40000, scoped, tag = 'scratch operand']
  #allocation4 [shape = 'f32[4,128,1]{2,1,0:T(8,128)}', space=vmem, size = 0x40000, scoped, tag = 'scratch operand']
  #allocation5 [shape = 'f32[128,128]{1,0:T(8,128)}', space=vmem, size = 0x10000, scoped, tag = 'scratch operand']
  %s0 = inlined_call_operand.hbm [shape: f32[2,256,128], index: 0, kind: input, shape index: {}]
  %s1 = inlined_call_operand.hbm [shape: f32[2,256,128], index: 1, kind: input, shape index: {}]
  %s2 = inlined_call_operand.hbm [shape: bf16[128,128], index: 2, kind: input, shape index: {}]
  %s3 = inlined_call_operand.vmem [shape: f32[1,128], index: 3, kind: input, shape index: {}]
  %s4 = inlined_call_operand.hbm [shape: bf16[128,128], index: 4, kind: input, shape index: {}]
  %s5 = inlined_call_operand.vmem [shape: f32[1,128], index: 5, kind: input, shape index: {}]
  %s6 = inlined_call_operand.hbm [shape: bf16[128,128], index: 6, kind: input, shape index: {}]
  %s7 = inlined_call_operand.vmem [shape: f32[1,128], index: 7, kind: input, shape index: {}]
  %s8 = inlined_call_operand.hbm [shape: bf16[128,128], index: 8, kind: input, shape index: {}]
  %s9 = inlined_call_operand.vmem [shape: f32[1,128], index: 9, kind: input, shape index: {}]
  %s10 = inlined_call_operand.hbm [shape: f32[2,256,128], index: 10, kind: output, shape index: {}]
  %s11 = sld [smem:[#allocation0]]
  $region105: #{tpu_custom_call.1} parent=0
    _
  %s13 = ssub.s32 1, %s11
  %s14 = scalar_select 0, %s13, %s11
  $region1: #{tpu_custom_call.1} parent=0
    #allocation6 [shape = 'u8[131072]{0}', space=vmem, size = 0x20000, scoped, tag = 'input window, operand 0']
    #allocation7 [shape = 's32[2]{0}', space=sflag, size = 0x8, scoped, tag = 'scoped memory for tpu_custom_call.1']
    #allocation8 [shape = 's32[2]{0}', space=sflag, size = 0x8, scoped, tag = 'scoped memory for tpu_custom_call.1']
    #allocation9 [shape = 'u8[131072]{0}', space=vmem, size = 0x20000, scoped, tag = 'input window, operand 1']
    #allocation10 [shape = 's32[2]{0}', space=sflag, size = 0x8, scoped, tag = 'scoped memory for tpu_custom_call.1']
    #allocation11 [shape = 'u8[32768]{0}', space=vmem, size = 0x8000, scoped, tag = 'input window, operand 2, single buffered']
    #allocation12 [shape = 'u8[32768]{0}', space=vmem, size = 0x8000, scoped, tag = 'input window, operand 4, single buffered']
    #allocation13 [shape = 's32[1]{0}', space=sflag, size = 0x4, scoped, tag = 'scoped memory for tpu_custom_call.1']
    #allocation14 [shape = 'u8[32768]{0}', space=vmem, size = 0x8000, scoped, tag = 'input window, operand 6, single buffered']
    #allocation15 [shape = 'u8[32768]{0}', space=vmem, size = 0x8000, scoped, tag = 'input window, operand 8, single buffered']
    #allocation16 [shape = 's32[1]{0}', space=sflag, size = 0x4, scoped, tag = 'scoped memory for tpu_custom_call.1']
    #allocation17 [shape = 'u8[131072]{0}', space=vmem, size = 0x20000, scoped, tag = 'output window, operand 0']
    %15 = vsyncpa [#allocation7], 0
    %s16 = scalar_lea.sflag [#allocation7], 1
    %17 = vsyncpa %s16, 0
    %18 = vsyncpa [#allocation10], 0
    %s19 = scalar_lea.sflag [#allocation10], 1
    %20 = vsyncpa %s19, 0
    %21 = vsyncpa [#allocation13], 0
    %22 = vsyncpa [#allocation16], 0
    %23 = vsyncpa [#allocation8], 0
    %s24 = scalar_lea.sflag [#allocation8], 1
    %25 = vsyncpa %s24, 0
    loop: start=0, step=1, limit=10
    $region2: #{tpu_custom_call.1} parent=1 // loop_pre_header
      _
    $region3: #{tpu_custom_call.1} parent=1 // loop_header
      %s27 = sphi 0, %s31
      %p28 = scmp.ge.s32.totalorder %s27, 10
      %s34 = sphi 0, %s53
      %s35 = sphi 0, %s49
      %s36 = sphi 0, %s45
      %s37 = sphi 0, %s34
      %s38 = sphi 0, %s35
      %s39 = sphi 0, %s36
      %s40 = sphi 0, %s37
      %s41 = sphi 0, %s38
      %s42 = sphi 0, %s39
      %s58 = sphi 0, %s60
      %s61 = sphi 0, %s58
      %s62 = sphi 0, %s61
      %s78 = sphi 0, %s62
      %s86 = sphi 0, %s88
      %s89 = sphi 0, %s86
      %s90 = sphi 0, %s89
      %s106 = sphi 0, %s90
      %s110 = sphi 0, %s110
      %s112 = sphi 0, %s110
      %s113 = sphi 0, %s112
      %s127 = sphi 0, %s113
      %s131 = sphi 0, %s131
      %s133 = sphi 0, %s131
      %s134 = sphi 0, %s133
      %s148 = sphi 0, %s134
      %s152 = sphi 0, %s152
      %s154 = sphi 0, %s152
      %s155 = sphi 0, %s154
      %s169 = sphi 0, %s155
      %s173 = sphi 0, %s173
      %s175 = sphi 0, %s173
      %s176 = sphi 0, %s175
      %s190 = sphi 0, %s176
      %s194 = sphi 0, %s194
      %s196 = sphi 0, %s194
      %s197 = sphi 0, %s196
      %s211 = sphi 0, %s197
      %s215 = sphi 0, %s215
      %s217 = sphi 0, %s215
      %s218 = sphi 0, %s217
      %s232 = sphi 0, %s218
      %s236 = sphi 0, %s236
      %s238 = sphi 0, %s236
      %s239 = sphi 0, %s238
      %s253 = sphi 0, %s239
      %s257 = sphi 0, %s257
      %s259 = sphi 0, %s257
      %s260 = sphi 0, %s259
      %s274 = sphi 0, %s260
      %s282 = sphi 0, %s284
      %s285 = sphi 0, %s282
      %s286 = sphi 0, %s285
      %s302 = sphi 0, %s286
    $region4: #{tpu_custom_call.1} parent=1 // loop_header_branch
      %30 = sbr.rel (%p28) target = $region8
    $region5: #{tpu_custom_call.1} parent=1 // loop_body
      %s32 = ssub.s32 %s27, 1
      %s33 = ssub.s32 %s27, 2
      %s43 = sadd.s32 1, %s36
      %p44 = scmp.ge.s32.totalorder %s43, 2
      %s45 = scalar_select %p44, 0, %s43
      %s46 = sadd.s32 1, %s35
      %s47 = scalar_select %p44, %s46, %s35
      %p48 = scmp.ge.s32.totalorder %s47, 2
      %s49 = scalar_select %p48, 0, %s47
      %s50 = sadd.s32 1, %s34
      %s51 = scalar_select %p48, %s50, %s34
      %p52 = scmp.ge.s32.totalorder %s51, 2
      %s53 = scalar_select %p52, 0, %s51
      %s54 = ssub.s32 %s34, %s53
      %s55 = ssub.s32 %s35, %s49
      %s56 = sor.u32 %s54, %s55
      %p57 = scmp.eq.s32.totalorder %s56, 0
      %s59 = sadd.s32 %s58, 1
      %s60 = scalar_select %p57, %s58, %s59
      %p63 = pneg %p57
      %p64 = scmp.eq.s32.totalorder %s27, 7
      %p65 = por %p63, %p64
      %p66 = scmp.ne.s32.totalorder %s58, %s61
      %p67 = scmp.eq.s32.totalorder %s27, 0
      %p68 = por %p66, %p67
      %p69 = scmp.ne.s32.totalorder %s58, %s61
      %p70 = scmp.eq.s32.totalorder %s32, 7
      %p71 = por %p69, %p70
      %p72 = scmp.ne.s32.totalorder %s61, %s62
      %p73 = scmp.eq.s32.totalorder %s32, 0
      %p74 = por %p72, %p73
      %p75 = scmp.ne.s32.totalorder %s61, %s62
      %p76 = scmp.eq.s32.totalorder %s33, 7
      %p77 = por %p75, %p76
      %p79 = scmp.ne.s32.totalorder %s62, %s78
      %p80 = scmp.eq.s32.totalorder %s33, 0
      %p81 = por %p79, %p80
      %s82 = ssub.s32 %s34, %s53
      %s83 = ssub.s32 %s36, %s45
      %s84 = sor.u32 %s82, %s83
      %p85 = scmp.eq.s32.totalorder %s84, 0
      %s87 = sadd.s32 %s86, 1
      %s88 = scalar_select %p85, %s86, %s87
      %p91 = pneg %p85
      %p92 = scmp.eq.s32.totalorder %s27, 7
      %p93 = por %p91, %p92
      %p94 = scmp.ne.s32.totalorder %s86, %s89
      %p95 = scmp.eq.s32.totalorder %s27, 0
      %p96 = por %p94, %p95
      %p97 = scmp.ne.s32.totalorder %s86, %s89
      %p98 = scmp.eq.s32.totalorder %s32, 7
      %p99 = por %p97, %p98
      %p100 = scmp.ne.s32.totalorder %s89, %s90
      %p101 = scmp.eq.s32.totalorder %s32, 0
      %p102 = por %p100, %p101
      %p103 = scmp.ne.s32.totalorder %s89, %s90
      %p104 = scmp.eq.s32.totalorder %s33, 7
      %p105 = por %p103, %p104
      %p107 = scmp.ne.s32.totalorder %s90, %s106
      %p108 = scmp.eq.s32.totalorder %s33, 0
      %p109 = por %p107, %p108
      %s111 = sadd.s32 %s110, 1
      %p114 = scmp.eq.s32.totalorder %s27, 7
      %p115 = scmp.ne.s32.totalorder %s110, %s112
      %p116 = scmp.eq.s32.totalorder %s27, 0
      %p117 = por %p115, %p116
      %p118 = scmp.ne.s32.totalorder %s110, %s112
      %p119 = scmp.eq.s32.totalorder %s32, 7
      %p120 = por %p118, %p119
      %p121 = scmp.ne.s32.totalorder %s112, %s113
      %p122 = scmp.eq.s32.totalorder %s32, 0
      %p123 = por %p121, %p122
      %p124 = scmp.ne.s32.totalorder %s112, %s113
      %p125 = scmp.eq.s32.totalorder %s33, 7
      %p126 = por %p124, %p125
      %p128 = scmp.ne.s32.totalorder %s113, %s127
      %p129 = scmp.eq.s32.totalorder %s33, 0
      %p130 = por %p128, %p129
      %s132 = sadd.s32 %s131, 1
      %p135 = scmp.eq.s32.totalorder %s27, 7
      %p136 = scmp.ne.s32.totalorder %s131, %s133
      %p137 = scmp.eq.s32.totalorder %s27, 0
      %p138 = por %p136, %p137
      %p139 = scmp.ne.s32.totalorder %s131, %s133
      %p140 = scmp.eq.s32.totalorder %s32, 7
      %p141 = por %p139, %p140
      %p142 = scmp.ne.s32.totalorder %s133, %s134
      %p143 = scmp.eq.s32.totalorder %s32, 0
      %p144 = por %p142, %p143
      %p145 = scmp.ne.s32.totalorder %s133, %s134
      %p146 = scmp.eq.s32.totalorder %s33, 7
      %p147 = por %p145, %p146
      %p149 = scmp.ne.s32.totalorder %s134, %s148
      %p150 = scmp.eq.s32.totalorder %s33, 0
      %p151 = por %p149, %p150
      %s153 = sadd.s32 %s152, 1
      %p156 = scmp.eq.s32.totalorder %s27, 7
      %p157 = scmp.ne.s32.totalorder %s152, %s154
      %p158 = scmp.eq.s32.totalorder %s27, 0
      %p159 = por %p157, %p158
      %p160 = scmp.ne.s32.totalorder %s152, %s154
      %p161 = scmp.eq.s32.totalorder %s32, 7
      %p162 = por %p160, %p161
      %p163 = scmp.ne.s32.totalorder %s154, %s155
      %p164 = scmp.eq.s32.totalorder %s32, 0
      %p165 = por %p163, %p164
      %p166 = scmp.ne.s32.totalorder %s154, %s155
      %p167 = scmp.eq.s32.totalorder %s33, 7
      %p168 = por %p166, %p167
      %p170 = scmp.ne.s32.totalorder %s155, %s169
      %p171 = scmp.eq.s32.totalorder %s33, 0
      %p172 = por %p170, %p171
      %s174 = sadd.s32 %s173, 1
      %p177 = scmp.eq.s32.totalorder %s27, 7
      %p178 = scmp.ne.s32.totalorder %s173, %s175
      %p179 = scmp.eq.s32.totalorder %s27, 0
      %p180 = por %p178, %p179
      %p181 = scmp.ne.s32.totalorder %s173, %s175
      %p182 = scmp.eq.s32.totalorder %s32, 7
      %p183 = por %p181, %p182
      %p184 = scmp.ne.s32.totalorder %s175, %s176
      %p185 = scmp.eq.s32.totalorder %s32, 0
      %p186 = por %p184, %p185
      %p187 = scmp.ne.s32.totalorder %s175, %s176
      %p188 = scmp.eq.s32.totalorder %s33, 7
      %p189 = por %p187, %p188
      %p191 = scmp.ne.s32.totalorder %s176, %s190
      %p192 = scmp.eq.s32.totalorder %s33, 0
      %p193 = por %p191, %p192
      %s195 = sadd.s32 %s194, 1
      %p198 = scmp.eq.s32.totalorder %s27, 7
      %p199 = scmp.ne.s32.totalorder %s194, %s196
      %p200 = scmp.eq.s32.totalorder %s27, 0
      %p201 = por %p199, %p200
      %p202 = scmp.ne.s32.totalorder %s194, %s196
      %p203 = scmp.eq.s32.totalorder %s32, 7
      %p204 = por %p202, %p203
      %p205 = scmp.ne.s32.totalorder %s196, %s197
      %p206 = scmp.eq.s32.totalorder %s32, 0
      %p207 = por %p205, %p206
      %p208 = scmp.ne.s32.totalorder %s196, %s197
      %p209 = scmp.eq.s32.totalorder %s33, 7
      %p210 = por %p208, %p209
      %p212 = scmp.ne.s32.totalorder %s197, %s211
      %p213 = scmp.eq.s32.totalorder %s33, 0
      %p214 = por %p212, %p213
      %s216 = sadd.s32 %s215, 1
      %p219 = scmp.eq.s32.totalorder %s27, 7
      %p220 = scmp.ne.s32.totalorder %s215, %s217
      %p221 = scmp.eq.s32.totalorder %s27, 0
      %p222 = por %p220, %p221
      %p223 = scmp.ne.s32.totalorder %s215, %s217
      %p224 = scmp.eq.s32.totalorder %s32, 7
      %p225 = por %p223, %p224
      %p226 = scmp.ne.s32.totalorder %s217, %s218
      %p227 = scmp.eq.s32.totalorder %s32, 0
      %p228 = por %p226, %p227
      %p229 = scmp.ne.s32.totalorder %s217, %s218
      %p230 = scmp.eq.s32.totalorder %s33, 7
      %p231 = por %p229, %p230
      %p233 = scmp.ne.s32.totalorder %s218, %s232
      %p234 = scmp.eq.s32.totalorder %s33, 0
      %p235 = por %p233, %p234
      %s237 = sadd.s32 %s236, 1
      %p240 = scmp.eq.s32.totalorder %s27, 7
      %p241 = scmp.ne.s32.totalorder %s236, %s238
      %p242 = scmp.eq.s32.totalorder %s27, 0
      %p243 = por %p241, %p242
      %p244 = scmp.ne.s32.totalorder %s236, %s238
      %p245 = scmp.eq.s32.totalorder %s32, 7
      %p246 = por %p244, %p245
      %p247 = scmp.ne.s32.totalorder %s238, %s239
      %p248 = scmp.eq.s32.totalorder %s32, 0
      %p249 = por %p247, %p248
      %p250 = scmp.ne.s32.totalorder %s238, %s239
      %p251 = scmp.eq.s32.totalorder %s33, 7
      %p252 = por %p250, %p251
      %p254 = scmp.ne.s32.totalorder %s239, %s253
      %p255 = scmp.eq.s32.totalorder %s33, 0
      %p256 = por %p254, %p255
      %s258 = sadd.s32 %s257, 1
      %p261 = scmp.eq.s32.totalorder %s27, 7
      %p262 = scmp.ne.s32.totalorder %s257, %s259
      %p263 = scmp.eq.s32.totalorder %s27, 0
      %p264 = por %p262, %p263
      %p265 = scmp.ne.s32.totalorder %s257, %s259
      %p266 = scmp.eq.s32.totalorder %s32, 7
      %p267 = por %p265, %p266
      %p268 = scmp.ne.s32.totalorder %s259, %s260
      %p269 = scmp.eq.s32.totalorder %s32, 0
      %p270 = por %p268, %p269
      %p271 = scmp.ne.s32.totalorder %s259, %s260
      %p272 = scmp.eq.s32.totalorder %s33, 7
      %p273 = por %p271, %p272
      %p275 = scmp.ne.s32.totalorder %s260, %s274
      %p276 = scmp.eq.s32.totalorder %s33, 0
      %p277 = por %p275, %p276
      %s278 = ssub.s32 %s34, %s53
      %s279 = ssub.s32 %s35, %s49
      %s280 = sor.u32 %s278, %s279
      %p281 = scmp.eq.s32.totalorder %s280, 0
      %s283 = sadd.s32 %s282, 1
      %s284 = scalar_select %p281, %s282, %s283
      %p287 = pneg %p281
      %p288 = scmp.eq.s32.totalorder %s27, 7
      %p289 = por %p287, %p288
      %p290 = scmp.ne.s32.totalorder %s282, %s285
      %p291 = scmp.eq.s32.totalorder %s27, 0
      %p292 = por %p290, %p291
      %p293 = scmp.ne.s32.totalorder %s282, %s285
      %p294 = scmp.eq.s32.totalorder %s32, 7
      %p295 = por %p293, %p294
      %p296 = scmp.ne.s32.totalorder %s285, %s286
      %p297 = scmp.eq.s32.totalorder %s32, 0
      %p298 = por %p296, %p297
      %p299 = scmp.ne.s32.totalorder %s285, %s286
      %p300 = scmp.eq.s32.totalorder %s33, 7
      %p301 = por %p299, %p300
      %p303 = scmp.ne.s32.totalorder %s286, %s302
      %p304 = scmp.eq.s32.totalorder %s33, 0
      %p305 = por %p303, %p304
      %p306 = scmp.le.s32.totalorder 1, %s27
      %p307 = scmp.lt.s32.totalorder %s27, 9
      %p308 = pnand %p306, %p307
      %p309 = pneg %p308
      // Predicated region
      $region9: #{tpu_custom_call.1} parent=5 // pred_check
        _
      $region10: #{tpu_custom_call.1} parent=5 // pred_check_branch
        %311 = sbr.rel (%p308) target = $region12
      $region11: #{tpu_custom_call.1} parent=5 // pred_region
        %s312 = ssub.s32 %s27, 1
        // Predicated region
        $region13: #{tpu_custom_call.1} parent=11 // pred_check
          %p313 = pneg %p123
        $region14: #{tpu_custom_call.1} parent=11 // pred_check_branch
          %315 = sbr.rel (%p313) target = $region16
        $region15: #{tpu_custom_call.1} parent=11 // pred_region
          %s317 = ssub.s32 1024, 1024
          %318 = vsyncadd [#allocation10], %s317
          %s319 = sshll.u32 [#allocation11], 4
          %s320 = int_to_ptr.vmem [resolvable:$true] %s319
          %325 = dma.hbm_to_vmem [thread:$0]  %s2, 1024, %s320, [#allocation10], 64, 64, 4
        $region16: #{tpu_custom_call.1} parent=11 // pred_fallthru
          _
        // Predicated region
        $region17: #{tpu_custom_call.1} parent=11 // pred_check
          %p326 = pneg %p144
        $region18: #{tpu_custom_call.1} parent=11 // pred_check_branch
          %328 = sbr.rel (%p326) target = $region20
        $region19: #{tpu_custom_call.1} parent=11 // pred_region
          _
        $region20: #{tpu_custom_call.1} parent=11 // pred_fallthru
          _
        // Predicated region
        $region21: #{tpu_custom_call.1} parent=11 // pred_check
          %p329 = pneg %p165
        $region22: #{tpu_custom_call.1} parent=11 // pred_check_branch
          %331 = sbr.rel (%p329) target = $region24
        $region23: #{tpu_custom_call.1} parent=11 // pred_region
          %s333 = ssub.s32 1024, 1024
          %334 = vsyncadd [#allocation13], %s333
          %s335 = sshll.u32 [#allocation12], 4
          %s336 = int_to_ptr.vmem [resolvable:$true] %s335
          %341 = dma.hbm_to_vmem [thread:$0]  %s4, 1024, %s336, [#allocation13], 64, 64, 4
        $region24: #{tpu_custom_call.1} parent=11 // pred_fallthru
          _
        // Predicated region
        $region25: #{tpu_custom_call.1} parent=11 // pred_check
          %p342 = pneg %p186
        $region26: #{tpu_custom_call.1} parent=11 // pred_check_branch
          %344 = sbr.rel (%p342) target = $region28
        $region27: #{tpu_custom_call.1} parent=11 // pred_region
          _
        $region28: #{tpu_custom_call.1} parent=11 // pred_fallthru
          _
        // Predicated region
        $region29: #{tpu_custom_call.1} parent=11 // pred_check
          %p345 = pneg %p207
        $region30: #{tpu_custom_call.1} parent=11 // pred_check_branch
          %347 = sbr.rel (%p345) target = $region32
        $region31: #{tpu_custom_call.1} parent=11 // pred_region
          %s349 = ssub.s32 1024, 1024
          %350 = vsyncadd [#allocation13], %s349
          %s351 = sshll.u32 [#allocation14], 4
          %s352 = int_to_ptr.vmem [resolvable:$true] %s351
          %357 = dma.hbm_to_vmem [thread:$0]  %s6, 1024, %s352, [#allocation13], 64, 64, 4
        $region32: #{tpu_custom_call.1} parent=11 // pred_fallthru
          _
        // Predicated region
        $region33: #{tpu_custom_call.1} parent=11 // pred_check
          %p358 = pneg %p228
        $region34: #{tpu_custom_call.1} parent=11 // pred_check_branch
          %360 = sbr.rel (%p358) target = $region36
        $region35: #{tpu_custom_call.1} parent=11 // pred_region
          _
        $region36: #{tpu_custom_call.1} parent=11 // pred_fallthru
          _
        // Predicated region
        $region37: #{tpu_custom_call.1} parent=11 // pred_check
          %p361 = pneg %p249
        $region38: #{tpu_custom_call.1} parent=11 // pred_check_branch
          %363 = sbr.rel (%p361) target = $region40
        $region39: #{tpu_custom_call.1} parent=11 // pred_region
          %s365 = ssub.s32 1024, 1024
          %366 = vsyncadd [#allocation16], %s365
          %s367 = sshll.u32 [#allocation15], 4
          %s368 = int_to_ptr.vmem [resolvable:$true] %s367
          %373 = dma.hbm_to_vmem [thread:$0]  %s8, 1024, %s368, [#allocation16], 64, 64, 4
        $region40: #{tpu_custom_call.1} parent=11 // pred_fallthru
          _
        // Predicated region
        $region41: #{tpu_custom_call.1} parent=11 // pred_check
          %p374 = pneg %p270
        $region42: #{tpu_custom_call.1} parent=11 // pred_check_branch
          %376 = sbr.rel (%p374) target = $region44
        $region43: #{tpu_custom_call.1} parent=11 // pred_region
          _
        $region44: #{tpu_custom_call.1} parent=11 // pred_fallthru
          _
      $region12: #{tpu_custom_call.1} parent=5 // pred_fallthru
        _
      %p377 = scmp.lt.s32.totalorder %s27, 8
      // Predicated region
      $region45: #{tpu_custom_call.1} parent=5 // pred_check
        %p378 = pneg %p377
      $region46: #{tpu_custom_call.1} parent=5 // pred_check_branch
        %380 = sbr.rel (%p378) target = $region48
      $region47: #{tpu_custom_call.1} parent=5 // pred_region
        // Predicated region
        $region49: #{tpu_custom_call.1} parent=47 // pred_check
          %p381 = pneg %p68
        $region50: #{tpu_custom_call.1} parent=47 // pred_check_branch
          %383 = sbr.rel (%p381) target = $region52
        $region51: #{tpu_custom_call.1} parent=47 // pred_region
          %s384 = sand.u32 %s58, 1
          %s385 = scalar_lea.sflag [#allocation7], %s384
          %s386 = sand.u32 %s58, 1
          %s387 = smul.addr %s386, 128
          %s388 = scalar_lea.vmem [#allocation6], %s387
          %s389 = smul.u32 16, %s35
          %s391 = ssub.s32 2048, 2048
          %392 = vsyncadd %s385, %s391
          %s393 = smul.addr %s34, 32
          %s394 = sadd.s32 %s389, %s393
          %s395 = smul.addr %s394, 128
          %s396 = scalar_lea.hbm %s0, %s395
          %s397 = sshll.u32 %s388, 4
          %s398 = int_to_ptr.vmem [resolvable:$true] %s397
          %403 = dma.hbm_to_vmem [thread:$0]  %s396, 2048, %s398, %s385, 128, 128, 8
        $region52: #{tpu_custom_call.1} parent=47 // pred_fallthru
          _
        // Predicated region
        $region53: #{tpu_custom_call.1} parent=47 // pred_check
          %p404 = pneg %p96
        $region54: #{tpu_custom_call.1} parent=47 // pred_check_branch
          %406 = sbr.rel (%p404) target = $region56
        $region55: #{tpu_custom_call.1} parent=47 // pred_region
          %s407 = sand.u32 %s27, 1
          %s408 = scalar_lea.sflag [#allocation10], %s407
          %s409 = sand.u32 %s86, 1
          %s410 = smul.addr %s409, 128
          %s411 = scalar_lea.vmem [#allocation9], %s410
          %s412 = smul.u32 16, %s36
          %s414 = ssub.s32 2048, 2048
          %415 = vsyncadd %s408, %s414
          %s416 = smul.addr %s34, 32
          %s417 = sadd.s32 %s412, %s416
          %s418 = smul.addr %s417, 128
          %s419 = scalar_lea.hbm %s1, %s418
          %s420 = sshll.u32 %s411, 4
          %s421 = int_to_ptr.vmem [resolvable:$true] %s420
          %426 = dma.hbm_to_vmem [thread:$0]  %s419, 2048, %s421, %s408, 128, 128, 8
        $region56: #{tpu_custom_call.1} parent=47 // pred_fallthru
          _
      $region48: #{tpu_custom_call.1} parent=5 // pred_fallthru
        _
      %p427 = scmp.le.s32.totalorder 1, %s27
      %p428 = scmp.lt.s32.totalorder %s27, 9
      %p429 = pnand %p427, %p428
      %p430 = pneg %p429
      // Predicated region
      $region57: #{tpu_custom_call.1} parent=5 // pred_check
        _
      $region58: #{tpu_custom_call.1} parent=5 // pred_check_branch
        %432 = sbr.rel (%p429) target = $region60
      $region59: #{tpu_custom_call.1} parent=5 // pred_region
        %s433 = ssub.s32 %s27, 1
        %s434 = sand.u32 %s61, 1
        %s435 = scalar_lea.sflag [#allocation7], %s434
        %s436 = sand.u32 %s61, 1
        %s437 = smul.addr %s436, 128
        %s438 = scalar_lea.vmem [#allocation6], %s437
        // Predicated region
        $region61: #{tpu_custom_call.1} parent=59 // pred_check
          %p439 = pneg %p74
        $region62: #{tpu_custom_call.1} parent=59 // pred_check_branch
          %441 = sbr.rel (%p439) target = $region64
        $region63: #{tpu_custom_call.1} parent=59 // pred_region
          %442 = dma.done %s435, 2048
        $region64: #{tpu_custom_call.1} parent=59 // pred_fallthru
          _
        %s443 = sand.u32 %s32, 1
        %s444 = scalar_lea.sflag [#allocation10], %s443
        %s445 = sand.u32 %s89, 1
        %s446 = smul.addr %s445, 128
        %s447 = scalar_lea.vmem [#allocation9], %s446
        // Predicated region
        $region65: #{tpu_custom_call.1} parent=59 // pred_check
          %p448 = pneg %p102
        $region66: #{tpu_custom_call.1} parent=59 // pred_check_branch
          %450 = sbr.rel (%p448) target = $region68
        $region67: #{tpu_custom_call.1} parent=59 // pred_region
          %451 = dma.done %s444, 2048
        $region68: #{tpu_custom_call.1} parent=59 // pred_fallthru
          _
        // Predicated region
        $region69: #{tpu_custom_call.1} parent=59 // pred_check
          %p452 = pneg %p123
        $region70: #{tpu_custom_call.1} parent=59 // pred_check_branch
          %454 = sbr.rel (%p452) target = $region72
        $region71: #{tpu_custom_call.1} parent=59 // pred_region
          %455 = dma.done [#allocation10], 1024
        $region72: #{tpu_custom_call.1} parent=59 // pred_fallthru
          _
        // Predicated region
        $region73: #{tpu_custom_call.1} parent=59 // pred_check
          %p456 = pneg %p165
        $region74: #{tpu_custom_call.1} parent=59 // pred_check_branch
          %458 = sbr.rel (%p456) target = $region76
        $region75: #{tpu_custom_call.1} parent=59 // pred_region
          %459 = dma.done [#allocation13], 1024
        $region76: #{tpu_custom_call.1} parent=59 // pred_fallthru
          _
        // Predicated region
        $region77: #{tpu_custom_call.1} parent=59 // pred_check
          %p460 = pneg %p207
        $region78: #{tpu_custom_call.1} parent=59 // pred_check_branch
          %462 = sbr.rel (%p460) target = $region80
        $region79: #{tpu_custom_call.1} parent=59 // pred_region
          %463 = dma.done [#allocation13], 1024
        $region80: #{tpu_custom_call.1} parent=59 // pred_fallthru
          _
        // Predicated region
        $region81: #{tpu_custom_call.1} parent=59 // pred_check
          %p464 = pneg %p249
        $region82: #{tpu_custom_call.1} parent=59 // pred_check_branch
          %466 = sbr.rel (%p464) target = $region84
        $region83: #{tpu_custom_call.1} parent=59 // pred_region
          %467 = dma.done [#allocation16], 1024
        $region84: #{tpu_custom_call.1} parent=59 // pred_fallthru
          _
        %s468 = sand.u32 %s61, 1
        %s469 = scalar_lea.sflag [#allocation7], %s468
        %s470 = sand.u32 %s61, 1
        %s471 = smul.addr %s470, 128
        %s472 = scalar_lea.vmem [#allocation6], %s471
        %p473 = pneg %p74
        %p474 = pneg %p71
        %s475 = sand.u32 %s32, 1
        %s476 = scalar_lea.sflag [#allocation10], %s475
        %s477 = sand.u32 %s89, 1
        %s478 = smul.addr %s477, 128
        %s479 = scalar_lea.vmem [#allocation9], %s478
        %p480 = pneg %p102
        %p481 = pneg %p99
        %p482 = pneg %p123
        %p483 = pneg %p120
        %p484 = pneg %p144
        %p485 = pneg %p141
        %p486 = pneg %p165
        %p487 = pneg %p162
        %p488 = pneg %p186
        %p489 = pneg %p183
        %p490 = pneg %p207
        %p491 = pneg %p204
        %p492 = pneg %p228
        %p493 = pneg %p225
        %p494 = pneg %p249
        %p495 = pneg %p246
        %p496 = pneg %p270
        %p497 = pneg %p267
        %p498 = pneg %p298
        %p499 = pneg %p295
        %s500 = sand.u32 %s285, 1
        %s501 = scalar_lea.sflag [#allocation8], %s500
        %s502 = sand.u32 %s285, 1
        %s503 = smul.addr %s502, 128
        %s504 = scalar_lea.vmem [#allocation17], %s503
        %s505 = smul.u32 16, %s38
        %s506 = smul.u32 16, %s39
        %s507 = smul.u32 16, %s38
        %p509 = scmp.eq.s32.totalorder %s39, 0
        // Predicated region
        $region85: #{tpu_custom_call.1} parent=59 // pred_check
          %p510 = pneg %p509
        $region86: #{tpu_custom_call.1} parent=59 // pred_check_branch
          %512 = sbr.rel (%p510) target = $region88
        $region87: #{tpu_custom_call.1} parent=59 // pred_region
          %v513 = vld [vmem:[%s438] sm:$0xff]
          %v514 = vld [vmem:[%s438 + $0x8] sm:$0xff]
          %v515 = vld [vmem:[%s438 + $0x10] sm:$0xff]
          %v516 = vld [vmem:[%s438 + $0x18] sm:$0xff]
          %v517 = vld [vmem:[%s438 + $0x20] sm:$0xff]
          %v518 = vld [vmem:[%s438 + $0x28] sm:$0xff]
          %v519 = vld [vmem:[%s438 + $0x30] sm:$0xff]
          %v520 = vld [vmem:[%s438 + $0x38] sm:$0xff]
          %v521 = vld [vmem:[%s438 + $0x40] sm:$0xff]
          %v522 = vld [vmem:[%s438 + $0x48] sm:$0xff]
          %v523 = vld [vmem:[%s438 + $0x50] sm:$0xff]
          %v524 = vld [vmem:[%s438 + $0x58] sm:$0xff]
          %v525 = vld [vmem:[%s438 + $0x60] sm:$0xff]
          %v526 = vld [vmem:[%s438 + $0x68] sm:$0xff]
          %v527 = vld [vmem:[%s438 + $0x70] sm:$0xff]
          %v528 = vld [vmem:[%s438 + $0x78] sm:$0xff]
          %v529 = vpack.c.bf16 %v514, %v513
          %v530 = vpack.c.bf16 %v516, %v515
          %v531 = vpack.c.bf16 %v518, %v517
          %v532 = vpack.c.bf16 %v520, %v519
          %v533 = vpack.c.bf16 %v522, %v521
          %v534 = vpack.c.bf16 %v524, %v523
          %v535 = vpack.c.bf16 %v526, %v525
          %v536 = vpack.c.bf16 %v528, %v527
          %v537 = vld [vmem:[#allocation11] sm:$0xf]
          %v538 = vld [vmem:[#allocation11 + $0x4] sm:$0xf]
          %v539 = vld [vmem:[#allocation11 + $0x8] sm:$0xf]
          %v540 = vld [vmem:[#allocation11 + $0xc] sm:$0xf]
          %v541 = vld [vmem:[#allocation11 + $0x10] sm:$0xf]
          %v542 = vld [vmem:[#allocation11 + $0x14] sm:$0xf]
          %v543 = vld [vmem:[#allocation11 + $0x18] sm:$0xf]
          %v544 = vld [vmem:[#allocation11 + $0x1c] sm:$0xf]
          %v545 = vld [vmem:[#allocation11 + $0x20] sm:$0xf]
          %v546 = vld [vmem:[#allocation11 + $0x24] sm:$0xf]
          %v547 = vld [vmem:[#allocation11 + $0x28] sm:$0xf]
          %v548 = vld [vmem:[#allocation11 + $0x2c] sm:$0xf]
          %v549 = vld [vmem:[#allocation11 + $0x30] sm:$0xf]
          %v550 = vld [vmem:[#allocation11 + $0x34] sm:$0xf]
          %v551 = vld [vmem:[#allocation11 + $0x38] sm:$0xf]
          %v552 = vld [vmem:[#allocation11 + $0x3c] sm:$0xf]
          %v553 = vld [vmem:[%s3] sm:$0x1]
          %v555 = vlaneseq
          %v556 = vshrl.u32 %v555, 7
          %v557 = vsub.s32 0, %v556
          %v558 = vrot.slane %v553, %v557
          %v576 = vunpack.c.l.b16 %v537
          %v577 = vunpack.c.l.b16 %v538
          %v578 = vunpack.c.l.b16 %v539
          %v579 = vunpack.c.l.b16 %v540
          %v580 = vunpack.c.l.b16 %v541
          %v581 = vunpack.c.l.b16 %v542
          %v582 = vunpack.c.l.b16 %v543
          %v583 = vunpack.c.l.b16 %v544
          %v584 = vunpack.c.l.b16 %v545
          %v585 = vunpack.c.l.b16 %v546
          %v586 = vunpack.c.l.b16 %v547
          %v587 = vunpack.c.l.b16 %v548
          %v588 = vunpack.c.l.b16 %v549
          %v589 = vunpack.c.l.b16 %v550
          %v590 = vunpack.c.l.b16 %v551
          %v591 = vunpack.c.l.b16 %v552
          %v592 = vpack.c.b16 %v577, %v576
          %v593 = vpack.c.b16 %v579, %v578
          %v594 = vpack.c.b16 %v581, %v580
          %v595 = vpack.c.b16 %v583, %v582
          %v596 = vpack.c.b16 %v585, %v584
          %v597 = vpack.c.b16 %v587, %v586
          %v598 = vpack.c.b16 %v589, %v588
          %v599 = vpack.c.b16 %v591, %v590
          %608 = vmatprep.subr.bf16.mxu0 0
          %609 = vmatpush1.bf16.msra.mxu0 %v592
          %610 = vmatprep.subr.bf16.mxu0 0
          %611 = vmatpush1.bf16.msra.mxu0 %v593
          %612 = vmatprep.subr.bf16.mxu0 0
          %613 = vmatpush1.bf16.msra.mxu0 %v594
          %614 = vmatprep.subr.bf16.mxu0 0
          %615 = vmatpush1.bf16.msra.mxu0 %v595
          %616 = vmatprep.subr.bf16.mxu0 0
          %617 = vmatpush1.bf16.msra.mxu0 %v596
          %618 = vmatprep.subr.bf16.mxu0 0
          %619 = vmatpush1.bf16.msra.mxu0 %v597
          %620 = vmatprep.subr.bf16.mxu0 0
          %621 = vmatpush1.bf16.msra.mxu0 %v598
          %622 = vmatprep.subr.bf16.mxu0 0
          %623 = vmatpush1.bf16.msra.mxu0 %v599
          %624 = vmatprep.subr.bf16.mxu0 0
          %625 = vmatpush1.bf16.msra.mxu0 0
          %626 = vmatprep.subr.bf16.mxu0 0
          %627 = vmatpush1.bf16.msra.mxu0 0
          %628 = vmatprep.subr.bf16.mxu0 0
          %629 = vmatpush1.bf16.msra.mxu0 0
          %630 = vmatprep.subr.bf16.mxu0 0
          %631 = vmatpush1.bf16.msra.mxu0 0
          %632 = vmatprep.subr.bf16.mxu0 0
          %633 = vmatpush1.bf16.msra.mxu0 0
          %634 = vmatprep.subr.bf16.mxu0 0
          %635 = vmatpush1.bf16.msra.mxu0 0
          %636 = vmatprep.subr.bf16.mxu0 0
          %637 = vmatpush1.bf16.msra.mxu0 0
          %638 = vmatprep.subr.bf16.mxu0 0
          %639 = vmatpush1.bf16.msra.mxu0 0
          %640 = vmatprep.mubr.bf16.mxu0 0
          %641 = vmatmul.mubr.bf16.gmra.mrb[0].mxu0 %v529
          %v642 = vpop.f32.mrb[0].mxu0
          %v643 = vadd.f32 %v558, %v642
          %v644 = vpop.f32.mrb[0].mxu0
          %v645 = vpop.f32.mrb[0].mxu0
          %v646 = vadd.f32 %v558, %v645
          %v647 = vpop.f32.mrb[0].mxu0
          %648 = vmatprep.mubr.bf16.mxu0 0
          %649 = vmatmul.mubr.bf16.gmra.mrb[0].mxu0 %v530
          %v650 = vpop.f32.mrb[0].mxu0
          %v651 = vadd.f32 %v558, %v650
          %v652 = vpop.f32.mrb[0].mxu0
          %v653 = vpop.f32.mrb[0].mxu0
          %v654 = vadd.f32 %v558, %v653
          %v655 = vpop.f32.mrb[0].mxu0
          %656 = vmatprep.mubr.bf16.mxu0 0
          %657 = vmatmul.mubr.bf16.gmra.mrb[0].mxu0 %v531
          %v658 = vpop.f32.mrb[0].mxu0
          %v659 = vadd.f32 %v558, %v658
          %v660 = vpop.f32.mrb[0].mxu0
          %v661 = vpop.f32.mrb[0].mxu0
          %v662 = vadd.f32 %v558, %v661
          %v663 = vpop.f32.mrb[0].mxu0
          %664 = vmatprep.mubr.bf16.mxu0 0
          %665 = vmatmul.mubr.bf16.gmra.mrb[0].mxu0 %v532
          %v666 = vpop.f32.mrb[0].mxu0
          %v667 = vadd.f32 %v558, %v666
          %v668 = vpop.f32.mrb[0].mxu0
          %v669 = vpop.f32.mrb[0].mxu0
          %v670 = vadd.f32 %v558, %v669
          %v671 = vpop.f32.mrb[0].mxu0
          %672 = vmatprep.mubr.bf16.mxu0 0
          %673 = vmatmul.mubr.bf16.gmra.mrb[0].mxu0 %v533
          %v674 = vpop.f32.mrb[0].mxu0
          %v675 = vadd.f32 %v558, %v674
          %v676 = vpop.f32.mrb[0].mxu0
          %v677 = vpop.f32.mrb[0].mxu0
          %v678 = vadd.f32 %v558, %v677
          %v679 = vpop.f32.mrb[0].mxu0
          %680 = vmatprep.mubr.bf16.mxu0 0
          %681 = vmatmul.mubr.bf16.gmra.mrb[0].mxu0 %v534
          %v682 = vpop.f32.mrb[0].mxu0
          %v683 = vadd.f32 %v558, %v682
          %v684 = vpop.f32.mrb[0].mxu0
          %v685 = vpop.f32.mrb[0].mxu0
          %v686 = vadd.f32 %v558, %v685
          %v687 = vpop.f32.mrb[0].mxu0
          %688 = vmatprep.mubr.bf16.mxu0 0
          %689 = vmatmul.mubr.bf16.gmra.mrb[0].mxu0 %v535
          %v690 = vpop.f32.mrb[0].mxu0
          %v691 = vadd.f32 %v558, %v690
          %v692 = vpop.f32.mrb[0].mxu0
          %v693 = vpop.f32.mrb[0].mxu0
          %v694 = vadd.f32 %v558, %v693
          %v695 = vpop.f32.mrb[0].mxu0
          %696 = vmatprep.mubr.bf16.mxu0 0
          %697 = vmatmul.mubr.bf16.gmra.mrb[0].mxu0 %v536
          %v698 = vpop.f32.mrb[0].mxu0
          %v699 = vadd.f32 %v558, %v698
          %v700 = vpop.f32.mrb[0].mxu0
          %v701 = vpop.f32.mrb[0].mxu0
          %v702 = vadd.f32 %v558, %v701
          %v703 = vpop.f32.mrb[0].mxu0
          %704 = vdwg.mxu0
          %v705 = vmul.f32 %v643, 0.17677669
          %v706 = vmul.f32 %v646, 0.17677669
          %v707 = vmul.f32 %v651, 0.17677669
          %v708 = vmul.f32 %v654, 0.17677669
          %v709 = vmul.f32 %v659, 0.17677669
          %v710 = vmul.f32 %v662, 0.17677669
          %v711 = vmul.f32 %v667, 0.17677669
          %v712 = vmul.f32 %v670, 0.17677669
          %v713 = vmul.f32 %v675, 0.17677669
          %v714 = vmul.f32 %v678, 0.17677669
          %v715 = vmul.f32 %v683, 0.17677669
          %v716 = vmul.f32 %v686, 0.17677669
          %v717 = vmul.f32 %v691, 0.17677669
          %v718 = vmul.f32 %v694, 0.17677669
          %v719 = vmul.f32 %v699, 0.17677669
          %v720 = vmul.f32 %v702, 0.17677669
          %v721 = vpack.c.bf16 %v706, %v705
          %v722 = vpack.c.bf16 %v708, %v707
          %v723 = vpack.c.bf16 %v710, %v709
          %v724 = vpack.c.bf16 %v712, %v711
          %v725 = vpack.c.bf16 %v714, %v713
          %v726 = vpack.c.bf16 %v716, %v715
          %v727 = vpack.c.bf16 %v718, %v717
          %v728 = vpack.c.bf16 %v720, %v719
          %729 = vst [vmem:[#allocation2] sm:$0xff] %v721
          %730 = vst [vmem:[#allocation2 + $0x8] sm:$0xff] %v722
          %731 = vst [vmem:[#allocation2 + $0x10] sm:$0xff] %v723
          %732 = vst [vmem:[#allocation2 + $0x18] sm:$0xff] %v724
          %733 = vst [vmem:[#allocation2 + $0x20] sm:$0xff] %v725
          %734 = vst [vmem:[#allocation2 + $0x28] sm:$0xff] %v726
          %735 = vst [vmem:[#allocation2 + $0x30] sm:$0xff] %v727
          %736 = vst [vmem:[#allocation2 + $0x38] sm:$0xff] %v728
          %vm737 = vcmask 7168
          %738 = vst.msk [vmem:[#allocation3] sm:$0xff] %vm737, -inf
          %739 = vst.msk [vmem:[#allocation3 + $0x8] sm:$0xff] %vm737, -inf
          %740 = vst.msk [vmem:[#allocation3 + $0x10] sm:$0xff] %vm737, -inf
          %741 = vst.msk [vmem:[#allocation3 + $0x18] sm:$0xff] %vm737, -inf
          %742 = vst.msk [vmem:[#allocation3 + $0x20] sm:$0xff] %vm737, -inf
          %743 = vst.msk [vmem:[#allocation3 + $0x28] sm:$0xff] %vm737, -inf
          %744 = vst.msk [vmem:[#allocation3 + $0x30] sm:$0xff] %vm737, -inf
          %745 = vst.msk [vmem:[#allocation3 + $0x38] sm:$0xff] %vm737, -inf
          %746 = vst.msk [vmem:[#allocation3 + $0x40] sm:$0xff] %vm737, -inf
          %747 = vst.msk [vmem:[#allocation3 + $0x48] sm:$0xff] %vm737, -inf
          %748 = vst.msk [vmem:[#allocation3 + $0x50] sm:$0xff] %vm737, -inf
          %749 = vst.msk [vmem:[#allocation3 + $0x58] sm:$0xff] %vm737, -inf
          %750 = vst.msk [vmem:[#allocation3 + $0x60] sm:$0xff] %vm737, -inf
          %751 = vst.msk [vmem:[#allocation3 + $0x68] sm:$0xff] %vm737, -inf
          %752 = vst.msk [vmem:[#allocation3 + $0x70] sm:$0xff] %vm737, -inf
          %753 = vst.msk [vmem:[#allocation3 + $0x78] sm:$0xff] %vm737, -inf
          %754 = vst.msk [vmem:[#allocation3 + $0x80] sm:$0xff] %vm737, -inf
          %755 = vst.msk [vmem:[#allocation3 + $0x88] sm:$0xff] %vm737, -inf
          %756 = vst.msk [vmem:[#allocation3 + $0x90] sm:$0xff] %vm737, -inf
          %757 = vst.msk [vmem:[#allocation3 + $0x98] sm:$0xff] %vm737, -inf
          %758 = vst.msk [vmem:[#allocation3 + $0xa0] sm:$0xff] %vm737, -inf
          %759 = vst.msk [vmem:[#allocation3 + $0xa8] sm:$0xff] %vm737, -inf
          %760 = vst.msk [vmem:[#allocation3 + $0xb0] sm:$0xff] %vm737, -inf
          %761 = vst.msk [vmem:[#allocation3 + $0xb8] sm:$0xff] %vm737, -inf
          %762 = vst.msk [vmem:[#allocation3 + $0xc0] sm:$0xff] %vm737, -inf
          %763 = vst.msk [vmem:[#allocation3 + $0xc8] sm:$0xff] %vm737, -inf
          %764 = vst.msk [vmem:[#allocation3 + $0xd0] sm:$0xff] %vm737, -inf
          %765 = vst.msk [vmem:[#allocation3 + $0xd8] sm:$0xff] %vm737, -inf
          %766 = vst.msk [vmem:[#allocation3 + $0xe0] sm:$0xff] %vm737, -inf
          %767 = vst.msk [vmem:[#allocation3 + $0xe8] sm:$0xff] %vm737, -inf
          %768 = vst.msk [vmem:[#allocation3 + $0xf0] sm:$0xff] %vm737, -inf
          %769 = vst.msk [vmem:[#allocation3 + $0xf8] sm:$0xff] %vm737, -inf
          %770 = vst.msk [vmem:[#allocation3 + $0x100] sm:$0xff] %vm737, -inf
          %771 = vst.msk [vmem:[#allocation3 + $0x108] sm:$0xff] %vm737, -inf
          %772 = vst.msk [vmem:[#allocation3 + $0x110] sm:$0xff] %vm737, -inf
          %773 = vst.msk [vmem:[#allocation3 + $0x118] sm:$0xff] %vm737, -inf
          %774 = vst.msk [vmem:[#allocation3 + $0x120] sm:$0xff] %vm737, -inf
          %775 = vst.msk [vmem:[#allocation3 + $0x128] sm:$0xff] %vm737, -inf
          %776 = vst.msk [vmem:[#allocation3 + $0x130] sm:$0xff] %vm737, -inf
          %777 = vst.msk [vmem:[#allocation3 + $0x138] sm:$0xff] %vm737, -inf
          %778 = vst.msk [vmem:[#allocation3 + $0x140] sm:$0xff] %vm737, -inf
          %779 = vst.msk [vmem:[#allocation3 + $0x148] sm:$0xff] %vm737, -inf
          %780 = vst.msk [vmem:[#allocation3 + $0x150] sm:$0xff] %vm737, -inf
          %781 = vst.msk [vmem:[#allocation3 + $0x158] sm:$0xff] %vm737, -inf
          %782 = vst.msk [vmem:[#allocation3 + $0x160] sm:$0xff] %vm737, -inf
          %783 = vst.msk [vmem:[#allocation3 + $0x168] sm:$0xff] %vm737, -inf
          %784 = vst.msk [vmem:[#allocation3 + $0x170] sm:$0xff] %vm737, -inf
          %785 = vst.msk [vmem:[#allocation3 + $0x178] sm:$0xff] %vm737, -inf
          %786 = vst.msk [vmem:[#allocation3 + $0x180] sm:$0xff] %vm737, -inf
          %787 = vst.msk [vmem:[#allocation3 + $0x188] sm:$0xff] %vm737, -inf
          %788 = vst.msk [vmem:[#allocation3 + $0x190] sm:$0xff] %vm737, -inf
          %789 = vst.msk [vmem:[#allocation3 + $0x198] sm:$0xff] %vm737, -inf
          %790 = vst.msk [vmem:[#allocation3 + $0x1a0] sm:$0xff] %vm737, -inf
          %791 = vst.msk [vmem:[#allocation3 + $0x1a8] sm:$0xff] %vm737, -inf
          %792 = vst.msk [vmem:[#allocation3 + $0x1b0] sm:$0xff] %vm737, -inf
          %793 = vst.msk [vmem:[#allocation3 + $0x1b8] sm:$0xff] %vm737, -inf
          %794 = vst.msk [vmem:[#allocation3 + $0x1c0] sm:$0xff] %vm737, -inf
          %795 = vst.msk [vmem:[#allocation3 + $0x1c8] sm:$0xff] %vm737, -inf
          %796 = vst.msk [vmem:[#allocation3 + $0x1d0] sm:$0xff] %vm737, -inf
          %797 = vst.msk [vmem:[#allocation3 + $0x1d8] sm:$0xff] %vm737, -inf
          %798 = vst.msk [vmem:[#allocation3 + $0x1e0] sm:$0xff] %vm737, -inf
          %799 = vst.msk [vmem:[#allocation3 + $0x1e8] sm:$0xff] %vm737, -inf
          %800 = vst.msk [vmem:[#allocation3 + $0x1f0] sm:$0xff] %vm737, -inf
          %801 = vst.msk [vmem:[#allocation3 + $0x1f8] sm:$0xff] %vm737, -inf
          %802 = vst.msk [vmem:[#allocation4] sm:$0xff] %vm737, 0.0
          %803 = vst.msk [vmem:[#allocation4 + $0x8] sm:$0xff] %vm737, 0.0
          %804 = vst.msk [vmem:[#allocation4 + $0x10] sm:$0xff] %vm737, 0.0
          %805 = vst.msk [vmem:[#allocation4 + $0x18] sm:$0xff] %vm737, 0.0
          %806 = vst.msk [vmem:[#allocation4 + $0x20] sm:$0xff] %vm737, 0.0
          %807 = vst.msk [vmem:[#allocation4 + $0x28] sm:$0xff] %vm737, 0.0
          %808 = vst.msk [vmem:[#allocation4 + $0x30] sm:$0xff] %vm737, 0.0
          %809 = vst.msk [vmem:[#allocation4 + $0x38] sm:$0xff] %vm737, 0.0
          %810 = vst.msk [vmem:[#allocation4 + $0x40] sm:$0xff] %vm737, 0.0
          %811 = vst.msk [vmem:[#allocation4 + $0x48] sm:$0xff] %vm737, 0.0
          %812 = vst.msk [vmem:[#allocation4 + $0x50] sm:$0xff] %vm737, 0.0
          %813 = vst.msk [vmem:[#allocation4 + $0x58] sm:$0xff] %vm737, 0.0
          %814 = vst.msk [vmem:[#allocation4 + $0x60] sm:$0xff] %vm737, 0.0
          %815 = vst.msk [vmem:[#allocation4 + $0x68] sm:$0xff] %vm737, 0.0
          %816 = vst.msk [vmem:[#allocation4 + $0x70] sm:$0xff] %vm737, 0.0
          %817 = vst.msk [vmem:[#allocation4 + $0x78] sm:$0xff] %vm737, 0.0
          %818 = vst.msk [vmem:[#allocation4 + $0x80] sm:$0xff] %vm737, 0.0
          %819 = vst.msk [vmem:[#allocation4 + $0x88] sm:$0xff] %vm737, 0.0
          %820 = vst.msk [vmem:[#allocation4 + $0x90] sm:$0xff] %vm737, 0.0
          %821 = vst.msk [vmem:[#allocation4 + $0x98] sm:$0xff] %vm737, 0.0
          %822 = vst.msk [vmem:[#allocation4 + $0xa0] sm:$0xff] %vm737, 0.0
          %823 = vst.msk [vmem:[#allocation4 + $0xa8] sm:$0xff] %vm737, 0.0
          %824 = vst.msk [vmem:[#allocation4 + $0xb0] sm:$0xff] %vm737, 0.0
          %825 = vst.msk [vmem:[#allocation4 + $0xb8] sm:$0xff] %vm737, 0.0
          %826 = vst.msk [vmem:[#allocation4 + $0xc0] sm:$0xff] %vm737, 0.0
          %827 = vst.msk [vmem:[#allocation4 + $0xc8] sm:$0xff] %vm737, 0.0
          %828 = vst.msk [vmem:[#allocation4 + $0xd0] sm:$0xff] %vm737, 0.0
          %829 = vst.msk [vmem:[#allocation4 + $0xd8] sm:$0xff] %vm737, 0.0
          %830 = vst.msk [vmem:[#allocation4 + $0xe0] sm:$0xff] %vm737, 0.0
          %831 = vst.msk [vmem:[#allocation4 + $0xe8] sm:$0xff] %vm737, 0.0
          %832 = vst.msk [vmem:[#allocation4 + $0xf0] sm:$0xff] %vm737, 0.0
          %833 = vst.msk [vmem:[#allocation4 + $0xf8] sm:$0xff] %vm737, 0.0
          %834 = vst.msk [vmem:[#allocation4 + $0x100] sm:$0xff] %vm737, 0.0
          %835 = vst.msk [vmem:[#allocation4 + $0x108] sm:$0xff] %vm737, 0.0
          %836 = vst.msk [vmem:[#allocation4 + $0x110] sm:$0xff] %vm737, 0.0
          %837 = vst.msk [vmem:[#allocation4 + $0x118] sm:$0xff] %vm737, 0.0
          %838 = vst.msk [vmem:[#allocation4 + $0x120] sm:$0xff] %vm737, 0.0
          %839 = vst.msk [vmem:[#allocation4 + $0x128] sm:$0xff] %vm737, 0.0
          %840 = vst.msk [vmem:[#allocation4 + $0x130] sm:$0xff] %vm737, 0.0
          %841 = vst.msk [vmem:[#allocation4 + $0x138] sm:$0xff] %vm737, 0.0
          %842 = vst.msk [vmem:[#allocation4 + $0x140] sm:$0xff] %vm737, 0.0
          %843 = vst.msk [vmem:[#allocation4 + $0x148] sm:$0xff] %vm737, 0.0
          %844 = vst.msk [vmem:[#allocation4 + $0x150] sm:$0xff] %vm737, 0.0
          %845 = vst.msk [vmem:[#allocation4 + $0x158] sm:$0xff] %vm737, 0.0
          %846 = vst.msk [vmem:[#allocation4 + $0x160] sm:$0xff] %vm737, 0.0
          %847 = vst.msk [vmem:[#allocation4 + $0x168] sm:$0xff] %vm737, 0.0
          %848 = vst.msk [vmem:[#allocation4 + $0x170] sm:$0xff] %vm737, 0.0
          %849 = vst.msk [vmem:[#allocation4 + $0x178] sm:$0xff] %vm737, 0.0
          %850 = vst.msk [vmem:[#allocation4 + $0x180] sm:$0xff] %vm737, 0.0
          %851 = vst.msk [vmem:[#allocation4 + $0x188] sm:$0xff] %vm737, 0.0
          %852 = vst.msk [vmem:[#allocation4 + $0x190] sm:$0xff] %vm737, 0.0
          %853 = vst.msk [vmem:[#allocation4 + $0x198] sm:$0xff] %vm737, 0.0
          %854 = vst.msk [vmem:[#allocation4 + $0x1a0] sm:$0xff] %vm737, 0.0
          %855 = vst.msk [vmem:[#allocation4 + $0x1a8] sm:$0xff] %vm737, 0.0
          %856 = vst.msk [vmem:[#allocation4 + $0x1b0] sm:$0xff] %vm737, 0.0
          %857 = vst.msk [vmem:[#allocation4 + $0x1b8] sm:$0xff] %vm737, 0.0
          %858 = vst.msk [vmem:[#allocation4 + $0x1c0] sm:$0xff] %vm737, 0.0
          %859 = vst.msk [vmem:[#allocation4 + $0x1c8] sm:$0xff] %vm737, 0.0
          %860 = vst.msk [vmem:[#allocation4 + $0x1d0] sm:$0xff] %vm737, 0.0
          %861 = vst.msk [vmem:[#allocation4 + $0x1d8] sm:$0xff] %vm737, 0.0
          %862 = vst.msk [vmem:[#allocation4 + $0x1e0] sm:$0xff] %vm737, 0.0
          %863 = vst.msk [vmem:[#allocation4 + $0x1e8] sm:$0xff] %vm737, 0.0
          %864 = vst.msk [vmem:[#allocation4 + $0x1f0] sm:$0xff] %vm737, 0.0
          %865 = vst.msk [vmem:[#allocation4 + $0x1f8] sm:$0xff] %vm737, 0.0
          %866 = vst [vmem:[#allocation5] sm:$0xff] 0.0
          %867 = vst [vmem:[#allocation5 + $0x8] sm:$0xff] 0.0
          %868 = vst [vmem:[#allocation5 + $0x10] sm:$0xff] 0.0
          %869 = vst [vmem:[#allocation5 + $0x18] sm:$0xff] 0.0
          %870 = vst [vmem:[#allocation5 + $0x20] sm:$0xff] 0.0
          %871 = vst [vmem:[#allocation5 + $0x28] sm:$0xff] 0.0
          %872 = vst [vmem:[#allocation5 + $0x30] sm:$0xff] 0.0
          %873 = vst [vmem:[#allocation5 + $0x38] sm:$0xff] 0.0
          %874 = vst [vmem:[#allocation5 + $0x40] sm:$0xff] 0.0
          %875 = vst [vmem:[#allocation5 + $0x48] sm:$0xff] 0.0
          %876 = vst [vmem:[#allocation5 + $0x50] sm:$0xff] 0.0
          %877 = vst [vmem:[#allocation5 + $0x58] sm:$0xff] 0.0
          %878 = vst [vmem:[#allocation5 + $0x60] sm:$0xff] 0.0
          %879 = vst [vmem:[#allocation5 + $0x68] sm:$0xff] 0.0
          %880 = vst [vmem:[#allocation5 + $0x70] sm:$0xff] 0.0
          %881 = vst [vmem:[#allocation5 + $0x78] sm:$0xff] 0.0
        $region88: #{tpu_custom_call.1} parent=59 // pred_fallthru
          _
        %v882 = vld [vmem:[%s447] sm:$0xff]
        %v883 = vld [vmem:[%s447 + $0x8] sm:$0xff]
        %v884 = vld [vmem:[%s447 + $0x10] sm:$0xff]
        %v885 = vld [vmem:[%s447 + $0x18] sm:$0xff]
        %v886 = vld [vmem:[%s447 + $0x20] sm:$0xff]
        %v887 = vld [vmem:[%s447 + $0x28] sm:$0xff]
        %v888 = vld [vmem:[%s447 + $0x30] sm:$0xff]
        %v889 = vld [vmem:[%s447 + $0x38] sm:$0xff]
        %v890 = vld [vmem:[%s447 + $0x40] sm:$0xff]
        %v891 = vld [vmem:[%s447 + $0x48] sm:$0xff]
        %v892 = vld [vmem:[%s447 + $0x50] sm:$0xff]
        %v893 = vld [vmem:[%s447 + $0x58] sm:$0xff]
        %v894 = vld [vmem:[%s447 + $0x60] sm:$0xff]
        %v895 = vld [vmem:[%s447 + $0x68] sm:$0xff]
        %v896 = vld [vmem:[%s447 + $0x70] sm:$0xff]
        %v897 = vld [vmem:[%s447 + $0x78] sm:$0xff]
        %v898 = vpack.c.bf16 %v883, %v882
        %v899 = vpack.c.bf16 %v885, %v884
        %v900 = vpack.c.bf16 %v887, %v886
        %v901 = vpack.c.bf16 %v889, %v888
        %v902 = vpack.c.bf16 %v891, %v890
        %v903 = vpack.c.bf16 %v893, %v892
        %v904 = vpack.c.bf16 %v895, %v894
        %v905 = vpack.c.bf16 %v897, %v896
        %v906 = vld [vmem:[#allocation12] sm:$0xf]
        %v907 = vld [vmem:[#allocation12 + $0x4] sm:$0xf]
        %v908 = vld [vmem:[#allocation12 + $0x8] sm:$0xf]
        %v909 = vld [vmem:[#allocation12 + $0xc] sm:$0xf]
        %v910 = vld [vmem:[#allocation12 + $0x10] sm:$0xf]
        %v911 = vld [vmem:[#allocation12 + $0x14] sm:$0xf]
        %v912 = vld [vmem:[#allocation12 + $0x18] sm:$0xf]
        %v913 = vld [vmem:[#allocation12 + $0x1c] sm:$0xf]
        %v914 = vld [vmem:[#allocation12 + $0x20] sm:$0xf]
        %v915 = vld [vmem:[#allocation12 + $0x24] sm:$0xf]
        %v916 = vld [vmem:[#allocation12 + $0x28] sm:$0xf]
        %v917 = vld [vmem:[#allocation12 + $0x2c] sm:$0xf]
        %v918 = vld [vmem:[#allocation12 + $0x30] sm:$0xf]
        %v919 = vld [vmem:[#allocation12 + $0x34] sm:$0xf]
        %v920 = vld [vmem:[#allocation12 + $0x38] sm:$0xf]
        %v921 = vld [vmem:[#allocation12 + $0x3c] sm:$0xf]
        %v922 = vld [vmem:[%s5] sm:$0x1]
        %v924 = vlaneseq
        %v925 = vshrl.u32 %v924, 7
        %v926 = vsub.s32 0, %v925
        %v927 = vrot.slane %v922, %v926
        %v945 = vunpack.c.l.b16 %v906
        %v946 = vunpack.c.l.b16 %v907
        %v947 = vunpack.c.l.b16 %v908
        %v948 = vunpack.c.l.b16 %v909
        %v949 = vunpack.c.l.b16 %v910
        %v950 = vunpack.c.l.b16 %v911
        %v951 = vunpack.c.l.b16 %v912
        %v952 = vunpack.c.l.b16 %v913
        %v953 = vunpack.c.l.b16 %v914
        %v954 = vunpack.c.l.b16 %v915
        %v955 = vunpack.c.l.b16 %v916
        %v956 = vunpack.c.l.b16 %v917
        %v957 = vunpack.c.l.b16 %v918
        %v958 = vunpack.c.l.b16 %v919
        %v959 = vunpack.c.l.b16 %v920
        %v960 = vunpack.c.l.b16 %v921
        %v961 = vpack.c.b16 %v946, %v945
        %v962 = vpack.c.b16 %v948, %v947
        %v963 = vpack.c.b16 %v950, %v949
        %v964 = vpack.c.b16 %v952, %v951
        %v965 = vpack.c.b16 %v954, %v953
        %v966 = vpack.c.b16 %v956, %v955
        %v967 = vpack.c.b16 %v958, %v957
        %v968 = vpack.c.b16 %v960, %v959
        %977 = vmatprep.subr.bf16.mxu0 0
        %978 = vmatpush1.bf16.msra.mxu0 %v961
        %979 = vmatprep.subr.bf16.mxu0 0
        %980 = vmatpush1.bf16.msra.mxu0 %v962
        %981 = vmatprep.subr.bf16.mxu0 0
        %982 = vmatpush1.bf16.msra.mxu0 %v963
        %983 = vmatprep.subr.bf16.mxu0 0
        %984 = vmatpush1.bf16.msra.mxu0 %v964
        %985 = vmatprep.subr.bf16.mxu0 0
        %986 = vmatpush1.bf16.msra.mxu0 %v965
        %987 = vmatprep.subr.bf16.mxu0 0
        %988 = vmatpush1.bf16.msra.mxu0 %v966
        %989 = vmatprep.subr.bf16.mxu0 0
        %990 = vmatpush1.bf16.msra.mxu0 %v967
        %991 = vmatprep.subr.bf16.mxu0 0
        %992 = vmatpush1.bf16.msra.mxu0 %v968
        %993 = vmatprep.subr.bf16.mxu0 0
        %994 = vmatpush1.bf16.msra.mxu0 0
        %995 = vmatprep.subr.bf16.mxu0 0
        %996 = vmatpush1.bf16.msra.mxu0 0
        %997 = vmatprep.subr.bf16.mxu0 0
        %998 = vmatpush1.bf16.msra.mxu0 0
        %999 = vmatprep.subr.bf16.mxu0 0
        %1000 = vmatpush1.bf16.msra.mxu0 0
        %1001 = vmatprep.subr.bf16.mxu0 0
        %1002 = vmatpush1.bf16.msra.mxu0 0
        %1003 = vmatprep.subr.bf16.mxu0 0
        %1004 = vmatpush1.bf16.msra.mxu0 0
        %1005 = vmatprep.subr.bf16.mxu0 0
        %1006 = vmatpush1.bf16.msra.mxu0 0
        %1007 = vmatprep.subr.bf16.mxu0 0
        %1008 = vmatpush1.bf16.msra.mxu0 0
        %1009 = vmatprep.mubr.bf16.mxu0 0
        %1010 = vmatmul.mubr.bf16.gmra.mrb[0].mxu0 %v898
        %v1011 = vpop.f32.mrb[0].mxu0
        %v1012 = vadd.f32 %v927, %v1011
        %v1013 = vpop.f32.mrb[0].mxu0
        %v1014 = vpop.f32.mrb[0].mxu0
        %v1015 = vadd.f32 %v927, %v1014
        %v1016 = vpop.f32.mrb[0].mxu0
        %1017 = vmatprep.mubr.bf16.mxu0 0
        %1018 = vmatmul.mubr.bf16.gmra.mrb[0].mxu0 %v899
        %v1019 = vpop.f32.mrb[0].mxu0
        %v1020 = vadd.f32 %v927, %v1019
        %v1021 = vpop.f32.mrb[0].mxu0
        %v1022 = vpop.f32.mrb[0].mxu0
        %v1023 = vadd.f32 %v927, %v1022
        %v1024 = vpop.f32.mrb[0].mxu0
        %1025 = vmatprep.mubr.bf16.mxu0 0
        %1026 = vmatmul.mubr.bf16.gmra.mrb[0].mxu0 %v900
        %v1027 = vpop.f32.mrb[0].mxu0
        %v1028 = vadd.f32 %v927, %v1027
        %v1029 = vpop.f32.mrb[0].mxu0
        %v1030 = vpop.f32.mrb[0].mxu0
        %v1031 = vadd.f32 %v927, %v1030
        %v1032 = vpop.f32.mrb[0].mxu0
        %1033 = vmatprep.mubr.bf16.mxu0 0
        %1034 = vmatmul.mubr.bf16.gmra.mrb[0].mxu0 %v901
        %v1035 = vpop.f32.mrb[0].mxu0
        %v1036 = vadd.f32 %v927, %v1035
        %v1037 = vpop.f32.mrb[0].mxu0
        %v1038 = vpop.f32.mrb[0].mxu0
        %v1039 = vadd.f32 %v927, %v1038
        %v1040 = vpop.f32.mrb[0].mxu0
        %1041 = vmatprep.mubr.bf16.mxu0 0
        %1042 = vmatmul.mubr.bf16.gmra.mrb[0].mxu0 %v902
        %v1043 = vpop.f32.mrb[0].mxu0
        %v1044 = vadd.f32 %v927, %v1043
        %v1045 = vpop.f32.mrb[0].mxu0
        %v1046 = vpop.f32.mrb[0].mxu0
        %v1047 = vadd.f32 %v927, %v1046
        %v1048 = vpop.f32.mrb[0].mxu0
        %1049 = vmatprep.mubr.bf16.mxu0 0
        %1050 = vmatmul.mubr.bf16.gmra.mrb[0].mxu0 %v903
        %v1051 = vpop.f32.mrb[0].mxu0
        %v1052 = vadd.f32 %v927, %v1051
        %v1053 = vpop.f32.mrb[0].mxu0
        %v1054 = vpop.f32.mrb[0].mxu0
        %v1055 = vadd.f32 %v927, %v1054
        %v1056 = vpop.f32.mrb[0].mxu0
        %1057 = vmatprep.mubr.bf16.mxu0 0
        %1058 = vmatmul.mubr.bf16.gmra.mrb[0].mxu0 %v904
        %v1059 = vpop.f32.mrb[0].mxu0
        %v1060 = vadd.f32 %v927, %v1059
        %v1061 = vpop.f32.mrb[0].mxu0
        %v1062 = vpop.f32.mrb[0].mxu0
        %v1063 = vadd.f32 %v927, %v1062
        %v1064 = vpop.f32.mrb[0].mxu0
        %1065 = vmatprep.mubr.bf16.mxu0 0
        %1066 = vmatmul.mubr.bf16.gmra.mrb[0].mxu0 %v905
        %v1067 = vpop.f32.mrb[0].mxu0
        %v1068 = vadd.f32 %v927, %v1067
        %v1069 = vpop.f32.mrb[0].mxu0
        %v1070 = vpop.f32.mrb[0].mxu0
        %v1071 = vadd.f32 %v927, %v1070
        %v1072 = vpop.f32.mrb[0].mxu0
        %1073 = vdwg.mxu0
        %v1074 = vpack.c.bf16 %v1015, %v1012
        %v1075 = vpack.c.bf16 %v1023, %v1020
        %v1076 = vpack.c.bf16 %v1031, %v1028
        %v1077 = vpack.c.bf16 %v1039, %v1036
        %v1078 = vpack.c.bf16 %v1047, %v1044
        %v1079 = vpack.c.bf16 %v1055, %v1052
        %v1080 = vpack.c.bf16 %v1063, %v1060
        %v1081 = vpack.c.bf16 %v1071, %v1068
        %v1082 = vld [vmem:[#allocation14] sm:$0xf]
        %v1083 = vld [vmem:[#allocation14 + $0x4] sm:$0xf]
        %v1084 = vld [vmem:[#allocation14 + $0x8] sm:$0xf]
        %v1085 = vld [vmem:[#allocation14 + $0xc] sm:$0xf]
        %v1086 = vld [vmem:[#allocation14 + $0x10] sm:$0xf]
        %v1087 = vld [vmem:[#allocation14 + $0x14] sm:$0xf]
        %v1088 = vld [vmem:[#allocation14 + $0x18] sm:$0xf]
        %v1089 = vld [vmem:[#allocation14 + $0x1c] sm:$0xf]
        %v1090 = vld [vmem:[#allocation14 + $0x20] sm:$0xf]
        %v1091 = vld [vmem:[#allocation14 + $0x24] sm:$0xf]
        %v1092 = vld [vmem:[#allocation14 + $0x28] sm:$0xf]
        %v1093 = vld [vmem:[#allocation14 + $0x2c] sm:$0xf]
        %v1094 = vld [vmem:[#allocation14 + $0x30] sm:$0xf]
        %v1095 = vld [vmem:[#allocation14 + $0x34] sm:$0xf]
        %v1096 = vld [vmem:[#allocation14 + $0x38] sm:$0xf]
        %v1097 = vld [vmem:[#allocation14 + $0x3c] sm:$0xf]
        %v1098 = vld [vmem:[%s7] sm:$0x1]
        %v1100 = vlaneseq
        %v1101 = vshrl.u32 %v1100, 7
        %v1102 = vsub.s32 0, %v1101
        %v1103 = vrot.slane %v1098, %v1102
        %v1121 = vunpack.c.l.b16 %v1082
        %v1122 = vunpack.c.l.b16 %v1083
        %v1123 = vunpack.c.l.b16 %v1084
        %v1124 = vunpack.c.l.b16 %v1085
        %v1125 = vunpack.c.l.b16 %v1086
        %v1126 = vunpack.c.l.b16 %v1087
        %v1127 = vunpack.c.l.b16 %v1088
        %v1128 = vunpack.c.l.b16 %v1089
        %v1129 = vunpack.c.l.b16 %v1090
        %v1130 = vunpack.c.l.b16 %v1091
        %v1131 = vunpack.c.l.b16 %v1092
        %v1132 = vunpack.c.l.b16 %v1093
        %v1133 = vunpack.c.l.b16 %v1094
        %v1134 = vunpack.c.l.b16 %v1095
        %v1135 = vunpack.c.l.b16 %v1096
        %v1136 = vunpack.c.l.b16 %v1097
        %v1137 = vpack.c.b16 %v1122, %v1121
        %v1138 = vpack.c.b16 %v1124, %v1123
        %v1139 = vpack.c.b16 %v1126, %v1125
        %v1140 = vpack.c.b16 %v1128, %v1127
        %v1141 = vpack.c.b16 %v1130, %v1129
        %v1142 = vpack.c.b16 %v1132, %v1131
        %v1143 = vpack.c.b16 %v1134, %v1133
        %v1144 = vpack.c.b16 %v1136, %v1135
        %1153 = vmatprep.subr.bf16.mxu0 0
        %1154 = vmatpush1.bf16.msra.mxu0 %v1137
        %1155 = vmatprep.subr.bf16.mxu0 0
        %1156 = vmatpush1.bf16.msra.mxu0 %v1138
        %1157 = vmatprep.subr.bf16.mxu0 0
        %1158 = vmatpush1.bf16.msra.mxu0 %v1139
        %1159 = vmatprep.subr.bf16.mxu0 0
        %1160 = vmatpush1.bf16.msra.mxu0 %v1140
        %1161 = vmatprep.subr.bf16.mxu0 0
        %1162 = vmatpush1.bf16.msra.mxu0 %v1141
        %1163 = vmatprep.subr.bf16.mxu0 0
        %1164 = vmatpush1.bf16.msra.mxu0 %v1142
        %1165 = vmatprep.subr.bf16.mxu0 0
        %1166 = vmatpush1.bf16.msra.mxu0 %v1143
        %1167 = vmatprep.subr.bf16.mxu0 0
        %1168 = vmatpush1.bf16.msra.mxu0 %v1144
        %1169 = vmatprep.subr.bf16.mxu0 0
        %1170 = vmatpush1.bf16.msra.mxu0 0
        %1171 = vmatprep.subr.bf16.mxu0 0
        %1172 = vmatpush1.bf16.msra.mxu0 0
        %1173 = vmatprep.subr.bf16.mxu0 0
        %1174 = vmatpush1.bf16.msra.mxu0 0
        %1175 = vmatprep.subr.bf16.mxu0 0
        %1176 = vmatpush1.bf16.msra.mxu0 0
        %1177 = vmatprep.subr.bf16.mxu0 0
        %1178 = vmatpush1.bf16.msra.mxu0 0
        %1179 = vmatprep.subr.bf16.mxu0 0
        %1180 = vmatpush1.bf16.msra.mxu0 0
        %1181 = vmatprep.subr.bf16.mxu0 0
        %1182 = vmatpush1.bf16.msra.mxu0 0
        %1183 = vmatprep.subr.bf16.mxu0 0
        %1184 = vmatpush1.bf16.msra.mxu0 0
        %1185 = vmatprep.mubr.bf16.mxu0 0
        %1186 = vmatmul.mubr.bf16.gmra.mrb[0].mxu0 %v898
        %v1187 = vpop.f32.mrb[0].mxu0
        %v1188 = vadd.f32 %v1103, %v1187
        %v1189 = vpop.f32.mrb[0].mxu0
        %v1190 = vpop.f32.mrb[0].mxu0
        %v1191 = vadd.f32 %v1103, %v1190
        %v1192 = vpop.f32.mrb[0].mxu0
        %1193 = vmatprep.mubr.bf16.mxu0 0
        %1194 = vmatmul.mubr.bf16.gmra.mrb[0].mxu0 %v899
        %v1195 = vpop.f32.mrb[0].mxu0
        %v1196 = vadd.f32 %v1103, %v1195
        %v1197 = vpop.f32.mrb[0].mxu0
        %v1198 = vpop.f32.mrb[0].mxu0
        %v1199 = vadd.f32 %v1103, %v1198
        %v1200 = vpop.f32.mrb[0].mxu0
        %1201 = vmatprep.mubr.bf16.mxu0 0
        %1202 = vmatmul.mubr.bf16.gmra.mrb[0].mxu0 %v900
        %v1203 = vpop.f32.mrb[0].mxu0
        %v1204 = vadd.f32 %v1103, %v1203
        %v1205 = vpop.f32.mrb[0].mxu0
        %v1206 = vpop.f32.mrb[0].mxu0
        %v1207 = vadd.f32 %v1103, %v1206
        %v1208 = vpop.f32.mrb[0].mxu0
        %1209 = vmatprep.mubr.bf16.mxu0 0
        %1210 = vmatmul.mubr.bf16.gmra.mrb[0].mxu0 %v901
        %v1211 = vpop.f32.mrb[0].mxu0
        %v1212 = vadd.f32 %v1103, %v1211
        %v1213 = vpop.f32.mrb[0].mxu0
        %v1214 = vpop.f32.mrb[0].mxu0
        %v1215 = vadd.f32 %v1103, %v1214
        %v1216 = vpop.f32.mrb[0].mxu0
        %1217 = vmatprep.mubr.bf16.mxu0 0
        %1218 = vmatmul.mubr.bf16.gmra.mrb[0].mxu0 %v902
        %v1219 = vpop.f32.mrb[0].mxu0
        %v1220 = vadd.f32 %v1103, %v1219
        %v1221 = vpop.f32.mrb[0].mxu0
        %v1222 = vpop.f32.mrb[0].mxu0
        %v1223 = vadd.f32 %v1103, %v1222
        %v1224 = vpop.f32.mrb[0].mxu0
        %1225 = vmatprep.mubr.bf16.mxu0 0
        %1226 = vmatmul.mubr.bf16.gmra.mrb[0].mxu0 %v903
        %v1227 = vpop.f32.mrb[0].mxu0
        %v1228 = vadd.f32 %v1103, %v1227
        %v1229 = vpop.f32.mrb[0].mxu0
        %v1230 = vpop.f32.mrb[0].mxu0
        %v1231 = vadd.f32 %v1103, %v1230
        %v1232 = vpop.f32.mrb[0].mxu0
        %1233 = vmatprep.mubr.bf16.mxu0 0
        %1234 = vmatmul.mubr.bf16.gmra.mrb[0].mxu0 %v904
        %v1235 = vpop.f32.mrb[0].mxu0
        %v1236 = vadd.f32 %v1103, %v1235
        %v1237 = vpop.f32.mrb[0].mxu0
        %v1238 = vpop.f32.mrb[0].mxu0
        %v1239 = vadd.f32 %v1103, %v1238
        %v1240 = vpop.f32.mrb[0].mxu0
        %1241 = vmatprep.mubr.bf16.mxu0 0
        %1242 = vmatmul.mubr.bf16.gmra.mrb[0].mxu0 %v905
        %v1243 = vpop.f32.mrb[0].mxu0
        %v1244 = vadd.f32 %v1103, %v1243
        %v1245 = vpop.f32.mrb[0].mxu0
        %v1246 = vpop.f32.mrb[0].mxu0
        %v1247 = vadd.f32 %v1103, %v1246
        %v1248 = vpop.f32.mrb[0].mxu0
        %1249 = vdwg.mxu0
        %v1250 = vpack.c.bf16 %v1191, %v1188
        %v1251 = vpack.c.bf16 %v1199, %v1196
        %v1252 = vpack.c.bf16 %v1207, %v1204
        %v1253 = vpack.c.bf16 %v1215, %v1212
        %v1254 = vpack.c.bf16 %v1223, %v1220
        %v1255 = vpack.c.bf16 %v1231, %v1228
        %v1256 = vpack.c.bf16 %v1239, %v1236
        %v1257 = vpack.c.bf16 %v1247, %v1244
        %v1258 = vld [vmem:[#allocation2] sm:$0xff]
        %v1259 = vld [vmem:[#allocation2 + $0x8] sm:$0xff]
        %v1260 = vld [vmem:[#allocation2 + $0x10] sm:$0xff]
        %v1261 = vld [vmem:[#allocation2 + $0x18] sm:$0xff]
        %v1262 = vld [vmem:[#allocation2 + $0x20] sm:$0xff]
        %v1263 = vld [vmem:[#allocation2 + $0x28] sm:$0xff]
        %v1264 = vld [vmem:[#allocation2 + $0x30] sm:$0xff]
        %v1265 = vld [vmem:[#allocation2 + $0x38] sm:$0xff]
        %vm1266 = vcmask 261120
        %v1268 = vsel %vm1266, %v1258, 0
        %v1271 = vsel %vm1266, %v1259, 0
        %v1274 = vsel %vm1266, %v1260, 0
        %v1277 = vsel %vm1266, %v1261, 0
        %v1280 = vsel %vm1266, %v1262, 0
        %v1283 = vsel %vm1266, %v1263, 0
        %v1286 = vsel %vm1266, %v1264, 0
        %v1289 = vsel %vm1266, %v1265, 0
        %v1292 = vsel %vm1266, %v1074, 0
        %v1295 = vsel %vm1266, %v1075, 0
        %v1298 = vsel %vm1266, %v1076, 0
        %v1301 = vsel %vm1266, %v1077, 0
        %v1304 = vsel %vm1266, %v1078, 0
        %v1307 = vsel %vm1266, %v1079, 0
        %v1310 = vsel %vm1266, %v1080, 0
        %v1313 = vsel %vm1266, %v1081, 0
        %1315 = vmatprep.subr.bf16.mxu0 0
        %1316 = vmatpush1.bf16.xpose.msra.mxu0 %v1292
        %1317 = vmatprep.subr.bf16.mxu0 0
        %1318 = vmatpush1.bf16.xpose.msra.mxu0 %v1295
        %1319 = vmatprep.subr.bf16.mxu0 0
        %1320 = vmatpush1.bf16.xpose.msra.mxu0 %v1298
        %1321 = vmatprep.subr.bf16.mxu0 0
        %1322 = vmatpush1.bf16.xpose.msra.mxu0 %v1301
        %1323 = vmatprep.subr.bf16.mxu0 0
        %1324 = vmatpush1.bf16.xpose.msra.mxu0 %v1304
        %1325 = vmatprep.subr.bf16.mxu0 0
        %1326 = vmatpush1.bf16.xpose.msra.mxu0 %v1307
        %1327 = vmatprep.subr.bf16.mxu0 0
        %1328 = vmatpush1.bf16.xpose.msra.mxu0 %v1310
        %1329 = vmatprep.subr.bf16.mxu0 0
        %1330 = vmatpush1.bf16.xpose.msra.mxu0 %v1313
        %1331 = vmatprep.subr.bf16.mxu0 0
        %1332 = vmatpush1.bf16.xpose.msra.mxu0 0
        %1333 = vmatprep.subr.bf16.mxu0 0
        %1334 = vmatpush1.bf16.xpose.msra.mxu0 0
        %1335 = vmatprep.subr.bf16.mxu0 0
        %1336 = vmatpush1.bf16.xpose.msra.mxu0 0
        %1337 = vmatprep.subr.bf16.mxu0 0
        %1338 = vmatpush1.bf16.xpose.msra.mxu0 0
        %1339 = vmatprep.subr.bf16.mxu0 0
        %1340 = vmatpush1.bf16.xpose.msra.mxu0 0
        %1341 = vmatprep.subr.bf16.mxu0 0
        %1342 = vmatpush1.bf16.xpose.msra.mxu0 0
        %1343 = vmatprep.subr.bf16.mxu0 0
        %1344 = vmatpush1.bf16.xpose.msra.mxu0 0
        %1345 = vmatprep.subr.bf16.mxu0 0
        %1346 = vmatpush1.bf16.xpose.msra.mxu0 0
        %1347 = vmatprep.mubr.bf16.mxu0 0
        %1348 = vmatmul.mubr.bf16.gmra.mrb[0].mxu0 %v1268
        %v1349 = vpop.f32.mrb[0].mxu0
        %v1350 = vadd.f32 0.0, %v1349
        %v1351 = vpop.f32.mrb[0].mxu0
        %v1352 = vpop.f32.mrb[0].mxu0
        %v1353 = vadd.f32 0.0, %v1352
        %v1354 = vpop.f32.mrb[0].mxu0
        %1355 = vmatprep.mubr.bf16.mxu0 0
        %1356 = vmatmul.mubr.bf16.gmra.mrb[0].mxu0 %v1271
        %v1357 = vpop.f32.mrb[0].mxu0
        %v1358 = vadd.f32 0.0, %v1357
        %v1359 = vpop.f32.mrb[0].mxu0
        %v1360 = vpop.f32.mrb[0].mxu0
        %v1361 = vadd.f32 0.0, %v1360
        %v1362 = vpop.f32.mrb[0].mxu0
        %1363 = vmatprep.mubr.bf16.mxu0 0
        %1364 = vmatmul.mubr.bf16.gmra.mrb[0].mxu0 %v1274
        %v1365 = vpop.f32.mrb[0].mxu0
        %v1366 = vadd.f32 0.0, %v1365
        %v1367 = vpop.f32.mrb[0].mxu0
        %v1368 = vpop.f32.mrb[0].mxu0
        %v1369 = vadd.f32 0.0, %v1368
        %v1370 = vpop.f32.mrb[0].mxu0
        %1371 = vmatprep.mubr.bf16.mxu0 0
        %1372 = vmatmul.mubr.bf16.gmra.mrb[0].mxu0 %v1277
        %v1373 = vpop.f32.mrb[0].mxu0
        %v1374 = vadd.f32 0.0, %v1373
        %v1375 = vpop.f32.mrb[0].mxu0
        %v1376 = vpop.f32.mrb[0].mxu0
        %v1377 = vadd.f32 0.0, %v1376
        %v1378 = vpop.f32.mrb[0].mxu0
        %1379 = vmatprep.mubr.bf16.mxu0 0
        %1380 = vmatmul.mubr.bf16.gmra.mrb[0].mxu0 %v1280
        %v1381 = vpop.f32.mrb[0].mxu0
        %v1382 = vadd.f32 0.0, %v1381
        %v1383 = vpop.f32.mrb[0].mxu0
        %v1384 = vpop.f32.mrb[0].mxu0
        %v1385 = vadd.f32 0.0, %v1384
        %v1386 = vpop.f32.mrb[0].mxu0
        %1387 = vmatprep.mubr.bf16.mxu0 0
        %1388 = vmatmul.mubr.bf16.gmra.mrb[0].mxu0 %v1283
        %v1389 = vpop.f32.mrb[0].mxu0
        %v1390 = vadd.f32 0.0, %v1389
        %v1391 = vpop.f32.mrb[0].mxu0
        %v1392 = vpop.f32.mrb[0].mxu0
        %v1393 = vadd.f32 0.0, %v1392
        %v1394 = vpop.f32.mrb[0].mxu0
        %1395 = vmatprep.mubr.bf16.mxu0 0
        %1396 = vmatmul.mubr.bf16.gmra.mrb[0].mxu0 %v1286
        %v1397 = vpop.f32.mrb[0].mxu0
        %v1398 = vadd.f32 0.0, %v1397
        %v1399 = vpop.f32.mrb[0].mxu0
        %v1400 = vpop.f32.mrb[0].mxu0
        %v1401 = vadd.f32 0.0, %v1400
        %v1402 = vpop.f32.mrb[0].mxu0
        %1403 = vmatprep.mubr.bf16.mxu0 0
        %1404 = vmatmul.mubr.bf16.gmra.mrb[0].mxu0 %v1289
        %v1405 = vpop.f32.mrb[0].mxu0
        %v1406 = vadd.f32 0.0, %v1405
        %v1407 = vpop.f32.mrb[0].mxu0
        %v1408 = vpop.f32.mrb[0].mxu0
        %v1409 = vadd.f32 0.0, %v1408
        %v1410 = vpop.f32.mrb[0].mxu0
        %1411 = vdwg.mxu0
        %v1412 = vld [vmem:[#allocation3] sm:$0xff]
        %v1413 = vld [vmem:[#allocation3 + $0x8] sm:$0xff]
        %v1414 = vld [vmem:[#allocation3 + $0x10] sm:$0xff]
        %v1415 = vld [vmem:[#allocation3 + $0x18] sm:$0xff]
        %v1416 = vld [vmem:[#allocation3 + $0x20] sm:$0xff]
        %v1417 = vld [vmem:[#allocation3 + $0x28] sm:$0xff]
        %v1418 = vld [vmem:[#allocation3 + $0x30] sm:$0xff]
        %v1419 = vld [vmem:[#allocation3 + $0x38] sm:$0xff]
        %v1420 = vld [vmem:[#allocation3 + $0x40] sm:$0xff]
        %v1421 = vld [vmem:[#allocation3 + $0x48] sm:$0xff]
        %v1422 = vld [vmem:[#allocation3 + $0x50] sm:$0xff]
        %v1423 = vld [vmem:[#allocation3 + $0x58] sm:$0xff]
        %v1424 = vld [vmem:[#allocation3 + $0x60] sm:$0xff]
        %v1425 = vld [vmem:[#allocation3 + $0x68] sm:$0xff]
        %v1426 = vld [vmem:[#allocation3 + $0x70] sm:$0xff]
        %v1427 = vld [vmem:[#allocation3 + $0x78] sm:$0xff]
        %1428 = vmax.xlane.f32.xlu0 %v1350
        %v1429 = vpop.xlane.xlu0 %1428
        %1430 = vmax.xlane.f32.xlu0 %v1353
        %v1431 = vpop.xlane.xlu0 %1430
        %1432 = vmax.xlane.f32.xlu0 %v1358
        %v1433 = vpop.xlane.xlu0 %1432
        %1434 = vmax.xlane.f32.xlu0 %v1361
        %v1435 = vpop.xlane.xlu0 %1434
        %1436 = vmax.xlane.f32.xlu0 %v1366
        %v1437 = vpop.xlane.xlu0 %1436
        %1438 = vmax.xlane.f32.xlu0 %v1369
        %v1439 = vpop.xlane.xlu0 %1438
        %1440 = vmax.xlane.f32.xlu0 %v1374
        %v1441 = vpop.xlane.xlu0 %1440
        %1442 = vmax.xlane.f32.xlu0 %v1377
        %v1443 = vpop.xlane.xlu0 %1442
        %1444 = vmax.xlane.f32.xlu0 %v1382
        %v1445 = vpop.xlane.xlu0 %1444
        %1446 = vmax.xlane.f32.xlu0 %v1385
        %v1447 = vpop.xlane.xlu0 %1446
        %1448 = vmax.xlane.f32.xlu0 %v1390
        %v1449 = vpop.xlane.xlu0 %1448
        %1450 = vmax.xlane.f32.xlu0 %v1393
        %v1451 = vpop.xlane.xlu0 %1450
        %1452 = vmax.xlane.f32.xlu0 %v1398
        %v1453 = vpop.xlane.xlu0 %1452
        %1454 = vmax.xlane.f32.xlu0 %v1401
        %v1455 = vpop.xlane.xlu0 %1454
        %1456 = vmax.xlane.f32.xlu0 %v1406
        %v1457 = vpop.xlane.xlu0 %1456
        %1458 = vmax.xlane.f32.xlu0 %v1409
        %v1459 = vpop.xlane.xlu0 %1458
        %v1460 = vmax.f32 %v1412, %v1429
        %v1461 = vmax.f32 %v1413, %v1431
        %v1462 = vmax.f32 %v1414, %v1433
        %v1463 = vmax.f32 %v1415, %v1435
        %v1464 = vmax.f32 %v1416, %v1437
        %v1465 = vmax.f32 %v1417, %v1439
        %v1466 = vmax.f32 %v1418, %v1441
        %v1467 = vmax.f32 %v1419, %v1443
        %v1468 = vmax.f32 %v1420, %v1445
        %v1469 = vmax.f32 %v1421, %v1447
        %v1470 = vmax.f32 %v1422, %v1449
        %v1471 = vmax.f32 %v1423, %v1451
        %v1472 = vmax.f32 %v1424, %v1453
        %v1473 = vmax.f32 %v1425, %v1455
        %v1474 = vmax.f32 %v1426, %v1457
        %v1475 = vmax.f32 %v1427, %v1459
        %v1476 = vsub.f32 %v1412, %v1460
        %v1477 = vsub.f32 %v1413, %v1461
        %v1478 = vsub.f32 %v1414, %v1462
        %v1479 = vsub.f32 %v1415, %v1463
        %v1480 = vsub.f32 %v1416, %v1464
        %v1481 = vsub.f32 %v1417, %v1465
        %v1482 = vsub.f32 %v1418, %v1466
        %v1483 = vsub.f32 %v1419, %v1467
        %v1484 = vsub.f32 %v1420, %v1468
        %v1485 = vsub.f32 %v1421, %v1469
        %v1486 = vsub.f32 %v1422, %v1470
        %v1487 = vsub.f32 %v1423, %v1471
        %v1488 = vsub.f32 %v1424, %v1472
        %v1489 = vsub.f32 %v1425, %v1473
        %v1490 = vsub.f32 %v1426, %v1474
        %v1491 = vsub.f32 %v1427, %v1475
        %v1492 = vmul.f32 %v1476, 1.442695
        %v1493 = vpow.pop %v1492
        %v1494 = vmul.f32 %v1477, 1.442695
        %v1495 = vpow.pop %v1494
        %v1496 = vmul.f32 %v1478, 1.442695
        %v1497 = vpow.pop %v1496
        %v1498 = vmul.f32 %v1479, 1.442695
        %v1499 = vpow.pop %v1498
        %v1500 = vmul.f32 %v1480, 1.442695
        %v1501 = vpow.pop %v1500
        %v1502 = vmul.f32 %v1481, 1.442695
        %v1503 = vpow.pop %v1502
        %v1504 = vmul.f32 %v1482, 1.442695
        %v1505 = vpow.pop %v1504
        %v1506 = vmul.f32 %v1483, 1.442695
        %v1507 = vpow.pop %v1506
        %v1508 = vmul.f32 %v1484, 1.442695
        %v1509 = vpow.pop %v1508
        %v1510 = vmul.f32 %v1485, 1.442695
        %v1511 = vpow.pop %v1510
        %v1512 = vmul.f32 %v1486, 1.442695
        %v1513 = vpow.pop %v1512
        %v1514 = vmul.f32 %v1487, 1.442695
        %v1515 = vpow.pop %v1514
        %v1516 = vmul.f32 %v1488, 1.442695
        %v1517 = vpow.pop %v1516
        %v1518 = vmul.f32 %v1489, 1.442695
        %v1519 = vpow.pop %v1518
        %v1520 = vmul.f32 %v1490, 1.442695
        %v1521 = vpow.pop %v1520
        %v1522 = vmul.f32 %v1491, 1.442695
        %v1523 = vpow.pop %v1522
        %1525 = vset.pattern.permute.xlu0 0
        %1526 = vperm.xlu0 %1525, %v1460
        %v1527 = vpop.permute.xlu0 %1526
        %1530 = vset.pattern.permute.xlu0 0
        %1531 = vperm.xlu0 %1530, %v1461
        %v1532 = vpop.permute.xlu0 %1531
        %1535 = vset.pattern.permute.xlu0 0
        %1536 = vperm.xlu0 %1535, %v1462
        %v1537 = vpop.permute.xlu0 %1536
        %1540 = vset.pattern.permute.xlu0 0
        %1541 = vperm.xlu0 %1540, %v1463
        %v1542 = vpop.permute.xlu0 %1541
        %1545 = vset.pattern.permute.xlu0 0
        %1546 = vperm.xlu0 %1545, %v1464
        %v1547 = vpop.permute.xlu0 %1546
        %1550 = vset.pattern.permute.xlu0 0
        %1551 = vperm.xlu0 %1550, %v1465
        %v1552 = vpop.permute.xlu0 %1551
        %1555 = vset.pattern.permute.xlu0 0
        %1556 = vperm.xlu0 %1555, %v1466
        %v1557 = vpop.permute.xlu0 %1556
        %1560 = vset.pattern.permute.xlu0 0
        %1561 = vperm.xlu0 %1560, %v1467
        %v1562 = vpop.permute.xlu0 %1561
        %1565 = vset.pattern.permute.xlu0 0
        %1566 = vperm.xlu0 %1565, %v1468
        %v1567 = vpop.permute.xlu0 %1566
        %1570 = vset.pattern.permute.xlu0 0
        %1571 = vperm.xlu0 %1570, %v1469
        %v1572 = vpop.permute.xlu0 %1571
        %1575 = vset.pattern.permute.xlu0 0
        %1576 = vperm.xlu0 %1575, %v1470
        %v1577 = vpop.permute.xlu0 %1576
        %1580 = vset.pattern.permute.xlu0 0
        %1581 = vperm.xlu0 %1580, %v1471
        %v1582 = vpop.permute.xlu0 %1581
        %1585 = vset.pattern.permute.xlu0 0
        %1586 = vperm.xlu0 %1585, %v1472
        %v1587 = vpop.permute.xlu0 %1586
        %1590 = vset.pattern.permute.xlu0 0
        %1591 = vperm.xlu0 %1590, %v1473
        %v1592 = vpop.permute.xlu0 %1591
        %1595 = vset.pattern.permute.xlu0 0
        %1596 = vperm.xlu0 %1595, %v1474
        %v1597 = vpop.permute.xlu0 %1596
        %1600 = vset.pattern.permute.xlu0 0
        %1601 = vperm.xlu0 %1600, %v1475
        %v1602 = vpop.permute.xlu0 %1601
        %v1604 = vsub.f32 %v1350, %v1527
        %v1605 = vsub.f32 %v1353, %v1532
        %v1606 = vsub.f32 %v1358, %v1537
        %v1607 = vsub.f32 %v1361, %v1542
        %v1608 = vsub.f32 %v1366, %v1547
        %v1609 = vsub.f32 %v1369, %v1552
        %v1610 = vsub.f32 %v1374, %v1557
        %v1611 = vsub.f32 %v1377, %v1562
        %v1612 = vsub.f32 %v1382, %v1567
        %v1613 = vsub.f32 %v1385, %v1572
        %v1614 = vsub.f32 %v1390, %v1577
        %v1615 = vsub.f32 %v1393, %v1582
        %v1616 = vsub.f32 %v1398, %v1587
        %v1617 = vsub.f32 %v1401, %v1592
        %v1618 = vsub.f32 %v1406, %v1597
        %v1619 = vsub.f32 %v1409, %v1602
        %v1620 = vmul.f32 %v1604, 1.442695
        %v1621 = vpow.pop %v1620
        %v1622 = vmul.f32 %v1605, 1.442695
        %v1623 = vpow.pop %v1622
        %v1624 = vmul.f32 %v1606, 1.442695
        %v1625 = vpow.pop %v1624
        %v1626 = vmul.f32 %v1607, 1.442695
        %v1627 = vpow.pop %v1626
        %v1628 = vmul.f32 %v1608, 1.442695
        %v1629 = vpow.pop %v1628
        %v1630 = vmul.f32 %v1609, 1.442695
        %v1631 = vpow.pop %v1630
        %v1632 = vmul.f32 %v1610, 1.442695
        %v1633 = vpow.pop %v1632
        %v1634 = vmul.f32 %v1611, 1.442695
        %v1635 = vpow.pop %v1634
        %v1636 = vmul.f32 %v1612, 1.442695
        %v1637 = vpow.pop %v1636
        %v1638 = vmul.f32 %v1613, 1.442695
        %v1639 = vpow.pop %v1638
        %v1640 = vmul.f32 %v1614, 1.442695
        %v1641 = vpow.pop %v1640
        %v1642 = vmul.f32 %v1615, 1.442695
        %v1643 = vpow.pop %v1642
        %v1644 = vmul.f32 %v1616, 1.442695
        %v1645 = vpow.pop %v1644
        %v1646 = vmul.f32 %v1617, 1.442695
        %v1647 = vpow.pop %v1646
        %v1648 = vmul.f32 %v1618, 1.442695
        %v1649 = vpow.pop %v1648
        %v1650 = vmul.f32 %v1619, 1.442695
        %v1651 = vpow.pop %v1650
        %v1652 = vld [vmem:[#allocation4] sm:$0xff]
        %v1653 = vld [vmem:[#allocation4 + $0x8] sm:$0xff]
        %v1654 = vld [vmem:[#allocation4 + $0x10] sm:$0xff]
        %v1655 = vld [vmem:[#allocation4 + $0x18] sm:$0xff]
        %v1656 = vld [vmem:[#allocation4 + $0x20] sm:$0xff]
        %v1657 = vld [vmem:[#allocation4 + $0x28] sm:$0xff]
        %v1658 = vld [vmem:[#allocation4 + $0x30] sm:$0xff]
        %v1659 = vld [vmem:[#allocation4 + $0x38] sm:$0xff]
        %v1660 = vld [vmem:[#allocation4 + $0x40] sm:$0xff]
        %v1661 = vld [vmem:[#allocation4 + $0x48] sm:$0xff]
        %v1662 = vld [vmem:[#allocation4 + $0x50] sm:$0xff]
        %v1663 = vld [vmem:[#allocation4 + $0x58] sm:$0xff]
        %v1664 = vld [vmem:[#allocation4 + $0x60] sm:$0xff]
        %v1665 = vld [vmem:[#allocation4 + $0x68] sm:$0xff]
        %v1666 = vld [vmem:[#allocation4 + $0x70] sm:$0xff]
        %v1667 = vld [vmem:[#allocation4 + $0x78] sm:$0xff]
        %v1668 = vmul.f32 %v1493, %v1652
        %v1669 = vmul.f32 %v1495, %v1653
        %v1670 = vmul.f32 %v1497, %v1654
        %v1671 = vmul.f32 %v1499, %v1655
        %v1672 = vmul.f32 %v1501, %v1656
        %v1673 = vmul.f32 %v1503, %v1657
        %v1674 = vmul.f32 %v1505, %v1658
        %v1675 = vmul.f32 %v1507, %v1659
        %v1676 = vmul.f32 %v1509, %v1660
        %v1677 = vmul.f32 %v1511, %v1661
        %v1678 = vmul.f32 %v1513, %v1662
        %v1679 = vmul.f32 %v1515, %v1663
        %v1680 = vmul.f32 %v1517, %v1664
        %v1681 = vmul.f32 %v1519, %v1665
        %v1682 = vmul.f32 %v1521, %v1666
        %v1683 = vmul.f32 %v1523, %v1667
        %1684 = vadd.xlane.f32.xlu0 %v1621
        %v1685 = vpop.xlane.xlu0 %1684
        %1686 = vadd.xlane.f32.xlu0 %v1623
        %v1687 = vpop.xlane.xlu0 %1686
        %1688 = vadd.xlane.f32.xlu0 %v1625
        %v1689 = vpop.xlane.xlu0 %1688
        %1690 = vadd.xlane.f32.xlu0 %v1627
        %v1691 = vpop.xlane.xlu0 %1690
        %1692 = vadd.xlane.f32.xlu0 %v1629
        %v1693 = vpop.xlane.xlu0 %1692
        %1694 = vadd.xlane.f32.xlu0 %v1631
        %v1695 = vpop.xlane.xlu0 %1694
        %1696 = vadd.xlane.f32.xlu0 %v1633
        %v1697 = vpop.xlane.xlu0 %1696
        %1698 = vadd.xlane.f32.xlu0 %v1635
        %v1699 = vpop.xlane.xlu0 %1698
        %1700 = vadd.xlane.f32.xlu0 %v1637
        %v1701 = vpop.xlane.xlu0 %1700
        %1702 = vadd.xlane.f32.xlu0 %v1639
        %v1703 = vpop.xlane.xlu0 %1702
        %1704 = vadd.xlane.f32.xlu0 %v1641
        %v1705 = vpop.xlane.xlu0 %1704
        %1706 = vadd.xlane.f32.xlu0 %v1643
        %v1707 = vpop.xlane.xlu0 %1706
        %1708 = vadd.xlane.f32.xlu0 %v1645
        %v1709 = vpop.xlane.xlu0 %1708
        %1710 = vadd.xlane.f32.xlu0 %v1647
        %v1711 = vpop.xlane.xlu0 %1710
        %1712 = vadd.xlane.f32.xlu0 %v1649
        %v1713 = vpop.xlane.xlu0 %1712
        %1714 = vadd.xlane.f32.xlu0 %v1651
        %v1715 = vpop.xlane.xlu0 %1714
        %v1716 = vadd.f32 %v1668, %v1685
        %v1717 = vadd.f32 %v1669, %v1687
        %v1718 = vadd.f32 %v1670, %v1689
        %v1719 = vadd.f32 %v1671, %v1691
        %v1720 = vadd.f32 %v1672, %v1693
        %v1721 = vadd.f32 %v1673, %v1695
        %v1722 = vadd.f32 %v1674, %v1697
        %v1723 = vadd.f32 %v1675, %v1699
        %v1724 = vadd.f32 %v1676, %v1701
        %v1725 = vadd.f32 %v1677, %v1703
        %v1726 = vadd.f32 %v1678, %v1705
        %v1727 = vadd.f32 %v1679, %v1707
        %v1728 = vadd.f32 %v1680, %v1709
        %v1729 = vadd.f32 %v1681, %v1711
        %v1730 = vadd.f32 %v1682, %v1713
        %v1731 = vadd.f32 %v1683, %v1715
        %vm1732 = vcmask 7168
        %1733 = vst.msk [vmem:[#allocation4] sm:$0xff] %vm1732, %v1716
        %1734 = vst.msk [vmem:[#allocation4 + $0x8] sm:$0xff] %vm1732, %v1717
        %1735 = vst.msk [vmem:[#allocation4 + $0x10] sm:$0xff] %vm1732, %v1718
        %1736 = vst.msk [vmem:[#allocation4 + $0x18] sm:$0xff] %vm1732, %v1719
        %1737 = vst.msk [vmem:[#allocation4 + $0x20] sm:$0xff] %vm1732, %v1720
        %1738 = vst.msk [vmem:[#allocation4 + $0x28] sm:$0xff] %vm1732, %v1721
        %1739 = vst.msk [vmem:[#allocation4 + $0x30] sm:$0xff] %vm1732, %v1722
        %1740 = vst.msk [vmem:[#allocation4 + $0x38] sm:$0xff] %vm1732, %v1723
        %1741 = vst.msk [vmem:[#allocation4 + $0x40] sm:$0xff] %vm1732, %v1724
        %1742 = vst.msk [vmem:[#allocation4 + $0x48] sm:$0xff] %vm1732, %v1725
        %1743 = vst.msk [vmem:[#allocation4 + $0x50] sm:$0xff] %vm1732, %v1726
        %1744 = vst.msk [vmem:[#allocation4 + $0x58] sm:$0xff] %vm1732, %v1727
        %1745 = vst.msk [vmem:[#allocation4 + $0x60] sm:$0xff] %vm1732, %v1728
        %1746 = vst.msk [vmem:[#allocation4 + $0x68] sm:$0xff] %vm1732, %v1729
        %1747 = vst.msk [vmem:[#allocation4 + $0x70] sm:$0xff] %vm1732, %v1730
        %1748 = vst.msk [vmem:[#allocation4 + $0x78] sm:$0xff] %vm1732, %v1731
        %v1749 = vld [vmem:[#allocation5] sm:$0xff]
        %v1750 = vld [vmem:[#allocation5 + $0x8] sm:$0xff]
        %v1751 = vld [vmem:[#allocation5 + $0x10] sm:$0xff]
        %v1752 = vld [vmem:[#allocation5 + $0x18] sm:$0xff]
        %v1753 = vld [vmem:[#allocation5 + $0x20] sm:$0xff]
        %v1754 = vld [vmem:[#allocation5 + $0x28] sm:$0xff]
        %v1755 = vld [vmem:[#allocation5 + $0x30] sm:$0xff]
        %v1756 = vld [vmem:[#allocation5 + $0x38] sm:$0xff]
        %v1757 = vld [vmem:[#allocation5 + $0x40] sm:$0xff]
        %v1758 = vld [vmem:[#allocation5 + $0x48] sm:$0xff]
        %v1759 = vld [vmem:[#allocation5 + $0x50] sm:$0xff]
        %v1760 = vld [vmem:[#allocation5 + $0x58] sm:$0xff]
        %v1761 = vld [vmem:[#allocation5 + $0x60] sm:$0xff]
        %v1762 = vld [vmem:[#allocation5 + $0x68] sm:$0xff]
        %v1763 = vld [vmem:[#allocation5 + $0x70] sm:$0xff]
        %v1764 = vld [vmem:[#allocation5 + $0x78] sm:$0xff]
        %1766 = vset.pattern.permute.xlu0 0
        %1767 = vperm.xlu0 %1766, %v1493
        %v1768 = vpop.permute.xlu0 %1767
        %1771 = vset.pattern.permute.xlu0 0
        %1772 = vperm.xlu0 %1771, %v1495
        %v1773 = vpop.permute.xlu0 %1772
        %1776 = vset.pattern.permute.xlu0 0
        %1777 = vperm.xlu0 %1776, %v1497
        %v1778 = vpop.permute.xlu0 %1777
        %1781 = vset.pattern.permute.xlu0 0
        %1782 = vperm.xlu0 %1781, %v1499
        %v1783 = vpop.permute.xlu0 %1782
        %1786 = vset.pattern.permute.xlu0 0
        %1787 = vperm.xlu0 %1786, %v1501
        %v1788 = vpop.permute.xlu0 %1787
        %1791 = vset.pattern.permute.xlu0 0
        %1792 = vperm.xlu0 %1791, %v1503
        %v1793 = vpop.permute.xlu0 %1792
        %1796 = vset.pattern.permute.xlu0 0
        %1797 = vperm.xlu0 %1796, %v1505
        %v1798 = vpop.permute.xlu0 %1797
        %1801 = vset.pattern.permute.xlu0 0
        %1802 = vperm.xlu0 %1801, %v1507
        %v1803 = vpop.permute.xlu0 %1802
        %1806 = vset.pattern.permute.xlu0 0
        %1807 = vperm.xlu0 %1806, %v1509
        %v1808 = vpop.permute.xlu0 %1807
        %1811 = vset.pattern.permute.xlu0 0
        %1812 = vperm.xlu0 %1811, %v1511
        %v1813 = vpop.permute.xlu0 %1812
        %1816 = vset.pattern.permute.xlu0 0
        %1817 = vperm.xlu0 %1816, %v1513
        %v1818 = vpop.permute.xlu0 %1817
        %1821 = vset.pattern.permute.xlu0 0
        %1822 = vperm.xlu0 %1821, %v1515
        %v1823 = vpop.permute.xlu0 %1822
        %1826 = vset.pattern.permute.xlu0 0
        %1827 = vperm.xlu0 %1826, %v1517
        %v1828 = vpop.permute.xlu0 %1827
        %1831 = vset.pattern.permute.xlu0 0
        %1832 = vperm.xlu0 %1831, %v1519
        %v1833 = vpop.permute.xlu0 %1832
        %1836 = vset.pattern.permute.xlu0 0
        %1837 = vperm.xlu0 %1836, %v1521
        %v1838 = vpop.permute.xlu0 %1837
        %1841 = vset.pattern.permute.xlu0 0
        %1842 = vperm.xlu0 %1841, %v1523
        %v1843 = vpop.permute.xlu0 %1842
        %v1845 = vmul.f32 %v1768, %v1749
        %v1846 = vmul.f32 %v1773, %v1750
        %v1847 = vmul.f32 %v1778, %v1751
        %v1848 = vmul.f32 %v1783, %v1752
        %v1849 = vmul.f32 %v1788, %v1753
        %v1850 = vmul.f32 %v1793, %v1754
        %v1851 = vmul.f32 %v1798, %v1755
        %v1852 = vmul.f32 %v1803, %v1756
        %v1853 = vmul.f32 %v1808, %v1757
        %v1854 = vmul.f32 %v1813, %v1758
        %v1855 = vmul.f32 %v1818, %v1759
        %v1856 = vmul.f32 %v1823, %v1760
        %v1857 = vmul.f32 %v1828, %v1761
        %v1858 = vmul.f32 %v1833, %v1762
        %v1859 = vmul.f32 %v1838, %v1763
        %v1860 = vmul.f32 %v1843, %v1764
        %v1861 = vpack.c.bf16 %v1623, %v1621
        %v1862 = vpack.c.bf16 %v1627, %v1625
        %v1863 = vpack.c.bf16 %v1631, %v1629
        %v1864 = vpack.c.bf16 %v1635, %v1633
        %v1865 = vpack.c.bf16 %v1639, %v1637
        %v1866 = vpack.c.bf16 %v1643, %v1641
        %v1867 = vpack.c.bf16 %v1647, %v1645
        %v1868 = vpack.c.bf16 %v1651, %v1649
        %1869 = vmatprep.subr.bf16.mxu0 0
        %1870 = vmatpush1.bf16.msra.mxu0 %v1250
        %1871 = vmatprep.subr.bf16.mxu0 0
        %1872 = vmatpush1.bf16.msra.mxu0 %v1251
        %1873 = vmatprep.subr.bf16.mxu0 0
        %1874 = vmatpush1.bf16.msra.mxu0 %v1252
        %1875 = vmatprep.subr.bf16.mxu0 0
        %1876 = vmatpush1.bf16.msra.mxu0 %v1253
        %1877 = vmatprep.subr.bf16.mxu0 0
        %1878 = vmatpush1.bf16.msra.mxu0 %v1254
        %1879 = vmatprep.subr.bf16.mxu0 0
        %1880 = vmatpush1.bf16.msra.mxu0 %v1255
        %1881 = vmatprep.subr.bf16.mxu0 0
        %1882 = vmatpush1.bf16.msra.mxu0 %v1256
        %1883 = vmatprep.subr.bf16.mxu0 0
        %1884 = vmatpush1.bf16.msra.mxu0 %v1257
        %1885 = vmatprep.subr.bf16.mxu0 0
        %1886 = vmatpush1.bf16.msra.mxu0 0
        %1887 = vmatprep.subr.bf16.mxu0 0
        %1888 = vmatpush1.bf16.msra.mxu0 0
        %1889 = vmatprep.subr.bf16.mxu0 0
        %1890 = vmatpush1.bf16.msra.mxu0 0
        %1891 = vmatprep.subr.bf16.mxu0 0
        %1892 = vmatpush1.bf16.msra.mxu0 0
        %1893 = vmatprep.subr.bf16.mxu0 0
        %1894 = vmatpush1.bf16.msra.mxu0 0
        %1895 = vmatprep.subr.bf16.mxu0 0
        %1896 = vmatpush1.bf16.msra.mxu0 0
        %1897 = vmatprep.subr.bf16.mxu0 0
        %1898 = vmatpush1.bf16.msra.mxu0 0
        %1899 = vmatprep.subr.bf16.mxu0 0
        %1900 = vmatpush1.bf16.msra.mxu0 0
        %1901 = vmatprep.mubr.bf16.mxu0 0
        %1902 = vmatmul.mubr.bf16.gmra.mrb[0].mxu0 %v1861
        %v1903 = vpop.f32.mrb[0].mxu0
        %v1904 = vadd.f32 0.0, %v1903
        %v1905 = vpop.f32.mrb[0].mxu0
        %v1906 = vpop.f32.mrb[0].mxu0
        %v1907 = vadd.f32 0.0, %v1906
        %v1908 = vpop.f32.mrb[0].mxu0
        %1909 = vmatprep.mubr.bf16.mxu0 0
        %1910 = vmatmul.mubr.bf16.gmra.mrb[0].mxu0 %v1862
        %v1911 = vpop.f32.mrb[0].mxu0
        %v1912 = vadd.f32 0.0, %v1911
        %v1913 = vpop.f32.mrb[0].mxu0
        %v1914 = vpop.f32.mrb[0].mxu0
        %v1915 = vadd.f32 0.0, %v1914
        %v1916 = vpop.f32.mrb[0].mxu0
        %1917 = vmatprep.mubr.bf16.mxu0 0
        %1918 = vmatmul.mubr.bf16.gmra.mrb[0].mxu0 %v1863
        %v1919 = vpop.f32.mrb[0].mxu0
        %v1920 = vadd.f32 0.0, %v1919
        %v1921 = vpop.f32.mrb[0].mxu0
        %v1922 = vpop.f32.mrb[0].mxu0
        %v1923 = vadd.f32 0.0, %v1922
        %v1924 = vpop.f32.mrb[0].mxu0
        %1925 = vmatprep.mubr.bf16.mxu0 0
        %1926 = vmatmul.mubr.bf16.gmra.mrb[0].mxu0 %v1864
        %v1927 = vpop.f32.mrb[0].mxu0
        %v1928 = vadd.f32 0.0, %v1927
        %v1929 = vpop.f32.mrb[0].mxu0
        %v1930 = vpop.f32.mrb[0].mxu0
        %v1931 = vadd.f32 0.0, %v1930
        %v1932 = vpop.f32.mrb[0].mxu0
        %1933 = vmatprep.mubr.bf16.mxu0 0
        %1934 = vmatmul.mubr.bf16.gmra.mrb[0].mxu0 %v1865
        %v1935 = vpop.f32.mrb[0].mxu0
        %v1936 = vadd.f32 0.0, %v1935
        %v1937 = vpop.f32.mrb[0].mxu0
        %v1938 = vpop.f32.mrb[0].mxu0
        %v1939 = vadd.f32 0.0, %v1938
        %v1940 = vpop.f32.mrb[0].mxu0
        %1941 = vmatprep.mubr.bf16.mxu0 0
        %1942 = vmatmul.mubr.bf16.gmra.mrb[0].mxu0 %v1866
        %v1943 = vpop.f32.mrb[0].mxu0
        %v1944 = vadd.f32 0.0, %v1943
        %v1945 = vpop.f32.mrb[0].mxu0
        %v1946 = vpop.f32.mrb[0].mxu0
        %v1947 = vadd.f32 0.0, %v1946
        %v1948 = vpop.f32.mrb[0].mxu0
        %1949 = vmatprep.mubr.bf16.mxu0 0
        %1950 = vmatmul.mubr.bf16.gmra.mrb[0].mxu0 %v1867
        %v1951 = vpop.f32.mrb[0].mxu0
        %v1952 = vadd.f32 0.0, %v1951
        %v1953 = vpop.f32.mrb[0].mxu0
        %v1954 = vpop.f32.mrb[0].mxu0
        %v1955 = vadd.f32 0.0, %v1954
        %v1956 = vpop.f32.mrb[0].mxu0
        %1957 = vmatprep.mubr.bf16.mxu0 0
        %1958 = vmatmul.mubr.bf16.gmra.mrb[0].mxu0 %v1868
        %v1959 = vpop.f32.mrb[0].mxu0
        %v1960 = vadd.f32 0.0, %v1959
        %v1961 = vpop.f32.mrb[0].mxu0
        %v1962 = vpop.f32.mrb[0].mxu0
        %v1963 = vadd.f32 0.0, %v1962
        %v1964 = vpop.f32.mrb[0].mxu0
        %1965 = vdwg.mxu0
        %v1966 = vadd.f32 %v1845, %v1904
        %v1967 = vadd.f32 %v1846, %v1907
        %v1968 = vadd.f32 %v1847, %v1912
        %v1969 = vadd.f32 %v1848, %v1915
        %v1970 = vadd.f32 %v1849, %v1920
        %v1971 = vadd.f32 %v1850, %v1923
        %v1972 = vadd.f32 %v1851, %v1928
        %v1973 = vadd.f32 %v1852, %v1931
        %v1974 = vadd.f32 %v1853, %v1936
        %v1975 = vadd.f32 %v1854, %v1939
        %v1976 = vadd.f32 %v1855, %v1944
        %v1977 = vadd.f32 %v1856, %v1947
        %v1978 = vadd.f32 %v1857, %v1952
        %v1979 = vadd.f32 %v1858, %v1955
        %v1980 = vadd.f32 %v1859, %v1960
        %v1981 = vadd.f32 %v1860, %v1963
        %1982 = vst.msk [vmem:[#allocation5] sm:$0xff] %vm1266, %v1966
        %1983 = vst.msk [vmem:[#allocation5 + $0x8] sm:$0xff] %vm1266, %v1967
        %1984 = vst.msk [vmem:[#allocation5 + $0x10] sm:$0xff] %vm1266, %v1968
        %1985 = vst.msk [vmem:[#allocation5 + $0x18] sm:$0xff] %vm1266, %v1969
        %1986 = vst.msk [vmem:[#allocation5 + $0x20] sm:$0xff] %vm1266, %v1970
        %1987 = vst.msk [vmem:[#allocation5 + $0x28] sm:$0xff] %vm1266, %v1971
        %1988 = vst.msk [vmem:[#allocation5 + $0x30] sm:$0xff] %vm1266, %v1972
        %1989 = vst.msk [vmem:[#allocation5 + $0x38] sm:$0xff] %vm1266, %v1973
        %1990 = vst.msk [vmem:[#allocation5 + $0x40] sm:$0xff] %vm1266, %v1974
        %1991 = vst.msk [vmem:[#allocation5 + $0x48] sm:$0xff] %vm1266, %v1975
        %1992 = vst.msk [vmem:[#allocation5 + $0x50] sm:$0xff] %vm1266, %v1976
        %1993 = vst.msk [vmem:[#allocation5 + $0x58] sm:$0xff] %vm1266, %v1977
        %1994 = vst.msk [vmem:[#allocation5 + $0x60] sm:$0xff] %vm1266, %v1978
        %1995 = vst.msk [vmem:[#allocation5 + $0x68] sm:$0xff] %vm1266, %v1979
        %1996 = vst.msk [vmem:[#allocation5 + $0x70] sm:$0xff] %vm1266, %v1980
        %1997 = vst.msk [vmem:[#allocation5 + $0x78] sm:$0xff] %vm1266, %v1981
        %1998 = vst.msk [vmem:[#allocation3] sm:$0xff] %vm1732, %v1460
        %1999 = vst.msk [vmem:[#allocation3 + $0x8] sm:$0xff] %vm1732, %v1461
        %2000 = vst.msk [vmem:[#allocation3 + $0x10] sm:$0xff] %vm1732, %v1462
        %2001 = vst.msk [vmem:[#allocation3 + $0x18] sm:$0xff] %vm1732, %v1463
        %2002 = vst.msk [vmem:[#allocation3 + $0x20] sm:$0xff] %vm1732, %v1464
        %2003 = vst.msk [vmem:[#allocation3 + $0x28] sm:$0xff] %vm1732, %v1465
        %2004 = vst.msk [vmem:[#allocation3 + $0x30] sm:$0xff] %vm1732, %v1466
        %2005 = vst.msk [vmem:[#allocation3 + $0x38] sm:$0xff] %vm1732, %v1467
        %2006 = vst.msk [vmem:[#allocation3 + $0x40] sm:$0xff] %vm1732, %v1468
        %2007 = vst.msk [vmem:[#allocation3 + $0x48] sm:$0xff] %vm1732, %v1469
        %2008 = vst.msk [vmem:[#allocation3 + $0x50] sm:$0xff] %vm1732, %v1470
        %2009 = vst.msk [vmem:[#allocation3 + $0x58] sm:$0xff] %vm1732, %v1471
        %2010 = vst.msk [vmem:[#allocation3 + $0x60] sm:$0xff] %vm1732, %v1472
        %2011 = vst.msk [vmem:[#allocation3 + $0x68] sm:$0xff] %vm1732, %v1473
        %2012 = vst.msk [vmem:[#allocation3 + $0x70] sm:$0xff] %vm1732, %v1474
        %2013 = vst.msk [vmem:[#allocation3 + $0x78] sm:$0xff] %vm1732, %v1475
        %v2014 = vld [vmem:[#allocation2] sm:$0xff]
        %v2015 = vld [vmem:[#allocation2 + $0x8] sm:$0xff]
        %v2016 = vld [vmem:[#allocation2 + $0x10] sm:$0xff]
        %v2017 = vld [vmem:[#allocation2 + $0x18] sm:$0xff]
        %v2018 = vld [vmem:[#allocation2 + $0x20] sm:$0xff]
        %v2019 = vld [vmem:[#allocation2 + $0x28] sm:$0xff]
        %v2020 = vld [vmem:[#allocation2 + $0x30] sm:$0xff]
        %v2021 = vld [vmem:[#allocation2 + $0x38] sm:$0xff]
        %2030 = vrot.lane.b32.xlu0 %v2014, 96
        %v2031 = vpop.permute.xlu0 %2030
        %2032 = vrot.lane.b32.xlu0 %v2015, 96
        %v2033 = vpop.permute.xlu0 %2032
        %2034 = vrot.lane.b32.xlu0 %v2016, 96
        %v2035 = vpop.permute.xlu0 %2034
        %2036 = vrot.lane.b32.xlu0 %v2017, 96
        %v2037 = vpop.permute.xlu0 %2036
        %2038 = vrot.lane.b32.xlu0 %v2018, 96
        %v2039 = vpop.permute.xlu0 %2038
        %2040 = vrot.lane.b32.xlu0 %v2019, 96
        %v2041 = vpop.permute.xlu0 %2040
        %2042 = vrot.lane.b32.xlu0 %v2020, 96
        %v2043 = vpop.permute.xlu0 %2042
        %2044 = vrot.lane.b32.xlu0 %v2021, 96
        %v2045 = vpop.permute.xlu0 %2044
        %2054 = vrot.lane.b32.xlu0 %v1074, 96
        %v2055 = vpop.permute.xlu0 %2054
        %2056 = vrot.lane.b32.xlu0 %v1075, 96
        %v2057 = vpop.permute.xlu0 %2056
        %2058 = vrot.lane.b32.xlu0 %v1076, 96
        %v2059 = vpop.permute.xlu0 %2058
        %2060 = vrot.lane.b32.xlu0 %v1077, 96
        %v2061 = vpop.permute.xlu0 %2060
        %2062 = vrot.lane.b32.xlu0 %v1078, 96
        %v2063 = vpop.permute.xlu0 %2062
        %2064 = vrot.lane.b32.xlu0 %v1079, 96
        %v2065 = vpop.permute.xlu0 %2064
        %2066 = vrot.lane.b32.xlu0 %v1080, 96
        %v2067 = vpop.permute.xlu0 %2066
        %2068 = vrot.lane.b32.xlu0 %v1081, 96
        %v2069 = vpop.permute.xlu0 %2068
        %v2071 = vsel %vm1266, %v2031, 0
        %v2074 = vsel %vm1266, %v2033, 0
        %v2077 = vsel %vm1266, %v2035, 0
        %v2080 = vsel %vm1266, %v2037, 0
        %v2083 = vsel %vm1266, %v2039, 0
        %v2086 = vsel %vm1266, %v2041, 0
        %v2089 = vsel %vm1266, %v2043, 0
        %v2092 = vsel %vm1266, %v2045, 0
        %v2095 = vsel %vm1266, %v2055, 0
        %v2098 = vsel %vm1266, %v2057, 0
        %v2101 = vsel %vm1266, %v2059, 0
        %v2104 = vsel %vm1266, %v2061, 0
        %v2107 = vsel %vm1266, %v2063, 0
        %v2110 = vsel %vm1266, %v2065, 0
        %v2113 = vsel %vm1266, %v2067, 0
        %v2116 = vsel %vm1266, %v2069, 0
        %2118 = vmatprep.subr.bf16.mxu0 0
        %2119 = vmatpush1.bf16.xpose.msra.mxu0 %v2095
        %2120 = vmatprep.subr.bf16.mxu0 0
        %2121 = vmatpush1.bf16.xpose.msra.mxu0 %v2098
        %2122 = vmatprep.subr.bf16.mxu0 0
        %2123 = vmatpush1.bf16.xpose.msra.mxu0 %v2101
        %2124 = vmatprep.subr.bf16.mxu0 0
        %2125 = vmatpush1.bf16.xpose.msra.mxu0 %v2104
        %2126 = vmatprep.subr.bf16.mxu0 0
        %2127 = vmatpush1.bf16.xpose.msra.mxu0 %v2107
        %2128 = vmatprep.subr.bf16.mxu0 0
        %2129 = vmatpush1.bf16.xpose.msra.mxu0 %v2110
        %2130 = vmatprep.subr.bf16.mxu0 0
        %2131 = vmatpush1.bf16.xpose.msra.mxu0 %v2113
        %2132 = vmatprep.subr.bf16.mxu0 0
        %2133 = vmatpush1.bf16.xpose.msra.mxu0 %v2116
        %2134 = vmatprep.subr.bf16.mxu0 0
        %2135 = vmatpush1.bf16.xpose.msra.mxu0 0
        %2136 = vmatprep.subr.bf16.mxu0 0
        %2137 = vmatpush1.bf16.xpose.msra.mxu0 0
        %2138 = vmatprep.subr.bf16.mxu0 0
        %2139 = vmatpush1.bf16.xpose.msra.mxu0 0
        %2140 = vmatprep.subr.bf16.mxu0 0
        %2141 = vmatpush1.bf16.xpose.msra.mxu0 0
        %2142 = vmatprep.subr.bf16.mxu0 0
        %2143 = vmatpush1.bf16.xpose.msra.mxu0 0
        %2144 = vmatprep.subr.bf16.mxu0 0
        %2145 = vmatpush1.bf16.xpose.msra.mxu0 0
        %2146 = vmatprep.subr.bf16.mxu0 0
        %2147 = vmatpush1.bf16.xpose.msra.mxu0 0
        %2148 = vmatprep.subr.bf16.mxu0 0
        %2149 = vmatpush1.bf16.xpose.msra.mxu0 0
        %2150 = vmatprep.mubr.bf16.mxu0 0
        %2151 = vmatmul.mubr.bf16.gmra.mrb[0].mxu0 %v2071
        %v2152 = vpop.f32.mrb[0].mxu0
        %v2153 = vadd.f32 0.0, %v2152
        %v2154 = vpop.f32.mrb[0].mxu0
        %v2155 = vpop.f32.mrb[0].mxu0
        %v2156 = vadd.f32 0.0, %v2155
        %v2157 = vpop.f32.mrb[0].mxu0
        %2158 = vmatprep.mubr.bf16.mxu0 0
        %2159 = vmatmul.mubr.bf16.gmra.mrb[0].mxu0 %v2074
        %v2160 = vpop.f32.mrb[0].mxu0
        %v2161 = vadd.f32 0.0, %v2160
        %v2162 = vpop.f32.mrb[0].mxu0
        %v2163 = vpop.f32.mrb[0].mxu0
        %v2164 = vadd.f32 0.0, %v2163
        %v2165 = vpop.f32.mrb[0].mxu0
        %2166 = vmatprep.mubr.bf16.mxu0 0
        %2167 = vmatmul.mubr.bf16.gmra.mrb[0].mxu0 %v2077
        %v2168 = vpop.f32.mrb[0].mxu0
        %v2169 = vadd.f32 0.0, %v2168
        %v2170 = vpop.f32.mrb[0].mxu0
        %v2171 = vpop.f32.mrb[0].mxu0
        %v2172 = vadd.f32 0.0, %v2171
        %v2173 = vpop.f32.mrb[0].mxu0
        %2174 = vmatprep.mubr.bf16.mxu0 0
        %2175 = vmatmul.mubr.bf16.gmra.mrb[0].mxu0 %v2080
        %v2176 = vpop.f32.mrb[0].mxu0
        %v2177 = vadd.f32 0.0, %v2176
        %v2178 = vpop.f32.mrb[0].mxu0
        %v2179 = vpop.f32.mrb[0].mxu0
        %v2180 = vadd.f32 0.0, %v2179
        %v2181 = vpop.f32.mrb[0].mxu0
        %2182 = vmatprep.mubr.bf16.mxu0 0
        %2183 = vmatmul.mubr.bf16.gmra.mrb[0].mxu0 %v2083
        %v2184 = vpop.f32.mrb[0].mxu0
        %v2185 = vadd.f32 0.0, %v2184
        %v2186 = vpop.f32.mrb[0].mxu0
        %v2187 = vpop.f32.mrb[0].mxu0
        %v2188 = vadd.f32 0.0, %v2187
        %v2189 = vpop.f32.mrb[0].mxu0
        %2190 = vmatprep.mubr.bf16.mxu0 0
        %2191 = vmatmul.mubr.bf16.gmra.mrb[0].mxu0 %v2086
        %v2192 = vpop.f32.mrb[0].mxu0
        %v2193 = vadd.f32 0.0, %v2192
        %v2194 = vpop.f32.mrb[0].mxu0
        %v2195 = vpop.f32.mrb[0].mxu0
        %v2196 = vadd.f32 0.0, %v2195
        %v2197 = vpop.f32.mrb[0].mxu0
        %2198 = vmatprep.mubr.bf16.mxu0 0
        %2199 = vmatmul.mubr.bf16.gmra.mrb[0].mxu0 %v2089
        %v2200 = vpop.f32.mrb[0].mxu0
        %v2201 = vadd.f32 0.0, %v2200
        %v2202 = vpop.f32.mrb[0].mxu0
        %v2203 = vpop.f32.mrb[0].mxu0
        %v2204 = vadd.f32 0.0, %v2203
        %v2205 = vpop.f32.mrb[0].mxu0
        %2206 = vmatprep.mubr.bf16.mxu0 0
        %2207 = vmatmul.mubr.bf16.gmra.mrb[0].mxu0 %v2092
        %v2208 = vpop.f32.mrb[0].mxu0
        %v2209 = vadd.f32 0.0, %v2208
        %v2210 = vpop.f32.mrb[0].mxu0
        %v2211 = vpop.f32.mrb[0].mxu0
        %v2212 = vadd.f32 0.0, %v2211
        %v2213 = vpop.f32.mrb[0].mxu0
        %2214 = vdwg.mxu0
        %s2215 = scalar_lea.vmem [#allocation3], 128
        %v2216 = vld [vmem:[%s2215] sm:$0xff]
        %v2217 = vld [vmem:[%s2215 + $0x8] sm:$0xff]
        %v2218 = vld [vmem:[%s2215 + $0x10] sm:$0xff]
        %v2219 = vld [vmem:[%s2215 + $0x18] sm:$0xff]
        %v2220 = vld [vmem:[%s2215 + $0x20] sm:$0xff]
        %v2221 = vld [vmem:[%s2215 + $0x28] sm:$0xff]
        %v2222 = vld [vmem:[%s2215 + $0x30] sm:$0xff]
        %v2223 = vld [vmem:[%s2215 + $0x38] sm:$0xff]
        %v2224 = vld [vmem:[%s2215 + $0x40] sm:$0xff]
        %v2225 = vld [vmem:[%s2215 + $0x48] sm:$0xff]
        %v2226 = vld [vmem:[%s2215 + $0x50] sm:$0xff]
        %v2227 = vld [vmem:[%s2215 + $0x58] sm:$0xff]
        %v2228 = vld [vmem:[%s2215 + $0x60] sm:$0xff]
        %v2229 = vld [vmem:[%s2215 + $0x68] sm:$0xff]
        %v2230 = vld [vmem:[%s2215 + $0x70] sm:$0xff]
        %v2231 = vld [vmem:[%s2215 + $0x78] sm:$0xff]
        %2232 = vmax.xlane.f32.xlu0 %v2153
        %v2233 = vpop.xlane.xlu0 %2232
        %2234 = vmax.xlane.f32.xlu0 %v2156
        %v2235 = vpop.xlane.xlu0 %2234
        %2236 = vmax.xlane.f32.xlu0 %v2161
        %v2237 = vpop.xlane.xlu0 %2236
        %2238 = vmax.xlane.f32.xlu0 %v2164
        %v2239 = vpop.xlane.xlu0 %2238
        %2240 = vmax.xlane.f32.xlu0 %v2169
        %v2241 = vpop.xlane.xlu0 %2240
        %2242 = vmax.xlane.f32.xlu0 %v2172
        %v2243 = vpop.xlane.xlu0 %2242
        %2244 = vmax.xlane.f32.xlu0 %v2177
        %v2245 = vpop.xlane.xlu0 %2244
        %2246 = vmax.xlane.f32.xlu0 %v2180
        %v2247 = vpop.xlane.xlu0 %2246
        %2248 = vmax.xlane.f32.xlu0 %v2185
        %v2249 = vpop.xlane.xlu0 %2248
        %2250 = vmax.xlane.f32.xlu0 %v2188
        %v2251 = vpop.xlane.xlu0 %2250
        %2252 = vmax.xlane.f32.xlu0 %v2193
        %v2253 = vpop.xlane.xlu0 %2252
        %2254 = vmax.xlane.f32.xlu0 %v2196
        %v2255 = vpop.xlane.xlu0 %2254
        %2256 = vmax.xlane.f32.xlu0 %v2201
        %v2257 = vpop.xlane.xlu0 %2256
        %2258 = vmax.xlane.f32.xlu0 %v2204
        %v2259 = vpop.xlane.xlu0 %2258
        %2260 = vmax.xlane.f32.xlu0 %v2209
        %v2261 = vpop.xlane.xlu0 %2260
        %2262 = vmax.xlane.f32.xlu0 %v2212
        %v2263 = vpop.xlane.xlu0 %2262
        %v2264 = vmax.f32 %v2216, %v2233
        %v2265 = vmax.f32 %v2217, %v2235
        %v2266 = vmax.f32 %v2218, %v2237
        %v2267 = vmax.f32 %v2219, %v2239
        %v2268 = vmax.f32 %v2220, %v2241
        %v2269 = vmax.f32 %v2221, %v2243
        %v2270 = vmax.f32 %v2222, %v2245
        %v2271 = vmax.f32 %v2223, %v2247
        %v2272 = vmax.f32 %v2224, %v2249
        %v2273 = vmax.f32 %v2225, %v2251
        %v2274 = vmax.f32 %v2226, %v2253
        %v2275 = vmax.f32 %v2227, %v2255
        %v2276 = vmax.f32 %v2228, %v2257
        %v2277 = vmax.f32 %v2229, %v2259
        %v2278 = vmax.f32 %v2230, %v2261
        %v2279 = vmax.f32 %v2231, %v2263
        %v2280 = vsub.f32 %v2216, %v2264
        %v2281 = vsub.f32 %v2217, %v2265
        %v2282 = vsub.f32 %v2218, %v2266
        %v2283 = vsub.f32 %v2219, %v2267
        %v2284 = vsub.f32 %v2220, %v2268
        %v2285 = vsub.f32 %v2221, %v2269
        %v2286 = vsub.f32 %v2222, %v2270
        %v2287 = vsub.f32 %v2223, %v2271
        %v2288 = vsub.f32 %v2224, %v2272
        %v2289 = vsub.f32 %v2225, %v2273
        %v2290 = vsub.f32 %v2226, %v2274
        %v2291 = vsub.f32 %v2227, %v2275
        %v2292 = vsub.f32 %v2228, %v2276
        %v2293 = vsub.f32 %v2229, %v2277
        %v2294 = vsub.f32 %v2230, %v2278
        %v2295 = vsub.f32 %v2231, %v2279
        %v2296 = vmul.f32 %v2280, 1.442695
        %v2297 = vpow.pop %v2296
        %v2298 = vmul.f32 %v2281, 1.442695
        %v2299 = vpow.pop %v2298
        %v2300 = vmul.f32 %v2282, 1.442695
        %v2301 = vpow.pop %v2300
        %v2302 = vmul.f32 %v2283, 1.442695
        %v2303 = vpow.pop %v2302
        %v2304 = vmul.f32 %v2284, 1.442695
        %v2305 = vpow.pop %v2304
        %v2306 = vmul.f32 %v2285, 1.442695
        %v2307 = vpow.pop %v2306
        %v2308 = vmul.f32 %v2286, 1.442695
        %v2309 = vpow.pop %v2308
        %v2310 = vmul.f32 %v2287, 1.442695
        %v2311 = vpow.pop %v2310
        %v2312 = vmul.f32 %v2288, 1.442695
        %v2313 = vpow.pop %v2312
        %v2314 = vmul.f32 %v2289, 1.442695
        %v2315 = vpow.pop %v2314
        %v2316 = vmul.f32 %v2290, 1.442695
        %v2317 = vpow.pop %v2316
        %v2318 = vmul.f32 %v2291, 1.442695
        %v2319 = vpow.pop %v2318
        %v2320 = vmul.f32 %v2292, 1.442695
        %v2321 = vpow.pop %v2320
        %v2322 = vmul.f32 %v2293, 1.442695
        %v2323 = vpow.pop %v2322
        %v2324 = vmul.f32 %v2294, 1.442695
        %v2325 = vpow.pop %v2324
        %v2326 = vmul.f32 %v2295, 1.442695
        %v2327 = vpow.pop %v2326
        %2329 = vset.pattern.permute.xlu0 0
        %2330 = vperm.xlu0 %2329, %v2264
        %v2331 = vpop.permute.xlu0 %2330
        %2334 = vset.pattern.permute.xlu0 0
        %2335 = vperm.xlu0 %2334, %v2265
        %v2336 = vpop.permute.xlu0 %2335
        %2339 = vset.pattern.permute.xlu0 0
        %2340 = vperm.xlu0 %2339, %v2266
        %v2341 = vpop.permute.xlu0 %2340
        %2344 = vset.pattern.permute.xlu0 0
        %2345 = vperm.xlu0 %2344, %v2267
        %v2346 = vpop.permute.xlu0 %2345
        %2349 = vset.pattern.permute.xlu0 0
        %2350 = vperm.xlu0 %2349, %v2268
        %v2351 = vpop.permute.xlu0 %2350
        %2354 = vset.pattern.permute.xlu0 0
        %2355 = vperm.xlu0 %2354, %v2269
        %v2356 = vpop.permute.xlu0 %2355
        %2359 = vset.pattern.permute.xlu0 0
        %2360 = vperm.xlu0 %2359, %v2270
        %v2361 = vpop.permute.xlu0 %2360
        %2364 = vset.pattern.permute.xlu0 0
        %2365 = vperm.xlu0 %2364, %v2271
        %v2366 = vpop.permute.xlu0 %2365
        %2369 = vset.pattern.permute.xlu0 0
        %2370 = vperm.xlu0 %2369, %v2272
        %v2371 = vpop.permute.xlu0 %2370
        %2374 = vset.pattern.permute.xlu0 0
        %2375 = vperm.xlu0 %2374, %v2273
        %v2376 = vpop.permute.xlu0 %2375
        %2379 = vset.pattern.permute.xlu0 0
        %2380 = vperm.xlu0 %2379, %v2274
        %v2381 = vpop.permute.xlu0 %2380
        %2384 = vset.pattern.permute.xlu0 0
        %2385 = vperm.xlu0 %2384, %v2275
        %v2386 = vpop.permute.xlu0 %2385
        %2389 = vset.pattern.permute.xlu0 0
        %2390 = vperm.xlu0 %2389, %v2276
        %v2391 = vpop.permute.xlu0 %2390
        %2394 = vset.pattern.permute.xlu0 0
        %2395 = vperm.xlu0 %2394, %v2277
        %v2396 = vpop.permute.xlu0 %2395
        %2399 = vset.pattern.permute.xlu0 0
        %2400 = vperm.xlu0 %2399, %v2278
        %v2401 = vpop.permute.xlu0 %2400
        %2404 = vset.pattern.permute.xlu0 0
        %2405 = vperm.xlu0 %2404, %v2279
        %v2406 = vpop.permute.xlu0 %2405
        %v2408 = vsub.f32 %v2153, %v2331
        %v2409 = vsub.f32 %v2156, %v2336
        %v2410 = vsub.f32 %v2161, %v2341
        %v2411 = vsub.f32 %v2164, %v2346
        %v2412 = vsub.f32 %v2169, %v2351
        %v2413 = vsub.f32 %v2172, %v2356
        %v2414 = vsub.f32 %v2177, %v2361
        %v2415 = vsub.f32 %v2180, %v2366
        %v2416 = vsub.f32 %v2185, %v2371
        %v2417 = vsub.f32 %v2188, %v2376
        %v2418 = vsub.f32 %v2193, %v2381
        %v2419 = vsub.f32 %v2196, %v2386
        %v2420 = vsub.f32 %v2201, %v2391
        %v2421 = vsub.f32 %v2204, %v2396
        %v2422 = vsub.f32 %v2209, %v2401
        %v2423 = vsub.f32 %v2212, %v2406
        %v2424 = vmul.f32 %v2408, 1.442695
        %v2425 = vpow.pop %v2424
        %v2426 = vmul.f32 %v2409, 1.442695
        %v2427 = vpow.pop %v2426
        %v2428 = vmul.f32 %v2410, 1.442695
        %v2429 = vpow.pop %v2428
        %v2430 = vmul.f32 %v2411, 1.442695
        %v2431 = vpow.pop %v2430
        %v2432 = vmul.f32 %v2412, 1.442695
        %v2433 = vpow.pop %v2432
        %v2434 = vmul.f32 %v2413, 1.442695
        %v2435 = vpow.pop %v2434
        %v2436 = vmul.f32 %v2414, 1.442695
        %v2437 = vpow.pop %v2436
        %v2438 = vmul.f32 %v2415, 1.442695
        %v2439 = vpow.pop %v2438
        %v2440 = vmul.f32 %v2416, 1.442695
        %v2441 = vpow.pop %v2440
        %v2442 = vmul.f32 %v2417, 1.442695
        %v2443 = vpow.pop %v2442
        %v2444 = vmul.f32 %v2418, 1.442695
        %v2445 = vpow.pop %v2444
        %v2446 = vmul.f32 %v2419, 1.442695
        %v2447 = vpow.pop %v2446
        %v2448 = vmul.f32 %v2420, 1.442695
        %v2449 = vpow.pop %v2448
        %v2450 = vmul.f32 %v2421, 1.442695
        %v2451 = vpow.pop %v2450
        %v2452 = vmul.f32 %v2422, 1.442695
        %v2453 = vpow.pop %v2452
        %v2454 = vmul.f32 %v2423, 1.442695
        %v2455 = vpow.pop %v2454
        %s2456 = scalar_lea.vmem [#allocation4], 128
        %v2457 = vld [vmem:[%s2456] sm:$0xff]
        %v2458 = vld [vmem:[%s2456 + $0x8] sm:$0xff]
        %v2459 = vld [vmem:[%s2456 + $0x10] sm:$0xff]
        %v2460 = vld [vmem:[%s2456 + $0x18] sm:$0xff]
        %v2461 = vld [vmem:[%s2456 + $0x20] sm:$0xff]
        %v2462 = vld [vmem:[%s2456 + $0x28] sm:$0xff]
        %v2463 = vld [vmem:[%s2456 + $0x30] sm:$0xff]
        %v2464 = vld [vmem:[%s2456 + $0x38] sm:$0xff]
        %v2465 = vld [vmem:[%s2456 + $0x40] sm:$0xff]
        %v2466 = vld [vmem:[%s2456 + $0x48] sm:$0xff]
        %v2467 = vld [vmem:[%s2456 + $0x50] sm:$0xff]
        %v2468 = vld [vmem:[%s2456 + $0x58] sm:$0xff]
        %v2469 = vld [vmem:[%s2456 + $0x60] sm:$0xff]
        %v2470 = vld [vmem:[%s2456 + $0x68] sm:$0xff]
        %v2471 = vld [vmem:[%s2456 + $0x70] sm:$0xff]
        %v2472 = vld [vmem:[%s2456 + $0x78] sm:$0xff]
        %v2473 = vmul.f32 %v2297, %v2457
        %v2474 = vmul.f32 %v2299, %v2458
        %v2475 = vmul.f32 %v2301, %v2459
        %v2476 = vmul.f32 %v2303, %v2460
        %v2477 = vmul.f32 %v2305, %v2461
        %v2478 = vmul.f32 %v2307, %v2462
        %v2479 = vmul.f32 %v2309, %v2463
        %v2480 = vmul.f32 %v2311, %v2464
        %v2481 = vmul.f32 %v2313, %v2465
        %v2482 = vmul.f32 %v2315, %v2466
        %v2483 = vmul.f32 %v2317, %v2467
        %v2484 = vmul.f32 %v2319, %v2468
        %v2485 = vmul.f32 %v2321, %v2469
        %v2486 = vmul.f32 %v2323, %v2470
        %v2487 = vmul.f32 %v2325, %v2471
        %v2488 = vmul.f32 %v2327, %v2472
        %2489 = vadd.xlane.f32.xlu0 %v2425
        %v2490 = vpop.xlane.xlu0 %2489
        %2491 = vadd.xlane.f32.xlu0 %v2427
        %v2492 = vpop.xlane.xlu0 %2491
        %2493 = vadd.xlane.f32.xlu0 %v2429
        %v2494 = vpop.xlane.xlu0 %2493
        %2495 = vadd.xlane.f32.xlu0 %v2431
        %v2496 = vpop.xlane.xlu0 %2495
        %2497 = vadd.xlane.f32.xlu0 %v2433
        %v2498 = vpop.xlane.xlu0 %2497
        %2499 = vadd.xlane.f32.xlu0 %v2435
        %v2500 = vpop.xlane.xlu0 %2499
        %2501 = vadd.xlane.f32.xlu0 %v2437
        %v2502 = vpop.xlane.xlu0 %2501
        %2503 = vadd.xlane.f32.xlu0 %v2439
        %v2504 = vpop.xlane.xlu0 %2503
        %2505 = vadd.xlane.f32.xlu0 %v2441
        %v2506 = vpop.xlane.xlu0 %2505
        %2507 = vadd.xlane.f32.xlu0 %v2443
        %v2508 = vpop.xlane.xlu0 %2507
        %2509 = vadd.xlane.f32.xlu0 %v2445
        %v2510 = vpop.xlane.xlu0 %2509
        %2511 = vadd.xlane.f32.xlu0 %v2447
        %v2512 = vpop.xlane.xlu0 %2511
        %2513 = vadd.xlane.f32.xlu0 %v2449
        %v2514 = vpop.xlane.xlu0 %2513
        %2515 = vadd.xlane.f32.xlu0 %v2451
        %v2516 = vpop.xlane.xlu0 %2515
        %2517 = vadd.xlane.f32.xlu0 %v2453
        %v2518 = vpop.xlane.xlu0 %2517
        %2519 = vadd.xlane.f32.xlu0 %v2455
        %v2520 = vpop.xlane.xlu0 %2519
        %v2521 = vadd.f32 %v2473, %v2490
        %v2522 = vadd.f32 %v2474, %v2492
        %v2523 = vadd.f32 %v2475, %v2494
        %v2524 = vadd.f32 %v2476, %v2496
        %v2525 = vadd.f32 %v2477, %v2498
        %v2526 = vadd.f32 %v2478, %v2500
        %v2527 = vadd.f32 %v2479, %v2502
        %v2528 = vadd.f32 %v2480, %v2504
        %v2529 = vadd.f32 %v2481, %v2506
        %v2530 = vadd.f32 %v2482, %v2508
        %v2531 = vadd.f32 %v2483, %v2510
        %v2532 = vadd.f32 %v2484, %v2512
        %v2533 = vadd.f32 %v2485, %v2514
        %v2534 = vadd.f32 %v2486, %v2516
        %v2535 = vadd.f32 %v2487, %v2518
        %v2536 = vadd.f32 %v2488, %v2520
        %2537 = vst.msk [vmem:[%s2456] sm:$0xff] %vm1732, %v2521
        %2538 = vst.msk [vmem:[%s2456 + $0x8] sm:$0xff] %vm1732, %v2522
        %2539 = vst.msk [vmem:[%s2456 + $0x10] sm:$0xff] %vm1732, %v2523
        %2540 = vst.msk [vmem:[%s2456 + $0x18] sm:$0xff] %vm1732, %v2524
        %2541 = vst.msk [vmem:[%s2456 + $0x20] sm:$0xff] %vm1732, %v2525
        %2542 = vst.msk [vmem:[%s2456 + $0x28] sm:$0xff] %vm1732, %v2526
        %2543 = vst.msk [vmem:[%s2456 + $0x30] sm:$0xff] %vm1732, %v2527
        %2544 = vst.msk [vmem:[%s2456 + $0x38] sm:$0xff] %vm1732, %v2528
        %2545 = vst.msk [vmem:[%s2456 + $0x40] sm:$0xff] %vm1732, %v2529
        %2546 = vst.msk [vmem:[%s2456 + $0x48] sm:$0xff] %vm1732, %v2530
        %2547 = vst.msk [vmem:[%s2456 + $0x50] sm:$0xff] %vm1732, %v2531
        %2548 = vst.msk [vmem:[%s2456 + $0x58] sm:$0xff] %vm1732, %v2532
        %2549 = vst.msk [vmem:[%s2456 + $0x60] sm:$0xff] %vm1732, %v2533
        %2550 = vst.msk [vmem:[%s2456 + $0x68] sm:$0xff] %vm1732, %v2534
        %2551 = vst.msk [vmem:[%s2456 + $0x70] sm:$0xff] %vm1732, %v2535
        %2552 = vst.msk [vmem:[%s2456 + $0x78] sm:$0xff] %vm1732, %v2536
        %v2553 = vld [vmem:[#allocation5] sm:$0xff]
        %v2554 = vld [vmem:[#allocation5 + $0x8] sm:$0xff]
        %v2555 = vld [vmem:[#allocation5 + $0x10] sm:$0xff]
        %v2556 = vld [vmem:[#allocation5 + $0x18] sm:$0xff]
        %v2557 = vld [vmem:[#allocation5 + $0x20] sm:$0xff]
        %v2558 = vld [vmem:[#allocation5 + $0x28] sm:$0xff]
        %v2559 = vld [vmem:[#allocation5 + $0x30] sm:$0xff]
        %v2560 = vld [vmem:[#allocation5 + $0x38] sm:$0xff]
        %v2561 = vld [vmem:[#allocation5 + $0x40] sm:$0xff]
        %v2562 = vld [vmem:[#allocation5 + $0x48] sm:$0xff]
        %v2563 = vld [vmem:[#allocation5 + $0x50] sm:$0xff]
        %v2564 = vld [vmem:[#allocation5 + $0x58] sm:$0xff]
        %v2565 = vld [vmem:[#allocation5 + $0x60] sm:$0xff]
        %v2566 = vld [vmem:[#allocation5 + $0x68] sm:$0xff]
        %v2567 = vld [vmem:[#allocation5 + $0x70] sm:$0xff]
        %v2568 = vld [vmem:[#allocation5 + $0x78] sm:$0xff]
        %2570 = vset.pattern.permute.xlu0 0
        %2571 = vperm.xlu0 %2570, %v2297
        %v2572 = vpop.permute.xlu0 %2571
        %2575 = vset.pattern.permute.xlu0 0
        %2576 = vperm.xlu0 %2575, %v2299
        %v2577 = vpop.permute.xlu0 %2576
        %2580 = vset.pattern.permute.xlu0 0
        %2581 = vperm.xlu0 %2580, %v2301
        %v2582 = vpop.permute.xlu0 %2581
        %2585 = vset.pattern.permute.xlu0 0
        %2586 = vperm.xlu0 %2585, %v2303
        %v2587 = vpop.permute.xlu0 %2586
        %2590 = vset.pattern.permute.xlu0 0
        %2591 = vperm.xlu0 %2590, %v2305
        %v2592 = vpop.permute.xlu0 %2591
        %2595 = vset.pattern.permute.xlu0 0
        %2596 = vperm.xlu0 %2595, %v2307
        %v2597 = vpop.permute.xlu0 %2596
        %2600 = vset.pattern.permute.xlu0 0
        %2601 = vperm.xlu0 %2600, %v2309
        %v2602 = vpop.permute.xlu0 %2601
        %2605 = vset.pattern.permute.xlu0 0
        %2606 = vperm.xlu0 %2605, %v2311
        %v2607 = vpop.permute.xlu0 %2606
        %2610 = vset.pattern.permute.xlu0 0
        %2611 = vperm.xlu0 %2610, %v2313
        %v2612 = vpop.permute.xlu0 %2611
        %2615 = vset.pattern.permute.xlu0 0
        %2616 = vperm.xlu0 %2615, %v2315
        %v2617 = vpop.permute.xlu0 %2616
        %2620 = vset.pattern.permute.xlu0 0
        %2621 = vperm.xlu0 %2620, %v2317
        %v2622 = vpop.permute.xlu0 %2621
        %2625 = vset.pattern.permute.xlu0 0
        %2626 = vperm.xlu0 %2625, %v2319
        %v2627 = vpop.permute.xlu0 %2626
        %2630 = vset.pattern.permute.xlu0 0
        %2631 = vperm.xlu0 %2630, %v2321
        %v2632 = vpop.permute.xlu0 %2631
        %2635 = vset.pattern.permute.xlu0 0
        %2636 = vperm.xlu0 %2635, %v2323
        %v2637 = vpop.permute.xlu0 %2636
        %2640 = vset.pattern.permute.xlu0 0
        %2641 = vperm.xlu0 %2640, %v2325
        %v2642 = vpop.permute.xlu0 %2641
        %2645 = vset.pattern.permute.xlu0 0
        %2646 = vperm.xlu0 %2645, %v2327
        %v2647 = vpop.permute.xlu0 %2646
        %v2649 = vmul.f32 %v2572, %v2553
        %v2650 = vmul.f32 %v2577, %v2554
        %v2651 = vmul.f32 %v2582, %v2555
        %v2652 = vmul.f32 %v2587, %v2556
        %v2653 = vmul.f32 %v2592, %v2557
        %v2654 = vmul.f32 %v2597, %v2558
        %v2655 = vmul.f32 %v2602, %v2559
        %v2656 = vmul.f32 %v2607, %v2560
        %v2657 = vmul.f32 %v2612, %v2561
        %v2658 = vmul.f32 %v2617, %v2562
        %v2659 = vmul.f32 %v2622, %v2563
        %v2660 = vmul.f32 %v2627, %v2564
        %v2661 = vmul.f32 %v2632, %v2565
        %v2662 = vmul.f32 %v2637, %v2566
        %v2663 = vmul.f32 %v2642, %v2567
        %v2664 = vmul.f32 %v2647, %v2568
        %v2665 = vpack.c.bf16 %v2427, %v2425
        %v2666 = vpack.c.bf16 %v2431, %v2429
        %v2667 = vpack.c.bf16 %v2435, %v2433
        %v2668 = vpack.c.bf16 %v2439, %v2437
        %v2669 = vpack.c.bf16 %v2443, %v2441
        %v2670 = vpack.c.bf16 %v2447, %v2445
        %v2671 = vpack.c.bf16 %v2451, %v2449
        %v2672 = vpack.c.bf16 %v2455, %v2453
        %2681 = vrot.lane.b32.xlu0 %v1250, 96
        %v2682 = vpop.permute.xlu0 %2681
        %2683 = vrot.lane.b32.xlu0 %v1251, 96
        %v2684 = vpop.permute.xlu0 %2683
        %2685 = vrot.lane.b32.xlu0 %v1252, 96
        %v2686 = vpop.permute.xlu0 %2685
        %2687 = vrot.lane.b32.xlu0 %v1253, 96
        %v2688 = vpop.permute.xlu0 %2687
        %2689 = vrot.lane.b32.xlu0 %v1254, 96
        %v2690 = vpop.permute.xlu0 %2689
        %2691 = vrot.lane.b32.xlu0 %v1255, 96
        %v2692 = vpop.permute.xlu0 %2691
        %2693 = vrot.lane.b32.xlu0 %v1256, 96
        %v2694 = vpop.permute.xlu0 %2693
        %2695 = vrot.lane.b32.xlu0 %v1257, 96
        %v2696 = vpop.permute.xlu0 %2695
        %2705 = vmatprep.subr.bf16.mxu0 0
        %2706 = vmatpush1.bf16.msra.mxu0 %v2682
        %2707 = vmatprep.subr.bf16.mxu0 0
        %2708 = vmatpush1.bf16.msra.mxu0 %v2684
        %2709 = vmatprep.subr.bf16.mxu0 0
        %2710 = vmatpush1.bf16.msra.mxu0 %v2686
        %2711 = vmatprep.subr.bf16.mxu0 0
        %2712 = vmatpush1.bf16.msra.mxu0 %v2688
        %2713 = vmatprep.subr.bf16.mxu0 0
        %2714 = vmatpush1.bf16.msra.mxu0 %v2690
        %2715 = vmatprep.subr.bf16.mxu0 0
        %2716 = vmatpush1.bf16.msra.mxu0 %v2692
        %2717 = vmatprep.subr.bf16.mxu0 0
        %2718 = vmatpush1.bf16.msra.mxu0 %v2694
        %2719 = vmatprep.subr.bf16.mxu0 0
        %2720 = vmatpush1.bf16.msra.mxu0 %v2696
        %2721 = vmatprep.subr.bf16.mxu0 0
        %2722 = vmatpush1.bf16.msra.mxu0 0
        %2723 = vmatprep.subr.bf16.mxu0 0
        %2724 = vmatpush1.bf16.msra.mxu0 0
        %2725 = vmatprep.subr.bf16.mxu0 0
        %2726 = vmatpush1.bf16.msra.mxu0 0
        %2727 = vmatprep.subr.bf16.mxu0 0
        %2728 = vmatpush1.bf16.msra.mxu0 0
        %2729 = vmatprep.subr.bf16.mxu0 0
        %2730 = vmatpush1.bf16.msra.mxu0 0
        %2731 = vmatprep.subr.bf16.mxu0 0
        %2732 = vmatpush1.bf16.msra.mxu0 0
        %2733 = vmatprep.subr.bf16.mxu0 0
        %2734 = vmatpush1.bf16.msra.mxu0 0
        %2735 = vmatprep.subr.bf16.mxu0 0
        %2736 = vmatpush1.bf16.msra.mxu0 0
        %2737 = vmatprep.mubr.bf16.mxu0 0
        %2738 = vmatmul.mubr.bf16.gmra.mrb[0].mxu0 %v2665
        %v2739 = vpop.f32.mrb[0].mxu0
        %v2740 = vadd.f32 0.0, %v2739
        %v2741 = vpop.f32.mrb[0].mxu0
        %v2742 = vpop.f32.mrb[0].mxu0
        %v2743 = vadd.f32 0.0, %v2742
        %v2744 = vpop.f32.mrb[0].mxu0
        %2745 = vmatprep.mubr.bf16.mxu0 0
        %2746 = vmatmul.mubr.bf16.gmra.mrb[0].mxu0 %v2666
        %v2747 = vpop.f32.mrb[0].mxu0
        %v2748 = vadd.f32 0.0, %v2747
        %v2749 = vpop.f32.mrb[0].mxu0
        %v2750 = vpop.f32.mrb[0].mxu0
        %v2751 = vadd.f32 0.0, %v2750
        %v2752 = vpop.f32.mrb[0].mxu0
        %2753 = vmatprep.mubr.bf16.mxu0 0
        %2754 = vmatmul.mubr.bf16.gmra.mrb[0].mxu0 %v2667
        %v2755 = vpop.f32.mrb[0].mxu0
        %v2756 = vadd.f32 0.0, %v2755
        %v2757 = vpop.f32.mrb[0].mxu0
        %v2758 = vpop.f32.mrb[0].mxu0
        %v2759 = vadd.f32 0.0, %v2758
        %v2760 = vpop.f32.mrb[0].mxu0
        %2761 = vmatprep.mubr.bf16.mxu0 0
        %2762 = vmatmul.mubr.bf16.gmra.mrb[0].mxu0 %v2668
        %v2763 = vpop.f32.mrb[0].mxu0
        %v2764 = vadd.f32 0.0, %v2763
        %v2765 = vpop.f32.mrb[0].mxu0
        %v2766 = vpop.f32.mrb[0].mxu0
        %v2767 = vadd.f32 0.0, %v2766
        %v2768 = vpop.f32.mrb[0].mxu0
        %2769 = vmatprep.mubr.bf16.mxu0 0
        %2770 = vmatmul.mubr.bf16.gmra.mrb[0].mxu0 %v2669
        %v2771 = vpop.f32.mrb[0].mxu0
        %v2772 = vadd.f32 0.0, %v2771
        %v2773 = vpop.f32.mrb[0].mxu0
        %v2774 = vpop.f32.mrb[0].mxu0
        %v2775 = vadd.f32 0.0, %v2774
        %v2776 = vpop.f32.mrb[0].mxu0
        %2777 = vmatprep.mubr.bf16.mxu0 0
        %2778 = vmatmul.mubr.bf16.gmra.mrb[0].mxu0 %v2670
        %v2779 = vpop.f32.mrb[0].mxu0
        %v2780 = vadd.f32 0.0, %v2779
        %v2781 = vpop.f32.mrb[0].mxu0
        %v2782 = vpop.f32.mrb[0].mxu0
        %v2783 = vadd.f32 0.0, %v2782
        %v2784 = vpop.f32.mrb[0].mxu0
        %2785 = vmatprep.mubr.bf16.mxu0 0
        %2786 = vmatmul.mubr.bf16.gmra.mrb[0].mxu0 %v2671
        %v2787 = vpop.f32.mrb[0].mxu0
        %v2788 = vadd.f32 0.0, %v2787
        %v2789 = vpop.f32.mrb[0].mxu0
        %v2790 = vpop.f32.mrb[0].mxu0
        %v2791 = vadd.f32 0.0, %v2790
        %v2792 = vpop.f32.mrb[0].mxu0
        %2793 = vmatprep.mubr.bf16.mxu0 0
        %2794 = vmatmul.mubr.bf16.gmra.mrb[0].mxu0 %v2672
        %v2795 = vpop.f32.mrb[0].mxu0
        %v2796 = vadd.f32 0.0, %v2795
        %v2797 = vpop.f32.mrb[0].mxu0
        %v2798 = vpop.f32.mrb[0].mxu0
        %v2799 = vadd.f32 0.0, %v2798
        %v2800 = vpop.f32.mrb[0].mxu0
        %2801 = vdwg.mxu0
        %2818 = vrot.lane.b32.xlu0 %v2740, 32
        %v2819 = vpop.permute.xlu0 %2818
        %2820 = vrot.lane.b32.xlu0 %v2743, 32
        %v2821 = vpop.permute.xlu0 %2820
        %2822 = vrot.lane.b32.xlu0 %v2748, 32
        %v2823 = vpop.permute.xlu0 %2822
        %2824 = vrot.lane.b32.xlu0 %v2751, 32
        %v2825 = vpop.permute.xlu0 %2824
        %2826 = vrot.lane.b32.xlu0 %v2756, 32
        %v2827 = vpop.permute.xlu0 %2826
        %2828 = vrot.lane.b32.xlu0 %v2759, 32
        %v2829 = vpop.permute.xlu0 %2828
        %2830 = vrot.lane.b32.xlu0 %v2764, 32
        %v2831 = vpop.permute.xlu0 %2830
        %2832 = vrot.lane.b32.xlu0 %v2767, 32
        %v2833 = vpop.permute.xlu0 %2832
        %2834 = vrot.lane.b32.xlu0 %v2772, 32
        %v2835 = vpop.permute.xlu0 %2834
        %2836 = vrot.lane.b32.xlu0 %v2775, 32
        %v2837 = vpop.permute.xlu0 %2836
        %2838 = vrot.lane.b32.xlu0 %v2780, 32
        %v2839 = vpop.permute.xlu0 %2838
        %2840 = vrot.lane.b32.xlu0 %v2783, 32
        %v2841 = vpop.permute.xlu0 %2840
        %2842 = vrot.lane.b32.xlu0 %v2788, 32
        %v2843 = vpop.permute.xlu0 %2842
        %2844 = vrot.lane.b32.xlu0 %v2791, 32
        %v2845 = vpop.permute.xlu0 %2844
        %2846 = vrot.lane.b32.xlu0 %v2796, 32
        %v2847 = vpop.permute.xlu0 %2846
        %2848 = vrot.lane.b32.xlu0 %v2799, 32
        %v2849 = vpop.permute.xlu0 %2848
        %v2866 = vadd.f32 %v2649, %v2819
        %v2867 = vadd.f32 %v2650, %v2821
        %v2868 = vadd.f32 %v2651, %v2823
        %v2869 = vadd.f32 %v2652, %v2825
        %v2870 = vadd.f32 %v2653, %v2827
        %v2871 = vadd.f32 %v2654, %v2829
        %v2872 = vadd.f32 %v2655, %v2831
        %v2873 = vadd.f32 %v2656, %v2833
        %v2874 = vadd.f32 %v2657, %v2835
        %v2875 = vadd.f32 %v2658, %v2837
        %v2876 = vadd.f32 %v2659, %v2839
        %v2877 = vadd.f32 %v2660, %v2841
        %v2878 = vadd.f32 %v2661, %v2843
        %v2879 = vadd.f32 %v2662, %v2845
        %v2880 = vadd.f32 %v2663, %v2847
        %v2881 = vadd.f32 %v2664, %v2849
        %vm2882 = vcmask 523520
        %2883 = vst.msk [vmem:[#allocation5] sm:$0xff] %vm2882, %v2866
        %2884 = vst.msk [vmem:[#allocation5 + $0x8] sm:$0xff] %vm2882, %v2867
        %2885 = vst.msk [vmem:[#allocation5 + $0x10] sm:$0xff] %vm2882, %v2868
        %2886 = vst.msk [vmem:[#allocation5 + $0x18] sm:$0xff] %vm2882, %v2869
        %2887 = vst.msk [vmem:[#allocation5 + $0x20] sm:$0xff] %vm2882, %v2870
        %2888 = vst.msk [vmem:[#allocation5 + $0x28] sm:$0xff] %vm2882, %v2871
        %2889 = vst.msk [vmem:[#allocation5 + $0x30] sm:$0xff] %vm2882, %v2872
        %2890 = vst.msk [vmem:[#allocation5 + $0x38] sm:$0xff] %vm2882, %v2873
        %2891 = vst.msk [vmem:[#allocation5 + $0x40] sm:$0xff] %vm2882, %v2874
        %2892 = vst.msk [vmem:[#allocation5 + $0x48] sm:$0xff] %vm2882, %v2875
        %2893 = vst.msk [vmem:[#allocation5 + $0x50] sm:$0xff] %vm2882, %v2876
        %2894 = vst.msk [vmem:[#allocation5 + $0x58] sm:$0xff] %vm2882, %v2877
        %2895 = vst.msk [vmem:[#allocation5 + $0x60] sm:$0xff] %vm2882, %v2878
        %2896 = vst.msk [vmem:[#allocation5 + $0x68] sm:$0xff] %vm2882, %v2879
        %2897 = vst.msk [vmem:[#allocation5 + $0x70] sm:$0xff] %vm2882, %v2880
        %2898 = vst.msk [vmem:[#allocation5 + $0x78] sm:$0xff] %vm2882, %v2881
        %2899 = vst.msk [vmem:[%s2215] sm:$0xff] %vm1732, %v2264
        %2900 = vst.msk [vmem:[%s2215 + $0x8] sm:$0xff] %vm1732, %v2265
        %2901 = vst.msk [vmem:[%s2215 + $0x10] sm:$0xff] %vm1732, %v2266
        %2902 = vst.msk [vmem:[%s2215 + $0x18] sm:$0xff] %vm1732, %v2267
        %2903 = vst.msk [vmem:[%s2215 + $0x20] sm:$0xff] %vm1732, %v2268
        %2904 = vst.msk [vmem:[%s2215 + $0x28] sm:$0xff] %vm1732, %v2269
        %2905 = vst.msk [vmem:[%s2215 + $0x30] sm:$0xff] %vm1732, %v2270
        %2906 = vst.msk [vmem:[%s2215 + $0x38] sm:$0xff] %vm1732, %v2271
        %2907 = vst.msk [vmem:[%s2215 + $0x40] sm:$0xff] %vm1732, %v2272
        %2908 = vst.msk [vmem:[%s2215 + $0x48] sm:$0xff] %vm1732, %v2273
        %2909 = vst.msk [vmem:[%s2215 + $0x50] sm:$0xff] %vm1732, %v2274
        %2910 = vst.msk [vmem:[%s2215 + $0x58] sm:$0xff] %vm1732, %v2275
        %2911 = vst.msk [vmem:[%s2215 + $0x60] sm:$0xff] %vm1732, %v2276
        %2912 = vst.msk [vmem:[%s2215 + $0x68] sm:$0xff] %vm1732, %v2277
        %2913 = vst.msk [vmem:[%s2215 + $0x70] sm:$0xff] %vm1732, %v2278
        %2914 = vst.msk [vmem:[%s2215 + $0x78] sm:$0xff] %vm1732, %v2279
        %v2915 = vld [vmem:[#allocation2] sm:$0xff]
        %v2916 = vld [vmem:[#allocation2 + $0x8] sm:$0xff]
        %v2917 = vld [vmem:[#allocation2 + $0x10] sm:$0xff]
        %v2918 = vld [vmem:[#allocation2 + $0x18] sm:$0xff]
        %v2919 = vld [vmem:[#allocation2 + $0x20] sm:$0xff]
        %v2920 = vld [vmem:[#allocation2 + $0x28] sm:$0xff]
        %v2921 = vld [vmem:[#allocation2 + $0x30] sm:$0xff]
        %v2922 = vld [vmem:[#allocation2 + $0x38] sm:$0xff]
        %2931 = vrot.lane.b32.xlu0 %v2915, 64
        %v2932 = vpop.permute.xlu0 %2931
        %2933 = vrot.lane.b32.xlu0 %v2916, 64
        %v2934 = vpop.permute.xlu0 %2933
        %2935 = vrot.lane.b32.xlu0 %v2917, 64
        %v2936 = vpop.permute.xlu0 %2935
        %2937 = vrot.lane.b32.xlu0 %v2918, 64
        %v2938 = vpop.permute.xlu0 %2937
        %2939 = vrot.lane.b32.xlu0 %v2919, 64
        %v2940 = vpop.permute.xlu0 %2939
        %2941 = vrot.lane.b32.xlu0 %v2920, 64
        %v2942 = vpop.permute.xlu0 %2941
        %2943 = vrot.lane.b32.xlu0 %v2921, 64
        %v2944 = vpop.permute.xlu0 %2943
        %2945 = vrot.lane.b32.xlu0 %v2922, 64
        %v2946 = vpop.permute.xlu0 %2945
        %2947 = vrot.lane.b32.xlu0 %v1074, 64
        %v2948 = vpop.permute.xlu0 %2947
        %2949 = vrot.lane.b32.xlu0 %v1075, 64
        %v2950 = vpop.permute.xlu0 %2949
        %2951 = vrot.lane.b32.xlu0 %v1076, 64
        %v2952 = vpop.permute.xlu0 %2951
        %2953 = vrot.lane.b32.xlu0 %v1077, 64
        %v2954 = vpop.permute.xlu0 %2953
        %2955 = vrot.lane.b32.xlu0 %v1078, 64
        %v2956 = vpop.permute.xlu0 %2955
        %2957 = vrot.lane.b32.xlu0 %v1079, 64
        %v2958 = vpop.permute.xlu0 %2957
        %2959 = vrot.lane.b32.xlu0 %v1080, 64
        %v2960 = vpop.permute.xlu0 %2959
        %2961 = vrot.lane.b32.xlu0 %v1081, 64
        %v2962 = vpop.permute.xlu0 %2961
        %v2964 = vsel %vm1266, %v2932, 0
        %v2967 = vsel %vm1266, %v2934, 0
        %v2970 = vsel %vm1266, %v2936, 0
        %v2973 = vsel %vm1266, %v2938, 0
        %v2976 = vsel %vm1266, %v2940, 0
        %v2979 = vsel %vm1266, %v2942, 0
        %v2982 = vsel %vm1266, %v2944, 0
        %v2985 = vsel %vm1266, %v2946, 0
        %v2988 = vsel %vm1266, %v2948, 0
        %v2991 = vsel %vm1266, %v2950, 0
        %v2994 = vsel %vm1266, %v2952, 0
        %v2997 = vsel %vm1266, %v2954, 0
        %v3000 = vsel %vm1266, %v2956, 0
        %v3003 = vsel %vm1266, %v2958, 0
        %v3006 = vsel %vm1266, %v2960, 0
        %v3009 = vsel %vm1266, %v2962, 0
        %3011 = vmatprep.subr.bf16.mxu0 0
        %3012 = vmatpush1.bf16.xpose.msra.mxu0 %v2988
        %3013 = vmatprep.subr.bf16.mxu0 0
        %3014 = vmatpush1.bf16.xpose.msra.mxu0 %v2991
        %3015 = vmatprep.subr.bf16.mxu0 0
        %3016 = vmatpush1.bf16.xpose.msra.mxu0 %v2994
        %3017 = vmatprep.subr.bf16.mxu0 0
        %3018 = vmatpush1.bf16.xpose.msra.mxu0 %v2997
        %3019 = vmatprep.subr.bf16.mxu0 0
        %3020 = vmatpush1.bf16.xpose.msra.mxu0 %v3000
        %3021 = vmatprep.subr.bf16.mxu0 0
        %3022 = vmatpush1.bf16.xpose.msra.mxu0 %v3003
        %3023 = vmatprep.subr.bf16.mxu0 0
        %3024 = vmatpush1.bf16.xpose.msra.mxu0 %v3006
        %3025 = vmatprep.subr.bf16.mxu0 0
        %3026 = vmatpush1.bf16.xpose.msra.mxu0 %v3009
        %3027 = vmatprep.subr.bf16.mxu0 0
        %3028 = vmatpush1.bf16.xpose.msra.mxu0 0
        %3029 = vmatprep.subr.bf16.mxu0 0
        %3030 = vmatpush1.bf16.xpose.msra.mxu0 0
        %3031 = vmatprep.subr.bf16.mxu0 0
        %3032 = vmatpush1.bf16.xpose.msra.mxu0 0
        %3033 = vmatprep.subr.bf16.mxu0 0
        %3034 = vmatpush1.bf16.xpose.msra.mxu0 0
        %3035 = vmatprep.subr.bf16.mxu0 0
        %3036 = vmatpush1.bf16.xpose.msra.mxu0 0
        %3037 = vmatprep.subr.bf16.mxu0 0
        %3038 = vmatpush1.bf16.xpose.msra.mxu0 0
        %3039 = vmatprep.subr.bf16.mxu0 0
        %3040 = vmatpush1.bf16.xpose.msra.mxu0 0
        %3041 = vmatprep.subr.bf16.mxu0 0
        %3042 = vmatpush1.bf16.xpose.msra.mxu0 0
        %3043 = vmatprep.mubr.bf16.mxu0 0
        %3044 = vmatmul.mubr.bf16.gmra.mrb[0].mxu0 %v2964
        %v3045 = vpop.f32.mrb[0].mxu0
        %v3046 = vadd.f32 0.0, %v3045
        %v3047 = vpop.f32.mrb[0].mxu0
        %v3048 = vpop.f32.mrb[0].mxu0
        %v3049 = vadd.f32 0.0, %v3048
        %v3050 = vpop.f32.mrb[0].mxu0
        %3051 = vmatprep.mubr.bf16.mxu0 0
        %3052 = vmatmul.mubr.bf16.gmra.mrb[0].mxu0 %v2967
        %v3053 = vpop.f32.mrb[0].mxu0
        %v3054 = vadd.f32 0.0, %v3053
        %v3055 = vpop.f32.mrb[0].mxu0
        %v3056 = vpop.f32.mrb[0].mxu0
        %v3057 = vadd.f32 0.0, %v3056
        %v3058 = vpop.f32.mrb[0].mxu0
        %3059 = vmatprep.mubr.bf16.mxu0 0
        %3060 = vmatmul.mubr.bf16.gmra.mrb[0].mxu0 %v2970
        %v3061 = vpop.f32.mrb[0].mxu0
        %v3062 = vadd.f32 0.0, %v3061
        %v3063 = vpop.f32.mrb[0].mxu0
        %v3064 = vpop.f32.mrb[0].mxu0
        %v3065 = vadd.f32 0.0, %v3064
        %v3066 = vpop.f32.mrb[0].mxu0
        %3067 = vmatprep.mubr.bf16.mxu0 0
        %3068 = vmatmul.mubr.bf16.gmra.mrb[0].mxu0 %v2973
        %v3069 = vpop.f32.mrb[0].mxu0
        %v3070 = vadd.f32 0.0, %v3069
        %v3071 = vpop.f32.mrb[0].mxu0
        %v3072 = vpop.f32.mrb[0].mxu0
        %v3073 = vadd.f32 0.0, %v3072
        %v3074 = vpop.f32.mrb[0].mxu0
        %3075 = vmatprep.mubr.bf16.mxu0 0
        %3076 = vmatmul.mubr.bf16.gmra.mrb[0].mxu0 %v2976
        %v3077 = vpop.f32.mrb[0].mxu0
        %v3078 = vadd.f32 0.0, %v3077
        %v3079 = vpop.f32.mrb[0].mxu0
        %v3080 = vpop.f32.mrb[0].mxu0
        %v3081 = vadd.f32 0.0, %v3080
        %v3082 = vpop.f32.mrb[0].mxu0
        %3083 = vmatprep.mubr.bf16.mxu0 0
        %3084 = vmatmul.mubr.bf16.gmra.mrb[0].mxu0 %v2979
        %v3085 = vpop.f32.mrb[0].mxu0
        %v3086 = vadd.f32 0.0, %v3085
        %v3087 = vpop.f32.mrb[0].mxu0
        %v3088 = vpop.f32.mrb[0].mxu0
        %v3089 = vadd.f32 0.0, %v3088
        %v3090 = vpop.f32.mrb[0].mxu0
        %3091 = vmatprep.mubr.bf16.mxu0 0
        %3092 = vmatmul.mubr.bf16.gmra.mrb[0].mxu0 %v2982
        %v3093 = vpop.f32.mrb[0].mxu0
        %v3094 = vadd.f32 0.0, %v3093
        %v3095 = vpop.f32.mrb[0].mxu0
        %v3096 = vpop.f32.mrb[0].mxu0
        %v3097 = vadd.f32 0.0, %v3096
        %v3098 = vpop.f32.mrb[0].mxu0
        %3099 = vmatprep.mubr.bf16.mxu0 0
        %3100 = vmatmul.mubr.bf16.gmra.mrb[0].mxu0 %v2985
        %v3101 = vpop.f32.mrb[0].mxu0
        %v3102 = vadd.f32 0.0, %v3101
        %v3103 = vpop.f32.mrb[0].mxu0
        %v3104 = vpop.f32.mrb[0].mxu0
        %v3105 = vadd.f32 0.0, %v3104
        %v3106 = vpop.f32.mrb[0].mxu0
        %3107 = vdwg.mxu0
        %s3108 = scalar_lea.vmem [#allocation3], 256
        %v3109 = vld [vmem:[%s3108] sm:$0xff]
        %v3110 = vld [vmem:[%s3108 + $0x8] sm:$0xff]
        %v3111 = vld [vmem:[%s3108 + $0x10] sm:$0xff]
        %v3112 = vld [vmem:[%s3108 + $0x18] sm:$0xff]
        %v3113 = vld [vmem:[%s3108 + $0x20] sm:$0xff]
        %v3114 = vld [vmem:[%s3108 + $0x28] sm:$0xff]
        %v3115 = vld [vmem:[%s3108 + $0x30] sm:$0xff]
        %v3116 = vld [vmem:[%s3108 + $0x38] sm:$0xff]
        %v3117 = vld [vmem:[%s3108 + $0x40] sm:$0xff]
        %v3118 = vld [vmem:[%s3108 + $0x48] sm:$0xff]
        %v3119 = vld [vmem:[%s3108 + $0x50] sm:$0xff]
        %v3120 = vld [vmem:[%s3108 + $0x58] sm:$0xff]
        %v3121 = vld [vmem:[%s3108 + $0x60] sm:$0xff]
        %v3122 = vld [vmem:[%s3108 + $0x68] sm:$0xff]
        %v3123 = vld [vmem:[%s3108 + $0x70] sm:$0xff]
        %v3124 = vld [vmem:[%s3108 + $0x78] sm:$0xff]
        %3125 = vmax.xlane.f32.xlu0 %v3046
        %v3126 = vpop.xlane.xlu0 %3125
        %3127 = vmax.xlane.f32.xlu0 %v3049
        %v3128 = vpop.xlane.xlu0 %3127
        %3129 = vmax.xlane.f32.xlu0 %v3054
        %v3130 = vpop.xlane.xlu0 %3129
        %3131 = vmax.xlane.f32.xlu0 %v3057
        %v3132 = vpop.xlane.xlu0 %3131
        %3133 = vmax.xlane.f32.xlu0 %v3062
        %v3134 = vpop.xlane.xlu0 %3133
        %3135 = vmax.xlane.f32.xlu0 %v3065
        %v3136 = vpop.xlane.xlu0 %3135
        %3137 = vmax.xlane.f32.xlu0 %v3070
        %v3138 = vpop.xlane.xlu0 %3137
        %3139 = vmax.xlane.f32.xlu0 %v3073
        %v3140 = vpop.xlane.xlu0 %3139
        %3141 = vmax.xlane.f32.xlu0 %v3078
        %v3142 = vpop.xlane.xlu0 %3141
        %3143 = vmax.xlane.f32.xlu0 %v3081
        %v3144 = vpop.xlane.xlu0 %3143
        %3145 = vmax.xlane.f32.xlu0 %v3086
        %v3146 = vpop.xlane.xlu0 %3145
        %3147 = vmax.xlane.f32.xlu0 %v3089
        %v3148 = vpop.xlane.xlu0 %3147
        %3149 = vmax.xlane.f32.xlu0 %v3094
        %v3150 = vpop.xlane.xlu0 %3149
        %3151 = vmax.xlane.f32.xlu0 %v3097
        %v3152 = vpop.xlane.xlu0 %3151
        %3153 = vmax.xlane.f32.xlu0 %v3102
        %v3154 = vpop.xlane.xlu0 %3153
        %3155 = vmax.xlane.f32.xlu0 %v3105
        %v3156 = vpop.xlane.xlu0 %3155
        %v3157 = vmax.f32 %v3109, %v3126
        %v3158 = vmax.f32 %v3110, %v3128
        %v3159 = vmax.f32 %v3111, %v3130
        %v3160 = vmax.f32 %v3112, %v3132
        %v3161 = vmax.f32 %v3113, %v3134
        %v3162 = vmax.f32 %v3114, %v3136
        %v3163 = vmax.f32 %v3115, %v3138
        %v3164 = vmax.f32 %v3116, %v3140
        %v3165 = vmax.f32 %v3117, %v3142
        %v3166 = vmax.f32 %v3118, %v3144
        %v3167 = vmax.f32 %v3119, %v3146
        %v3168 = vmax.f32 %v3120, %v3148
        %v3169 = vmax.f32 %v3121, %v3150
        %v3170 = vmax.f32 %v3122, %v3152
        %v3171 = vmax.f32 %v3123, %v3154
        %v3172 = vmax.f32 %v3124, %v3156
        %v3173 = vsub.f32 %v3109, %v3157
        %v3174 = vsub.f32 %v3110, %v3158
        %v3175 = vsub.f32 %v3111, %v3159
        %v3176 = vsub.f32 %v3112, %v3160
        %v3177 = vsub.f32 %v3113, %v3161
        %v3178 = vsub.f32 %v3114, %v3162
        %v3179 = vsub.f32 %v3115, %v3163
        %v3180 = vsub.f32 %v3116, %v3164
        %v3181 = vsub.f32 %v3117, %v3165
        %v3182 = vsub.f32 %v3118, %v3166
        %v3183 = vsub.f32 %v3119, %v3167
        %v3184 = vsub.f32 %v3120, %v3168
        %v3185 = vsub.f32 %v3121, %v3169
        %v3186 = vsub.f32 %v3122, %v3170
        %v3187 = vsub.f32 %v3123, %v3171
        %v3188 = vsub.f32 %v3124, %v3172
        %v3189 = vmul.f32 %v3173, 1.442695
        %v3190 = vpow.pop %v3189
        %v3191 = vmul.f32 %v3174, 1.442695
        %v3192 = vpow.pop %v3191
        %v3193 = vmul.f32 %v3175, 1.442695
        %v3194 = vpow.pop %v3193
        %v3195 = vmul.f32 %v3176, 1.442695
        %v3196 = vpow.pop %v3195
        %v3197 = vmul.f32 %v3177, 1.442695
        %v3198 = vpow.pop %v3197
        %v3199 = vmul.f32 %v3178, 1.442695
        %v3200 = vpow.pop %v3199
        %v3201 = vmul.f32 %v3179, 1.442695
        %v3202 = vpow.pop %v3201
        %v3203 = vmul.f32 %v3180, 1.442695
        %v3204 = vpow.pop %v3203
        %v3205 = vmul.f32 %v3181, 1.442695
        %v3206 = vpow.pop %v3205
        %v3207 = vmul.f32 %v3182, 1.442695
        %v3208 = vpow.pop %v3207
        %v3209 = vmul.f32 %v3183, 1.442695
        %v3210 = vpow.pop %v3209
        %v3211 = vmul.f32 %v3184, 1.442695
        %v3212 = vpow.pop %v3211
        %v3213 = vmul.f32 %v3185, 1.442695
        %v3214 = vpow.pop %v3213
        %v3215 = vmul.f32 %v3186, 1.442695
        %v3216 = vpow.pop %v3215
        %v3217 = vmul.f32 %v3187, 1.442695
        %v3218 = vpow.pop %v3217
        %v3219 = vmul.f32 %v3188, 1.442695
        %v3220 = vpow.pop %v3219
        %3222 = vset.pattern.permute.xlu0 0
        %3223 = vperm.xlu0 %3222, %v3157
        %v3224 = vpop.permute.xlu0 %3223
        %3227 = vset.pattern.permute.xlu0 0
        %3228 = vperm.xlu0 %3227, %v3158
        %v3229 = vpop.permute.xlu0 %3228
        %3232 = vset.pattern.permute.xlu0 0
        %3233 = vperm.xlu0 %3232, %v3159
        %v3234 = vpop.permute.xlu0 %3233
        %3237 = vset.pattern.permute.xlu0 0
        %3238 = vperm.xlu0 %3237, %v3160
        %v3239 = vpop.permute.xlu0 %3238
        %3242 = vset.pattern.permute.xlu0 0
        %3243 = vperm.xlu0 %3242, %v3161
        %v3244 = vpop.permute.xlu0 %3243
        %3247 = vset.pattern.permute.xlu0 0
        %3248 = vperm.xlu0 %3247, %v3162
        %v3249 = vpop.permute.xlu0 %3248
        %3252 = vset.pattern.permute.xlu0 0
        %3253 = vperm.xlu0 %3252, %v3163
        %v3254 = vpop.permute.xlu0 %3253
        %3257 = vset.pattern.permute.xlu0 0
        %3258 = vperm.xlu0 %3257, %v3164
        %v3259 = vpop.permute.xlu0 %3258
        %3262 = vset.pattern.permute.xlu0 0
        %3263 = vperm.xlu0 %3262, %v3165
        %v3264 = vpop.permute.xlu0 %3263
        %3267 = vset.pattern.permute.xlu0 0
        %3268 = vperm.xlu0 %3267, %v3166
        %v3269 = vpop.permute.xlu0 %3268
        %3272 = vset.pattern.permute.xlu0 0
        %3273 = vperm.xlu0 %3272, %v3167
        %v3274 = vpop.permute.xlu0 %3273
        %3277 = vset.pattern.permute.xlu0 0
        %3278 = vperm.xlu0 %3277, %v3168
        %v3279 = vpop.permute.xlu0 %3278
        %3282 = vset.pattern.permute.xlu0 0
        %3283 = vperm.xlu0 %3282, %v3169
        %v3284 = vpop.permute.xlu0 %3283
        %3287 = vset.pattern.permute.xlu0 0
        %3288 = vperm.xlu0 %3287, %v3170
        %v3289 = vpop.permute.xlu0 %3288
        %3292 = vset.pattern.permute.xlu0 0
        %3293 = vperm.xlu0 %3292, %v3171
        %v3294 = vpop.permute.xlu0 %3293
        %3297 = vset.pattern.permute.xlu0 0
        %3298 = vperm.xlu0 %3297, %v3172
        %v3299 = vpop.permute.xlu0 %3298
        %v3301 = vsub.f32 %v3046, %v3224
        %v3302 = vsub.f32 %v3049, %v3229
        %v3303 = vsub.f32 %v3054, %v3234
        %v3304 = vsub.f32 %v3057, %v3239
        %v3305 = vsub.f32 %v3062, %v3244
        %v3306 = vsub.f32 %v3065, %v3249
        %v3307 = vsub.f32 %v3070, %v3254
        %v3308 = vsub.f32 %v3073, %v3259
        %v3309 = vsub.f32 %v3078, %v3264
        %v3310 = vsub.f32 %v3081, %v3269
        %v3311 = vsub.f32 %v3086, %v3274
        %v3312 = vsub.f32 %v3089, %v3279
        %v3313 = vsub.f32 %v3094, %v3284
        %v3314 = vsub.f32 %v3097, %v3289
        %v3315 = vsub.f32 %v3102, %v3294
        %v3316 = vsub.f32 %v3105, %v3299
        %v3317 = vmul.f32 %v3301, 1.442695
        %v3318 = vpow.pop %v3317
        %v3319 = vmul.f32 %v3302, 1.442695
        %v3320 = vpow.pop %v3319
        %v3321 = vmul.f32 %v3303, 1.442695
        %v3322 = vpow.pop %v3321
        %v3323 = vmul.f32 %v3304, 1.442695
        %v3324 = vpow.pop %v3323
        %v3325 = vmul.f32 %v3305, 1.442695
        %v3326 = vpow.pop %v3325
        %v3327 = vmul.f32 %v3306, 1.442695
        %v3328 = vpow.pop %v3327
        %v3329 = vmul.f32 %v3307, 1.442695
        %v3330 = vpow.pop %v3329
        %v3331 = vmul.f32 %v3308, 1.442695
        %v3332 = vpow.pop %v3331
        %v3333 = vmul.f32 %v3309, 1.442695
        %v3334 = vpow.pop %v3333
        %v3335 = vmul.f32 %v3310, 1.442695
        %v3336 = vpow.pop %v3335
        %v3337 = vmul.f32 %v3311, 1.442695
        %v3338 = vpow.pop %v3337
        %v3339 = vmul.f32 %v3312, 1.442695
        %v3340 = vpow.pop %v3339
        %v3341 = vmul.f32 %v3313, 1.442695
        %v3342 = vpow.pop %v3341
        %v3343 = vmul.f32 %v3314, 1.442695
        %v3344 = vpow.pop %v3343
        %v3345 = vmul.f32 %v3315, 1.442695
        %v3346 = vpow.pop %v3345
        %v3347 = vmul.f32 %v3316, 1.442695
        %v3348 = vpow.pop %v3347
        %s3349 = scalar_lea.vmem [#allocation4], 256
        %v3350 = vld [vmem:[%s3349] sm:$0xff]
        %v3351 = vld [vmem:[%s3349 + $0x8] sm:$0xff]
        %v3352 = vld [vmem:[%s3349 + $0x10] sm:$0xff]
        %v3353 = vld [vmem:[%s3349 + $0x18] sm:$0xff]
        %v3354 = vld [vmem:[%s3349 + $0x20] sm:$0xff]
        %v3355 = vld [vmem:[%s3349 + $0x28] sm:$0xff]
        %v3356 = vld [vmem:[%s3349 + $0x30] sm:$0xff]
        %v3357 = vld [vmem:[%s3349 + $0x38] sm:$0xff]
        %v3358 = vld [vmem:[%s3349 + $0x40] sm:$0xff]
        %v3359 = vld [vmem:[%s3349 + $0x48] sm:$0xff]
        %v3360 = vld [vmem:[%s3349 + $0x50] sm:$0xff]
        %v3361 = vld [vmem:[%s3349 + $0x58] sm:$0xff]
        %v3362 = vld [vmem:[%s3349 + $0x60] sm:$0xff]
        %v3363 = vld [vmem:[%s3349 + $0x68] sm:$0xff]
        %v3364 = vld [vmem:[%s3349 + $0x70] sm:$0xff]
        %v3365 = vld [vmem:[%s3349 + $0x78] sm:$0xff]
        %v3366 = vmul.f32 %v3190, %v3350
        %v3367 = vmul.f32 %v3192, %v3351
        %v3368 = vmul.f32 %v3194, %v3352
        %v3369 = vmul.f32 %v3196, %v3353
        %v3370 = vmul.f32 %v3198, %v3354
        %v3371 = vmul.f32 %v3200, %v3355
        %v3372 = vmul.f32 %v3202, %v3356
        %v3373 = vmul.f32 %v3204, %v3357
        %v3374 = vmul.f32 %v3206, %v3358
        %v3375 = vmul.f32 %v3208, %v3359
        %v3376 = vmul.f32 %v3210, %v3360
        %v3377 = vmul.f32 %v3212, %v3361
        %v3378 = vmul.f32 %v3214, %v3362
        %v3379 = vmul.f32 %v3216, %v3363
        %v3380 = vmul.f32 %v3218, %v3364
        %v3381 = vmul.f32 %v3220, %v3365
        %3382 = vadd.xlane.f32.xlu0 %v3318
        %v3383 = vpop.xlane.xlu0 %3382
        %3384 = vadd.xlane.f32.xlu0 %v3320
        %v3385 = vpop.xlane.xlu0 %3384
        %3386 = vadd.xlane.f32.xlu0 %v3322
        %v3387 = vpop.xlane.xlu0 %3386
        %3388 = vadd.xlane.f32.xlu0 %v3324
        %v3389 = vpop.xlane.xlu0 %3388
        %3390 = vadd.xlane.f32.xlu0 %v3326
        %v3391 = vpop.xlane.xlu0 %3390
        %3392 = vadd.xlane.f32.xlu0 %v3328
        %v3393 = vpop.xlane.xlu0 %3392
        %3394 = vadd.xlane.f32.xlu0 %v3330
        %v3395 = vpop.xlane.xlu0 %3394
        %3396 = vadd.xlane.f32.xlu0 %v3332
        %v3397 = vpop.xlane.xlu0 %3396
        %3398 = vadd.xlane.f32.xlu0 %v3334
        %v3399 = vpop.xlane.xlu0 %3398
        %3400 = vadd.xlane.f32.xlu0 %v3336
        %v3401 = vpop.xlane.xlu0 %3400
        %3402 = vadd.xlane.f32.xlu0 %v3338
        %v3403 = vpop.xlane.xlu0 %3402
        %3404 = vadd.xlane.f32.xlu0 %v3340
        %v3405 = vpop.xlane.xlu0 %3404
        %3406 = vadd.xlane.f32.xlu0 %v3342
        %v3407 = vpop.xlane.xlu0 %3406
        %3408 = vadd.xlane.f32.xlu0 %v3344
        %v3409 = vpop.xlane.xlu0 %3408
        %3410 = vadd.xlane.f32.xlu0 %v3346
        %v3411 = vpop.xlane.xlu0 %3410
        %3412 = vadd.xlane.f32.xlu0 %v3348
        %v3413 = vpop.xlane.xlu0 %3412
        %v3414 = vadd.f32 %v3366, %v3383
        %v3415 = vadd.f32 %v3367, %v3385
        %v3416 = vadd.f32 %v3368, %v3387
        %v3417 = vadd.f32 %v3369, %v3389
        %v3418 = vadd.f32 %v3370, %v3391
        %v3419 = vadd.f32 %v3371, %v3393
        %v3420 = vadd.f32 %v3372, %v3395
        %v3421 = vadd.f32 %v3373, %v3397
        %v3422 = vadd.f32 %v3374, %v3399
        %v3423 = vadd.f32 %v3375, %v3401
        %v3424 = vadd.f32 %v3376, %v3403
        %v3425 = vadd.f32 %v3377, %v3405
        %v3426 = vadd.f32 %v3378, %v3407
        %v3427 = vadd.f32 %v3379, %v3409
        %v3428 = vadd.f32 %v3380, %v3411
        %v3429 = vadd.f32 %v3381, %v3413
        %3430 = vst.msk [vmem:[%s3349] sm:$0xff] %vm1732, %v3414
        %3431 = vst.msk [vmem:[%s3349 + $0x8] sm:$0xff] %vm1732, %v3415
        %3432 = vst.msk [vmem:[%s3349 + $0x10] sm:$0xff] %vm1732, %v3416
        %3433 = vst.msk [vmem:[%s3349 + $0x18] sm:$0xff] %vm1732, %v3417
        %3434 = vst.msk [vmem:[%s3349 + $0x20] sm:$0xff] %vm1732, %v3418
        %3435 = vst.msk [vmem:[%s3349 + $0x28] sm:$0xff] %vm1732, %v3419
        %3436 = vst.msk [vmem:[%s3349 + $0x30] sm:$0xff] %vm1732, %v3420
        %3437 = vst.msk [vmem:[%s3349 + $0x38] sm:$0xff] %vm1732, %v3421
        %3438 = vst.msk [vmem:[%s3349 + $0x40] sm:$0xff] %vm1732, %v3422
        %3439 = vst.msk [vmem:[%s3349 + $0x48] sm:$0xff] %vm1732, %v3423
        %3440 = vst.msk [vmem:[%s3349 + $0x50] sm:$0xff] %vm1732, %v3424
        %3441 = vst.msk [vmem:[%s3349 + $0x58] sm:$0xff] %vm1732, %v3425
        %3442 = vst.msk [vmem:[%s3349 + $0x60] sm:$0xff] %vm1732, %v3426
        %3443 = vst.msk [vmem:[%s3349 + $0x68] sm:$0xff] %vm1732, %v3427
        %3444 = vst.msk [vmem:[%s3349 + $0x70] sm:$0xff] %vm1732, %v3428
        %3445 = vst.msk [vmem:[%s3349 + $0x78] sm:$0xff] %vm1732, %v3429
        %v3446 = vld [vmem:[#allocation5] sm:$0xff]
        %v3447 = vld [vmem:[#allocation5 + $0x8] sm:$0xff]
        %v3448 = vld [vmem:[#allocation5 + $0x10] sm:$0xff]
        %v3449 = vld [vmem:[#allocation5 + $0x18] sm:$0xff]
        %v3450 = vld [vmem:[#allocation5 + $0x20] sm:$0xff]
        %v3451 = vld [vmem:[#allocation5 + $0x28] sm:$0xff]
        %v3452 = vld [vmem:[#allocation5 + $0x30] sm:$0xff]
        %v3453 = vld [vmem:[#allocation5 + $0x38] sm:$0xff]
        %v3454 = vld [vmem:[#allocation5 + $0x40] sm:$0xff]
        %v3455 = vld [vmem:[#allocation5 + $0x48] sm:$0xff]
        %v3456 = vld [vmem:[#allocation5 + $0x50] sm:$0xff]
        %v3457 = vld [vmem:[#allocation5 + $0x58] sm:$0xff]
        %v3458 = vld [vmem:[#allocation5 + $0x60] sm:$0xff]
        %v3459 = vld [vmem:[#allocation5 + $0x68] sm:$0xff]
        %v3460 = vld [vmem:[#allocation5 + $0x70] sm:$0xff]
        %v3461 = vld [vmem:[#allocation5 + $0x78] sm:$0xff]
        %3463 = vset.pattern.permute.xlu0 0
        %3464 = vperm.xlu0 %3463, %v3190
        %v3465 = vpop.permute.xlu0 %3464
        %3468 = vset.pattern.permute.xlu0 0
        %3469 = vperm.xlu0 %3468, %v3192
        %v3470 = vpop.permute.xlu0 %3469
        %3473 = vset.pattern.permute.xlu0 0
        %3474 = vperm.xlu0 %3473, %v3194
        %v3475 = vpop.permute.xlu0 %3474
        %3478 = vset.pattern.permute.xlu0 0
        %3479 = vperm.xlu0 %3478, %v3196
        %v3480 = vpop.permute.xlu0 %3479
        %3483 = vset.pattern.permute.xlu0 0
        %3484 = vperm.xlu0 %3483, %v3198
        %v3485 = vpop.permute.xlu0 %3484
        %3488 = vset.pattern.permute.xlu0 0
        %3489 = vperm.xlu0 %3488, %v3200
        %v3490 = vpop.permute.xlu0 %3489
        %3493 = vset.pattern.permute.xlu0 0
        %3494 = vperm.xlu0 %3493, %v3202
        %v3495 = vpop.permute.xlu0 %3494
        %3498 = vset.pattern.permute.xlu0 0
        %3499 = vperm.xlu0 %3498, %v3204
        %v3500 = vpop.permute.xlu0 %3499
        %3503 = vset.pattern.permute.xlu0 0
        %3504 = vperm.xlu0 %3503, %v3206
        %v3505 = vpop.permute.xlu0 %3504
        %3508 = vset.pattern.permute.xlu0 0
        %3509 = vperm.xlu0 %3508, %v3208
        %v3510 = vpop.permute.xlu0 %3509
        %3513 = vset.pattern.permute.xlu0 0
        %3514 = vperm.xlu0 %3513, %v3210
        %v3515 = vpop.permute.xlu0 %3514
        %3518 = vset.pattern.permute.xlu0 0
        %3519 = vperm.xlu0 %3518, %v3212
        %v3520 = vpop.permute.xlu0 %3519
        %3523 = vset.pattern.permute.xlu0 0
        %3524 = vperm.xlu0 %3523, %v3214
        %v3525 = vpop.permute.xlu0 %3524
        %3528 = vset.pattern.permute.xlu0 0
        %3529 = vperm.xlu0 %3528, %v3216
        %v3530 = vpop.permute.xlu0 %3529
        %3533 = vset.pattern.permute.xlu0 0
        %3534 = vperm.xlu0 %3533, %v3218
        %v3535 = vpop.permute.xlu0 %3534
        %3538 = vset.pattern.permute.xlu0 0
        %3539 = vperm.xlu0 %3538, %v3220
        %v3540 = vpop.permute.xlu0 %3539
        %v3542 = vmul.f32 %v3465, %v3446
        %v3543 = vmul.f32 %v3470, %v3447
        %v3544 = vmul.f32 %v3475, %v3448
        %v3545 = vmul.f32 %v3480, %v3449
        %v3546 = vmul.f32 %v3485, %v3450
        %v3547 = vmul.f32 %v3490, %v3451
        %v3548 = vmul.f32 %v3495, %v3452
        %v3549 = vmul.f32 %v3500, %v3453
        %v3550 = vmul.f32 %v3505, %v3454
        %v3551 = vmul.f32 %v3510, %v3455
        %v3552 = vmul.f32 %v3515, %v3456
        %v3553 = vmul.f32 %v3520, %v3457
        %v3554 = vmul.f32 %v3525, %v3458
        %v3555 = vmul.f32 %v3530, %v3459
        %v3556 = vmul.f32 %v3535, %v3460
        %v3557 = vmul.f32 %v3540, %v3461
        %v3558 = vpack.c.bf16 %v3320, %v3318
        %v3559 = vpack.c.bf16 %v3324, %v3322
        %v3560 = vpack.c.bf16 %v3328, %v3326
        %v3561 = vpack.c.bf16 %v3332, %v3330
        %v3562 = vpack.c.bf16 %v3336, %v3334
        %v3563 = vpack.c.bf16 %v3340, %v3338
        %v3564 = vpack.c.bf16 %v3344, %v3342
        %v3565 = vpack.c.bf16 %v3348, %v3346
        %3566 = vrot.lane.b32.xlu0 %v1250, 64
        %v3567 = vpop.permute.xlu0 %3566
        %3568 = vrot.lane.b32.xlu0 %v1251, 64
        %v3569 = vpop.permute.xlu0 %3568
        %3570 = vrot.lane.b32.xlu0 %v1252, 64
        %v3571 = vpop.permute.xlu0 %3570
        %3572 = vrot.lane.b32.xlu0 %v1253, 64
        %v3573 = vpop.permute.xlu0 %3572
        %3574 = vrot.lane.b32.xlu0 %v1254, 64
        %v3575 = vpop.permute.xlu0 %3574
        %3576 = vrot.lane.b32.xlu0 %v1255, 64
        %v3577 = vpop.permute.xlu0 %3576
        %3578 = vrot.lane.b32.xlu0 %v1256, 64
        %v3579 = vpop.permute.xlu0 %3578
        %3580 = vrot.lane.b32.xlu0 %v1257, 64
        %v3581 = vpop.permute.xlu0 %3580
        %3590 = vmatprep.subr.bf16.mxu0 0
        %3591 = vmatpush1.bf16.msra.mxu0 %v3567
        %3592 = vmatprep.subr.bf16.mxu0 0
        %3593 = vmatpush1.bf16.msra.mxu0 %v3569
        %3594 = vmatprep.subr.bf16.mxu0 0
        %3595 = vmatpush1.bf16.msra.mxu0 %v3571
        %3596 = vmatprep.subr.bf16.mxu0 0
        %3597 = vmatpush1.bf16.msra.mxu0 %v3573
        %3598 = vmatprep.subr.bf16.mxu0 0
        %3599 = vmatpush1.bf16.msra.mxu0 %v3575
        %3600 = vmatprep.subr.bf16.mxu0 0
        %3601 = vmatpush1.bf16.msra.mxu0 %v3577
        %3602 = vmatprep.subr.bf16.mxu0 0
        %3603 = vmatpush1.bf16.msra.mxu0 %v3579
        %3604 = vmatprep.subr.bf16.mxu0 0
        %3605 = vmatpush1.bf16.msra.mxu0 %v3581
        %3606 = vmatprep.subr.bf16.mxu0 0
        %3607 = vmatpush1.bf16.msra.mxu0 0
        %3608 = vmatprep.subr.bf16.mxu0 0
        %3609 = vmatpush1.bf16.msra.mxu0 0
        %3610 = vmatprep.subr.bf16.mxu0 0
        %3611 = vmatpush1.bf16.msra.mxu0 0
        %3612 = vmatprep.subr.bf16.mxu0 0
        %3613 = vmatpush1.bf16.msra.mxu0 0
        %3614 = vmatprep.subr.bf16.mxu0 0
        %3615 = vmatpush1.bf16.msra.mxu0 0
        %3616 = vmatprep.subr.bf16.mxu0 0
        %3617 = vmatpush1.bf16.msra.mxu0 0
        %3618 = vmatprep.subr.bf16.mxu0 0
        %3619 = vmatpush1.bf16.msra.mxu0 0
        %3620 = vmatprep.subr.bf16.mxu0 0
        %3621 = vmatpush1.bf16.msra.mxu0 0
        %3622 = vmatprep.mubr.bf16.mxu0 0
        %3623 = vmatmul.mubr.bf16.gmra.mrb[0].mxu0 %v3558
        %v3624 = vpop.f32.mrb[0].mxu0
        %v3625 = vadd.f32 0.0, %v3624
        %v3626 = vpop.f32.mrb[0].mxu0
        %v3627 = vpop.f32.mrb[0].mxu0
        %v3628 = vadd.f32 0.0, %v3627
        %v3629 = vpop.f32.mrb[0].mxu0
        %3630 = vmatprep.mubr.bf16.mxu0 0
        %3631 = vmatmul.mubr.bf16.gmra.mrb[0].mxu0 %v3559
        %v3632 = vpop.f32.mrb[0].mxu0
        %v3633 = vadd.f32 0.0, %v3632
        %v3634 = vpop.f32.mrb[0].mxu0
        %v3635 = vpop.f32.mrb[0].mxu0
        %v3636 = vadd.f32 0.0, %v3635
        %v3637 = vpop.f32.mrb[0].mxu0
        %3638 = vmatprep.mubr.bf16.mxu0 0
        %3639 = vmatmul.mubr.bf16.gmra.mrb[0].mxu0 %v3560
        %v3640 = vpop.f32.mrb[0].mxu0
        %v3641 = vadd.f32 0.0, %v3640
        %v3642 = vpop.f32.mrb[0].mxu0
        %v3643 = vpop.f32.mrb[0].mxu0
        %v3644 = vadd.f32 0.0, %v3643
        %v3645 = vpop.f32.mrb[0].mxu0
        %3646 = vmatprep.mubr.bf16.mxu0 0
        %3647 = vmatmul.mubr.bf16.gmra.mrb[0].mxu0 %v3561
        %v3648 = vpop.f32.mrb[0].mxu0
        %v3649 = vadd.f32 0.0, %v3648
        %v3650 = vpop.f32.mrb[0].mxu0
        %v3651 = vpop.f32.mrb[0].mxu0
        %v3652 = vadd.f32 0.0, %v3651
        %v3653 = vpop.f32.mrb[0].mxu0
        %3654 = vmatprep.mubr.bf16.mxu0 0
        %3655 = vmatmul.mubr.bf16.gmra.mrb[0].mxu0 %v3562
        %v3656 = vpop.f32.mrb[0].mxu0
        %v3657 = vadd.f32 0.0, %v3656
        %v3658 = vpop.f32.mrb[0].mxu0
        %v3659 = vpop.f32.mrb[0].mxu0
        %v3660 = vadd.f32 0.0, %v3659
        %v3661 = vpop.f32.mrb[0].mxu0
        %3662 = vmatprep.mubr.bf16.mxu0 0
        %3663 = vmatmul.mubr.bf16.gmra.mrb[0].mxu0 %v3563
        %v3664 = vpop.f32.mrb[0].mxu0
        %v3665 = vadd.f32 0.0, %v3664
        %v3666 = vpop.f32.mrb[0].mxu0
        %v3667 = vpop.f32.mrb[0].mxu0
        %v3668 = vadd.f32 0.0, %v3667
        %v3669 = vpop.f32.mrb[0].mxu0
        %3670 = vmatprep.mubr.bf16.mxu0 0
        %3671 = vmatmul.mubr.bf16.gmra.mrb[0].mxu0 %v3564
        %v3672 = vpop.f32.mrb[0].mxu0
        %v3673 = vadd.f32 0.0, %v3672
        %v3674 = vpop.f32.mrb[0].mxu0
        %v3675 = vpop.f32.mrb[0].mxu0
        %v3676 = vadd.f32 0.0, %v3675
        %v3677 = vpop.f32.mrb[0].mxu0
        %3678 = vmatprep.mubr.bf16.mxu0 0
        %3679 = vmatmul.mubr.bf16.gmra.mrb[0].mxu0 %v3565
        %v3680 = vpop.f32.mrb[0].mxu0
        %v3681 = vadd.f32 0.0, %v3680
        %v3682 = vpop.f32.mrb[0].mxu0
        %v3683 = vpop.f32.mrb[0].mxu0
        %v3684 = vadd.f32 0.0, %v3683
        %v3685 = vpop.f32.mrb[0].mxu0
        %3686 = vdwg.mxu0
        %3703 = vrot.lane.b32.xlu0 %v3625, 64
        %v3704 = vpop.permute.xlu0 %3703
        %3705 = vrot.lane.b32.xlu0 %v3628, 64
        %v3706 = vpop.permute.xlu0 %3705
        %3707 = vrot.lane.b32.xlu0 %v3633, 64
        %v3708 = vpop.permute.xlu0 %3707
        %3709 = vrot.lane.b32.xlu0 %v3636, 64
        %v3710 = vpop.permute.xlu0 %3709
        %3711 = vrot.lane.b32.xlu0 %v3641, 64
        %v3712 = vpop.permute.xlu0 %3711
        %3713 = vrot.lane.b32.xlu0 %v3644, 64
        %v3714 = vpop.permute.xlu0 %3713
        %3715 = vrot.lane.b32.xlu0 %v3649, 64
        %v3716 = vpop.permute.xlu0 %3715
        %3717 = vrot.lane.b32.xlu0 %v3652, 64
        %v3718 = vpop.permute.xlu0 %3717
        %3719 = vrot.lane.b32.xlu0 %v3657, 64
        %v3720 = vpop.permute.xlu0 %3719
        %3721 = vrot.lane.b32.xlu0 %v3660, 64
        %v3722 = vpop.permute.xlu0 %3721
        %3723 = vrot.lane.b32.xlu0 %v3665, 64
        %v3724 = vpop.permute.xlu0 %3723
        %3725 = vrot.lane.b32.xlu0 %v3668, 64
        %v3726 = vpop.permute.xlu0 %3725
        %3727 = vrot.lane.b32.xlu0 %v3673, 64
        %v3728 = vpop.permute.xlu0 %3727
        %3729 = vrot.lane.b32.xlu0 %v3676, 64
        %v3730 = vpop.permute.xlu0 %3729
        %3731 = vrot.lane.b32.xlu0 %v3681, 64
        %v3732 = vpop.permute.xlu0 %3731
        %3733 = vrot.lane.b32.xlu0 %v3684, 64
        %v3734 = vpop.permute.xlu0 %3733
        %v3751 = vadd.f32 %v3542, %v3704
        %v3752 = vadd.f32 %v3543, %v3706
        %v3753 = vadd.f32 %v3544, %v3708
        %v3754 = vadd.f32 %v3545, %v3710
        %v3755 = vadd.f32 %v3546, %v3712
        %v3756 = vadd.f32 %v3547, %v3714
        %v3757 = vadd.f32 %v3548, %v3716
        %v3758 = vadd.f32 %v3549, %v3718
        %v3759 = vadd.f32 %v3550, %v3720
        %v3760 = vadd.f32 %v3551, %v3722
        %v3761 = vadd.f32 %v3552, %v3724
        %v3762 = vadd.f32 %v3553, %v3726
        %v3763 = vadd.f32 %v3554, %v3728
        %v3764 = vadd.f32 %v3555, %v3730
        %v3765 = vadd.f32 %v3556, %v3732
        %v3766 = vadd.f32 %v3557, %v3734
        %vm3767 = vcmask 785920
        %3768 = vst.msk [vmem:[#allocation5] sm:$0xff] %vm3767, %v3751
        %3769 = vst.msk [vmem:[#allocation5 + $0x8] sm:$0xff] %vm3767, %v3752
        %3770 = vst.msk [vmem:[#allocation5 + $0x10] sm:$0xff] %vm3767, %v3753
        %3771 = vst.msk [vmem:[#allocation5 + $0x18] sm:$0xff] %vm3767, %v3754
        %3772 = vst.msk [vmem:[#allocation5 + $0x20] sm:$0xff] %vm3767, %v3755
        %3773 = vst.msk [vmem:[#allocation5 + $0x28] sm:$0xff] %vm3767, %v3756
        %3774 = vst.msk [vmem:[#allocation5 + $0x30] sm:$0xff] %vm3767, %v3757
        %3775 = vst.msk [vmem:[#allocation5 + $0x38] sm:$0xff] %vm3767, %v3758
        %3776 = vst.msk [vmem:[#allocation5 + $0x40] sm:$0xff] %vm3767, %v3759
        %3777 = vst.msk [vmem:[#allocation5 + $0x48] sm:$0xff] %vm3767, %v3760
        %3778 = vst.msk [vmem:[#allocation5 + $0x50] sm:$0xff] %vm3767, %v3761
        %3779 = vst.msk [vmem:[#allocation5 + $0x58] sm:$0xff] %vm3767, %v3762
        %3780 = vst.msk [vmem:[#allocation5 + $0x60] sm:$0xff] %vm3767, %v3763
        %3781 = vst.msk [vmem:[#allocation5 + $0x68] sm:$0xff] %vm3767, %v3764
        %3782 = vst.msk [vmem:[#allocation5 + $0x70] sm:$0xff] %vm3767, %v3765
        %3783 = vst.msk [vmem:[#allocation5 + $0x78] sm:$0xff] %vm3767, %v3766
        %3784 = vst.msk [vmem:[%s3108] sm:$0xff] %vm1732, %v3157
        %3785 = vst.msk [vmem:[%s3108 + $0x8] sm:$0xff] %vm1732, %v3158
        %3786 = vst.msk [vmem:[%s3108 + $0x10] sm:$0xff] %vm1732, %v3159
        %3787 = vst.msk [vmem:[%s3108 + $0x18] sm:$0xff] %vm1732, %v3160
        %3788 = vst.msk [vmem:[%s3108 + $0x20] sm:$0xff] %vm1732, %v3161
        %3789 = vst.msk [vmem:[%s3108 + $0x28] sm:$0xff] %vm1732, %v3162
        %3790 = vst.msk [vmem:[%s3108 + $0x30] sm:$0xff] %vm1732, %v3163
        %3791 = vst.msk [vmem:[%s3108 + $0x38] sm:$0xff] %vm1732, %v3164
        %3792 = vst.msk [vmem:[%s3108 + $0x40] sm:$0xff] %vm1732, %v3165
        %3793 = vst.msk [vmem:[%s3108 + $0x48] sm:$0xff] %vm1732, %v3166
        %3794 = vst.msk [vmem:[%s3108 + $0x50] sm:$0xff] %vm1732, %v3167
        %3795 = vst.msk [vmem:[%s3108 + $0x58] sm:$0xff] %vm1732, %v3168
        %3796 = vst.msk [vmem:[%s3108 + $0x60] sm:$0xff] %vm1732, %v3169
        %3797 = vst.msk [vmem:[%s3108 + $0x68] sm:$0xff] %vm1732, %v3170
        %3798 = vst.msk [vmem:[%s3108 + $0x70] sm:$0xff] %vm1732, %v3171
        %3799 = vst.msk [vmem:[%s3108 + $0x78] sm:$0xff] %vm1732, %v3172
        %v3800 = vld [vmem:[#allocation2] sm:$0xff]
        %v3801 = vld [vmem:[#allocation2 + $0x8] sm:$0xff]
        %v3802 = vld [vmem:[#allocation2 + $0x10] sm:$0xff]
        %v3803 = vld [vmem:[#allocation2 + $0x18] sm:$0xff]
        %v3804 = vld [vmem:[#allocation2 + $0x20] sm:$0xff]
        %v3805 = vld [vmem:[#allocation2 + $0x28] sm:$0xff]
        %v3806 = vld [vmem:[#allocation2 + $0x30] sm:$0xff]
        %v3807 = vld [vmem:[#allocation2 + $0x38] sm:$0xff]
        %3816 = vrot.lane.b32.xlu0 %v3800, 32
        %v3817 = vpop.permute.xlu0 %3816
        %3818 = vrot.lane.b32.xlu0 %v3801, 32
        %v3819 = vpop.permute.xlu0 %3818
        %3820 = vrot.lane.b32.xlu0 %v3802, 32
        %v3821 = vpop.permute.xlu0 %3820
        %3822 = vrot.lane.b32.xlu0 %v3803, 32
        %v3823 = vpop.permute.xlu0 %3822
        %3824 = vrot.lane.b32.xlu0 %v3804, 32
        %v3825 = vpop.permute.xlu0 %3824
        %3826 = vrot.lane.b32.xlu0 %v3805, 32
        %v3827 = vpop.permute.xlu0 %3826
        %3828 = vrot.lane.b32.xlu0 %v3806, 32
        %v3829 = vpop.permute.xlu0 %3828
        %3830 = vrot.lane.b32.xlu0 %v3807, 32
        %v3831 = vpop.permute.xlu0 %3830
        %3832 = vrot.lane.b32.xlu0 %v1074, 32
        %v3833 = vpop.permute.xlu0 %3832
        %3834 = vrot.lane.b32.xlu0 %v1075, 32
        %v3835 = vpop.permute.xlu0 %3834
        %3836 = vrot.lane.b32.xlu0 %v1076, 32
        %v3837 = vpop.permute.xlu0 %3836
        %3838 = vrot.lane.b32.xlu0 %v1077, 32
        %v3839 = vpop.permute.xlu0 %3838
        %3840 = vrot.lane.b32.xlu0 %v1078, 32
        %v3841 = vpop.permute.xlu0 %3840
        %3842 = vrot.lane.b32.xlu0 %v1079, 32
        %v3843 = vpop.permute.xlu0 %3842
        %3844 = vrot.lane.b32.xlu0 %v1080, 32
        %v3845 = vpop.permute.xlu0 %3844
        %3846 = vrot.lane.b32.xlu0 %v1081, 32
        %v3847 = vpop.permute.xlu0 %3846
        %v3849 = vsel %vm1266, %v3817, 0
        %v3852 = vsel %vm1266, %v3819, 0
        %v3855 = vsel %vm1266, %v3821, 0
        %v3858 = vsel %vm1266, %v3823, 0
        %v3861 = vsel %vm1266, %v3825, 0
        %v3864 = vsel %vm1266, %v3827, 0
        %v3867 = vsel %vm1266, %v3829, 0
        %v3870 = vsel %vm1266, %v3831, 0
        %v3873 = vsel %vm1266, %v3833, 0
        %v3876 = vsel %vm1266, %v3835, 0
        %v3879 = vsel %vm1266, %v3837, 0
        %v3882 = vsel %vm1266, %v3839, 0
        %v3885 = vsel %vm1266, %v3841, 0
        %v3888 = vsel %vm1266, %v3843, 0
        %v3891 = vsel %vm1266, %v3845, 0
        %v3894 = vsel %vm1266, %v3847, 0
        %3896 = vmatprep.subr.bf16.mxu0 0
        %3897 = vmatpush1.bf16.xpose.msra.mxu0 %v3873
        %3898 = vmatprep.subr.bf16.mxu0 0
        %3899 = vmatpush1.bf16.xpose.msra.mxu0 %v3876
        %3900 = vmatprep.subr.bf16.mxu0 0
        %3901 = vmatpush1.bf16.xpose.msra.mxu0 %v3879
        %3902 = vmatprep.subr.bf16.mxu0 0
        %3903 = vmatpush1.bf16.xpose.msra.mxu0 %v3882
        %3904 = vmatprep.subr.bf16.mxu0 0
        %3905 = vmatpush1.bf16.xpose.msra.mxu0 %v3885
        %3906 = vmatprep.subr.bf16.mxu0 0
        %3907 = vmatpush1.bf16.xpose.msra.mxu0 %v3888
        %3908 = vmatprep.subr.bf16.mxu0 0
        %3909 = vmatpush1.bf16.xpose.msra.mxu0 %v3891
        %3910 = vmatprep.subr.bf16.mxu0 0
        %3911 = vmatpush1.bf16.xpose.msra.mxu0 %v3894
        %3912 = vmatprep.subr.bf16.mxu0 0
        %3913 = vmatpush1.bf16.xpose.msra.mxu0 0
        %3914 = vmatprep.subr.bf16.mxu0 0
        %3915 = vmatpush1.bf16.xpose.msra.mxu0 0
        %3916 = vmatprep.subr.bf16.mxu0 0
        %3917 = vmatpush1.bf16.xpose.msra.mxu0 0
        %3918 = vmatprep.subr.bf16.mxu0 0
        %3919 = vmatpush1.bf16.xpose.msra.mxu0 0
        %3920 = vmatprep.subr.bf16.mxu0 0
        %3921 = vmatpush1.bf16.xpose.msra.mxu0 0
        %3922 = vmatprep.subr.bf16.mxu0 0
        %3923 = vmatpush1.bf16.xpose.msra.mxu0 0
        %3924 = vmatprep.subr.bf16.mxu0 0
        %3925 = vmatpush1.bf16.xpose.msra.mxu0 0
        %3926 = vmatprep.subr.bf16.mxu0 0
        %3927 = vmatpush1.bf16.xpose.msra.mxu0 0
        %3928 = vmatprep.mubr.bf16.mxu0 0
        %3929 = vmatmul.mubr.bf16.gmra.mrb[0].mxu0 %v3849
        %v3930 = vpop.f32.mrb[0].mxu0
        %v3931 = vadd.f32 0.0, %v3930
        %v3932 = vpop.f32.mrb[0].mxu0
        %v3933 = vpop.f32.mrb[0].mxu0
        %v3934 = vadd.f32 0.0, %v3933
        %v3935 = vpop.f32.mrb[0].mxu0
        %3936 = vmatprep.mubr.bf16.mxu0 0
        %3937 = vmatmul.mubr.bf16.gmra.mrb[0].mxu0 %v3852
        %v3938 = vpop.f32.mrb[0].mxu0
        %v3939 = vadd.f32 0.0, %v3938
        %v3940 = vpop.f32.mrb[0].mxu0
        %v3941 = vpop.f32.mrb[0].mxu0
        %v3942 = vadd.f32 0.0, %v3941
        %v3943 = vpop.f32.mrb[0].mxu0
        %3944 = vmatprep.mubr.bf16.mxu0 0
        %3945 = vmatmul.mubr.bf16.gmra.mrb[0].mxu0 %v3855
        %v3946 = vpop.f32.mrb[0].mxu0
        %v3947 = vadd.f32 0.0, %v3946
        %v3948 = vpop.f32.mrb[0].mxu0
        %v3949 = vpop.f32.mrb[0].mxu0
        %v3950 = vadd.f32 0.0, %v3949
        %v3951 = vpop.f32.mrb[0].mxu0
        %3952 = vmatprep.mubr.bf16.mxu0 0
        %3953 = vmatmul.mubr.bf16.gmra.mrb[0].mxu0 %v3858
        %v3954 = vpop.f32.mrb[0].mxu0
        %v3955 = vadd.f32 0.0, %v3954
        %v3956 = vpop.f32.mrb[0].mxu0
        %v3957 = vpop.f32.mrb[0].mxu0
        %v3958 = vadd.f32 0.0, %v3957
        %v3959 = vpop.f32.mrb[0].mxu0
        %3960 = vmatprep.mubr.bf16.mxu0 0
        %3961 = vmatmul.mubr.bf16.gmra.mrb[0].mxu0 %v3861
        %v3962 = vpop.f32.mrb[0].mxu0
        %v3963 = vadd.f32 0.0, %v3962
        %v3964 = vpop.f32.mrb[0].mxu0
        %v3965 = vpop.f32.mrb[0].mxu0
        %v3966 = vadd.f32 0.0, %v3965
        %v3967 = vpop.f32.mrb[0].mxu0
        %3968 = vmatprep.mubr.bf16.mxu0 0
        %3969 = vmatmul.mubr.bf16.gmra.mrb[0].mxu0 %v3864
        %v3970 = vpop.f32.mrb[0].mxu0
        %v3971 = vadd.f32 0.0, %v3970
        %v3972 = vpop.f32.mrb[0].mxu0
        %v3973 = vpop.f32.mrb[0].mxu0
        %v3974 = vadd.f32 0.0, %v3973
        %v3975 = vpop.f32.mrb[0].mxu0
        %3976 = vmatprep.mubr.bf16.mxu0 0
        %3977 = vmatmul.mubr.bf16.gmra.mrb[0].mxu0 %v3867
        %v3978 = vpop.f32.mrb[0].mxu0
        %v3979 = vadd.f32 0.0, %v3978
        %v3980 = vpop.f32.mrb[0].mxu0
        %v3981 = vpop.f32.mrb[0].mxu0
        %v3982 = vadd.f32 0.0, %v3981
        %v3983 = vpop.f32.mrb[0].mxu0
        %3984 = vmatprep.mubr.bf16.mxu0 0
        %3985 = vmatmul.mubr.bf16.gmra.mrb[0].mxu0 %v3870
        %v3986 = vpop.f32.mrb[0].mxu0
        %v3987 = vadd.f32 0.0, %v3986
        %v3988 = vpop.f32.mrb[0].mxu0
        %v3989 = vpop.f32.mrb[0].mxu0
        %v3990 = vadd.f32 0.0, %v3989
        %v3991 = vpop.f32.mrb[0].mxu0
        %3992 = vdwg.mxu0
        %s3993 = scalar_lea.vmem [#allocation3], 384
        %v3994 = vld [vmem:[%s3993] sm:$0xff]
        %v3995 = vld [vmem:[%s3993 + $0x8] sm:$0xff]
        %v3996 = vld [vmem:[%s3993 + $0x10] sm:$0xff]
        %v3997 = vld [vmem:[%s3993 + $0x18] sm:$0xff]
        %v3998 = vld [vmem:[%s3993 + $0x20] sm:$0xff]
        %v3999 = vld [vmem:[%s3993 + $0x28] sm:$0xff]
        %v4000 = vld [vmem:[%s3993 + $0x30] sm:$0xff]
        %v4001 = vld [vmem:[%s3993 + $0x38] sm:$0xff]
        %v4002 = vld [vmem:[%s3993 + $0x40] sm:$0xff]
        %v4003 = vld [vmem:[%s3993 + $0x48] sm:$0xff]
        %v4004 = vld [vmem:[%s3993 + $0x50] sm:$0xff]
        %v4005 = vld [vmem:[%s3993 + $0x58] sm:$0xff]
        %v4006 = vld [vmem:[%s3993 + $0x60] sm:$0xff]
        %v4007 = vld [vmem:[%s3993 + $0x68] sm:$0xff]
        %v4008 = vld [vmem:[%s3993 + $0x70] sm:$0xff]
        %v4009 = vld [vmem:[%s3993 + $0x78] sm:$0xff]
        %4010 = vmax.xlane.f32.xlu0 %v3931
        %v4011 = vpop.xlane.xlu0 %4010
        %4012 = vmax.xlane.f32.xlu0 %v3934
        %v4013 = vpop.xlane.xlu0 %4012
        %4014 = vmax.xlane.f32.xlu0 %v3939
        %v4015 = vpop.xlane.xlu0 %4014
        %4016 = vmax.xlane.f32.xlu0 %v3942
        %v4017 = vpop.xlane.xlu0 %4016
        %4018 = vmax.xlane.f32.xlu0 %v3947
        %v4019 = vpop.xlane.xlu0 %4018
        %4020 = vmax.xlane.f32.xlu0 %v3950
        %v4021 = vpop.xlane.xlu0 %4020
        %4022 = vmax.xlane.f32.xlu0 %v3955
        %v4023 = vpop.xlane.xlu0 %4022
        %4024 = vmax.xlane.f32.xlu0 %v3958
        %v4025 = vpop.xlane.xlu0 %4024
        %4026 = vmax.xlane.f32.xlu0 %v3963
        %v4027 = vpop.xlane.xlu0 %4026
        %4028 = vmax.xlane.f32.xlu0 %v3966
        %v4029 = vpop.xlane.xlu0 %4028
        %4030 = vmax.xlane.f32.xlu0 %v3971
        %v4031 = vpop.xlane.xlu0 %4030
        %4032 = vmax.xlane.f32.xlu0 %v3974
        %v4033 = vpop.xlane.xlu0 %4032
        %4034 = vmax.xlane.f32.xlu0 %v3979
        %v4035 = vpop.xlane.xlu0 %4034
        %4036 = vmax.xlane.f32.xlu0 %v3982
        %v4037 = vpop.xlane.xlu0 %4036
        %4038 = vmax.xlane.f32.xlu0 %v3987
        %v4039 = vpop.xlane.xlu0 %4038
        %4040 = vmax.xlane.f32.xlu0 %v3990
        %v4041 = vpop.xlane.xlu0 %4040
        %v4042 = vmax.f32 %v3994, %v4011
        %v4043 = vmax.f32 %v3995, %v4013
        %v4044 = vmax.f32 %v3996, %v4015
        %v4045 = vmax.f32 %v3997, %v4017
        %v4046 = vmax.f32 %v3998, %v4019
        %v4047 = vmax.f32 %v3999, %v4021
        %v4048 = vmax.f32 %v4000, %v4023
        %v4049 = vmax.f32 %v4001, %v4025
        %v4050 = vmax.f32 %v4002, %v4027
        %v4051 = vmax.f32 %v4003, %v4029
        %v4052 = vmax.f32 %v4004, %v4031
        %v4053 = vmax.f32 %v4005, %v4033
        %v4054 = vmax.f32 %v4006, %v4035
        %v4055 = vmax.f32 %v4007, %v4037
        %v4056 = vmax.f32 %v4008, %v4039
        %v4057 = vmax.f32 %v4009, %v4041
        %v4058 = vsub.f32 %v3994, %v4042
        %v4059 = vsub.f32 %v3995, %v4043
        %v4060 = vsub.f32 %v3996, %v4044
        %v4061 = vsub.f32 %v3997, %v4045
        %v4062 = vsub.f32 %v3998, %v4046
        %v4063 = vsub.f32 %v3999, %v4047
        %v4064 = vsub.f32 %v4000, %v4048
        %v4065 = vsub.f32 %v4001, %v4049
        %v4066 = vsub.f32 %v4002, %v4050
        %v4067 = vsub.f32 %v4003, %v4051
        %v4068 = vsub.f32 %v4004, %v4052
        %v4069 = vsub.f32 %v4005, %v4053
        %v4070 = vsub.f32 %v4006, %v4054
        %v4071 = vsub.f32 %v4007, %v4055
        %v4072 = vsub.f32 %v4008, %v4056
        %v4073 = vsub.f32 %v4009, %v4057
        %v4074 = vmul.f32 %v4058, 1.442695
        %v4075 = vpow.pop %v4074
        %v4076 = vmul.f32 %v4059, 1.442695
        %v4077 = vpow.pop %v4076
        %v4078 = vmul.f32 %v4060, 1.442695
        %v4079 = vpow.pop %v4078
        %v4080 = vmul.f32 %v4061, 1.442695
        %v4081 = vpow.pop %v4080
        %v4082 = vmul.f32 %v4062, 1.442695
        %v4083 = vpow.pop %v4082
        %v4084 = vmul.f32 %v4063, 1.442695
        %v4085 = vpow.pop %v4084
        %v4086 = vmul.f32 %v4064, 1.442695
        %v4087 = vpow.pop %v4086
        %v4088 = vmul.f32 %v4065, 1.442695
        %v4089 = vpow.pop %v4088
        %v4090 = vmul.f32 %v4066, 1.442695
        %v4091 = vpow.pop %v4090
        %v4092 = vmul.f32 %v4067, 1.442695
        %v4093 = vpow.pop %v4092
        %v4094 = vmul.f32 %v4068, 1.442695
        %v4095 = vpow.pop %v4094
        %v4096 = vmul.f32 %v4069, 1.442695
        %v4097 = vpow.pop %v4096
        %v4098 = vmul.f32 %v4070, 1.442695
        %v4099 = vpow.pop %v4098
        %v4100 = vmul.f32 %v4071, 1.442695
        %v4101 = vpow.pop %v4100
        %v4102 = vmul.f32 %v4072, 1.442695
        %v4103 = vpow.pop %v4102
        %v4104 = vmul.f32 %v4073, 1.442695
        %v4105 = vpow.pop %v4104
        %4107 = vset.pattern.permute.xlu0 0
        %4108 = vperm.xlu0 %4107, %v4042
        %v4109 = vpop.permute.xlu0 %4108
        %4112 = vset.pattern.permute.xlu0 0
        %4113 = vperm.xlu0 %4112, %v4043
        %v4114 = vpop.permute.xlu0 %4113
        %4117 = vset.pattern.permute.xlu0 0
        %4118 = vperm.xlu0 %4117, %v4044
        %v4119 = vpop.permute.xlu0 %4118
        %4122 = vset.pattern.permute.xlu0 0
        %4123 = vperm.xlu0 %4122, %v4045
        %v4124 = vpop.permute.xlu0 %4123
        %4127 = vset.pattern.permute.xlu0 0
        %4128 = vperm.xlu0 %4127, %v4046
        %v4129 = vpop.permute.xlu0 %4128
        %4132 = vset.pattern.permute.xlu0 0
        %4133 = vperm.xlu0 %4132, %v4047
        %v4134 = vpop.permute.xlu0 %4133
        %4137 = vset.pattern.permute.xlu0 0
        %4138 = vperm.xlu0 %4137, %v4048
        %v4139 = vpop.permute.xlu0 %4138
        %4142 = vset.pattern.permute.xlu0 0
        %4143 = vperm.xlu0 %4142, %v4049
        %v4144 = vpop.permute.xlu0 %4143
        %4147 = vset.pattern.permute.xlu0 0
        %4148 = vperm.xlu0 %4147, %v4050
        %v4149 = vpop.permute.xlu0 %4148
        %4152 = vset.pattern.permute.xlu0 0
        %4153 = vperm.xlu0 %4152, %v4051
        %v4154 = vpop.permute.xlu0 %4153
        %4157 = vset.pattern.permute.xlu0 0
        %4158 = vperm.xlu0 %4157, %v4052
        %v4159 = vpop.permute.xlu0 %4158
        %4162 = vset.pattern.permute.xlu0 0
        %4163 = vperm.xlu0 %4162, %v4053
        %v4164 = vpop.permute.xlu0 %4163
        %4167 = vset.pattern.permute.xlu0 0
        %4168 = vperm.xlu0 %4167, %v4054
        %v4169 = vpop.permute.xlu0 %4168
        %4172 = vset.pattern.permute.xlu0 0
        %4173 = vperm.xlu0 %4172, %v4055
        %v4174 = vpop.permute.xlu0 %4173
        %4177 = vset.pattern.permute.xlu0 0
        %4178 = vperm.xlu0 %4177, %v4056
        %v4179 = vpop.permute.xlu0 %4178
        %4182 = vset.pattern.permute.xlu0 0
        %4183 = vperm.xlu0 %4182, %v4057
        %v4184 = vpop.permute.xlu0 %4183
        %v4186 = vsub.f32 %v3931, %v4109
        %v4187 = vsub.f32 %v3934, %v4114
        %v4188 = vsub.f32 %v3939, %v4119
        %v4189 = vsub.f32 %v3942, %v4124
        %v4190 = vsub.f32 %v3947, %v4129
        %v4191 = vsub.f32 %v3950, %v4134
        %v4192 = vsub.f32 %v3955, %v4139
        %v4193 = vsub.f32 %v3958, %v4144
        %v4194 = vsub.f32 %v3963, %v4149
        %v4195 = vsub.f32 %v3966, %v4154
        %v4196 = vsub.f32 %v3971, %v4159
        %v4197 = vsub.f32 %v3974, %v4164
        %v4198 = vsub.f32 %v3979, %v4169
        %v4199 = vsub.f32 %v3982, %v4174
        %v4200 = vsub.f32 %v3987, %v4179
        %v4201 = vsub.f32 %v3990, %v4184
        %v4202 = vmul.f32 %v4186, 1.442695
        %v4203 = vpow.pop %v4202
        %v4204 = vmul.f32 %v4187, 1.442695
        %v4205 = vpow.pop %v4204
        %v4206 = vmul.f32 %v4188, 1.442695
        %v4207 = vpow.pop %v4206
        %v4208 = vmul.f32 %v4189, 1.442695
        %v4209 = vpow.pop %v4208
        %v4210 = vmul.f32 %v4190, 1.442695
        %v4211 = vpow.pop %v4210
        %v4212 = vmul.f32 %v4191, 1.442695
        %v4213 = vpow.pop %v4212
        %v4214 = vmul.f32 %v4192, 1.442695
        %v4215 = vpow.pop %v4214
        %v4216 = vmul.f32 %v4193, 1.442695
        %v4217 = vpow.pop %v4216
        %v4218 = vmul.f32 %v4194, 1.442695
        %v4219 = vpow.pop %v4218
        %v4220 = vmul.f32 %v4195, 1.442695
        %v4221 = vpow.pop %v4220
        %v4222 = vmul.f32 %v4196, 1.442695
        %v4223 = vpow.pop %v4222
        %v4224 = vmul.f32 %v4197, 1.442695
        %v4225 = vpow.pop %v4224
        %v4226 = vmul.f32 %v4198, 1.442695
        %v4227 = vpow.pop %v4226
        %v4228 = vmul.f32 %v4199, 1.442695
        %v4229 = vpow.pop %v4228
        %v4230 = vmul.f32 %v4200, 1.442695
        %v4231 = vpow.pop %v4230
        %v4232 = vmul.f32 %v4201, 1.442695
        %v4233 = vpow.pop %v4232
        %s4234 = scalar_lea.vmem [#allocation4], 384
        %v4235 = vld [vmem:[%s4234] sm:$0xff]
        %v4236 = vld [vmem:[%s4234 + $0x8] sm:$0xff]
        %v4237 = vld [vmem:[%s4234 + $0x10] sm:$0xff]
        %v4238 = vld [vmem:[%s4234 + $0x18] sm:$0xff]
        %v4239 = vld [vmem:[%s4234 + $0x20] sm:$0xff]
        %v4240 = vld [vmem:[%s4234 + $0x28] sm:$0xff]
        %v4241 = vld [vmem:[%s4234 + $0x30] sm:$0xff]
        %v4242 = vld [vmem:[%s4234 + $0x38] sm:$0xff]
        %v4243 = vld [vmem:[%s4234 + $0x40] sm:$0xff]
        %v4244 = vld [vmem:[%s4234 + $0x48] sm:$0xff]
        %v4245 = vld [vmem:[%s4234 + $0x50] sm:$0xff]
        %v4246 = vld [vmem:[%s4234 + $0x58] sm:$0xff]
        %v4247 = vld [vmem:[%s4234 + $0x60] sm:$0xff]
        %v4248 = vld [vmem:[%s4234 + $0x68] sm:$0xff]
        %v4249 = vld [vmem:[%s4234 + $0x70] sm:$0xff]
        %v4250 = vld [vmem:[%s4234 + $0x78] sm:$0xff]
        %v4251 = vmul.f32 %v4075, %v4235
        %v4252 = vmul.f32 %v4077, %v4236
        %v4253 = vmul.f32 %v4079, %v4237
        %v4254 = vmul.f32 %v4081, %v4238
        %v4255 = vmul.f32 %v4083, %v4239
        %v4256 = vmul.f32 %v4085, %v4240
        %v4257 = vmul.f32 %v4087, %v4241
        %v4258 = vmul.f32 %v4089, %v4242
        %v4259 = vmul.f32 %v4091, %v4243
        %v4260 = vmul.f32 %v4093, %v4244
        %v4261 = vmul.f32 %v4095, %v4245
        %v4262 = vmul.f32 %v4097, %v4246
        %v4263 = vmul.f32 %v4099, %v4247
        %v4264 = vmul.f32 %v4101, %v4248
        %v4265 = vmul.f32 %v4103, %v4249
        %v4266 = vmul.f32 %v4105, %v4250
        %4267 = vadd.xlane.f32.xlu0 %v4203
        %v4268 = vpop.xlane.xlu0 %4267
        %4269 = vadd.xlane.f32.xlu0 %v4205
        %v4270 = vpop.xlane.xlu0 %4269
        %4271 = vadd.xlane.f32.xlu0 %v4207
        %v4272 = vpop.xlane.xlu0 %4271
        %4273 = vadd.xlane.f32.xlu0 %v4209
        %v4274 = vpop.xlane.xlu0 %4273
        %4275 = vadd.xlane.f32.xlu0 %v4211
        %v4276 = vpop.xlane.xlu0 %4275
        %4277 = vadd.xlane.f32.xlu0 %v4213
        %v4278 = vpop.xlane.xlu0 %4277
        %4279 = vadd.xlane.f32.xlu0 %v4215
        %v4280 = vpop.xlane.xlu0 %4279
        %4281 = vadd.xlane.f32.xlu0 %v4217
        %v4282 = vpop.xlane.xlu0 %4281
        %4283 = vadd.xlane.f32.xlu0 %v4219
        %v4284 = vpop.xlane.xlu0 %4283
        %4285 = vadd.xlane.f32.xlu0 %v4221
        %v4286 = vpop.xlane.xlu0 %4285
        %4287 = vadd.xlane.f32.xlu0 %v4223
        %v4288 = vpop.xlane.xlu0 %4287
        %4289 = vadd.xlane.f32.xlu0 %v4225
        %v4290 = vpop.xlane.xlu0 %4289
        %4291 = vadd.xlane.f32.xlu0 %v4227
        %v4292 = vpop.xlane.xlu0 %4291
        %4293 = vadd.xlane.f32.xlu0 %v4229
        %v4294 = vpop.xlane.xlu0 %4293
        %4295 = vadd.xlane.f32.xlu0 %v4231
        %v4296 = vpop.xlane.xlu0 %4295
        %4297 = vadd.xlane.f32.xlu0 %v4233
        %v4298 = vpop.xlane.xlu0 %4297
        %v4299 = vadd.f32 %v4251, %v4268
        %v4300 = vadd.f32 %v4252, %v4270
        %v4301 = vadd.f32 %v4253, %v4272
        %v4302 = vadd.f32 %v4254, %v4274
        %v4303 = vadd.f32 %v4255, %v4276
        %v4304 = vadd.f32 %v4256, %v4278
        %v4305 = vadd.f32 %v4257, %v4280
        %v4306 = vadd.f32 %v4258, %v4282
        %v4307 = vadd.f32 %v4259, %v4284
        %v4308 = vadd.f32 %v4260, %v4286
        %v4309 = vadd.f32 %v4261, %v4288
        %v4310 = vadd.f32 %v4262, %v4290
        %v4311 = vadd.f32 %v4263, %v4292
        %v4312 = vadd.f32 %v4264, %v4294
        %v4313 = vadd.f32 %v4265, %v4296
        %v4314 = vadd.f32 %v4266, %v4298
        %4315 = vst.msk [vmem:[%s4234] sm:$0xff] %vm1732, %v4299
        %4316 = vst.msk [vmem:[%s4234 + $0x8] sm:$0xff] %vm1732, %v4300
        %4317 = vst.msk [vmem:[%s4234 + $0x10] sm:$0xff] %vm1732, %v4301
        %4318 = vst.msk [vmem:[%s4234 + $0x18] sm:$0xff] %vm1732, %v4302
        %4319 = vst.msk [vmem:[%s4234 + $0x20] sm:$0xff] %vm1732, %v4303
        %4320 = vst.msk [vmem:[%s4234 + $0x28] sm:$0xff] %vm1732, %v4304
        %4321 = vst.msk [vmem:[%s4234 + $0x30] sm:$0xff] %vm1732, %v4305
        %4322 = vst.msk [vmem:[%s4234 + $0x38] sm:$0xff] %vm1732, %v4306
        %4323 = vst.msk [vmem:[%s4234 + $0x40] sm:$0xff] %vm1732, %v4307
        %4324 = vst.msk [vmem:[%s4234 + $0x48] sm:$0xff] %vm1732, %v4308
        %4325 = vst.msk [vmem:[%s4234 + $0x50] sm:$0xff] %vm1732, %v4309
        %4326 = vst.msk [vmem:[%s4234 + $0x58] sm:$0xff] %vm1732, %v4310
        %4327 = vst.msk [vmem:[%s4234 + $0x60] sm:$0xff] %vm1732, %v4311
        %4328 = vst.msk [vmem:[%s4234 + $0x68] sm:$0xff] %vm1732, %v4312
        %4329 = vst.msk [vmem:[%s4234 + $0x70] sm:$0xff] %vm1732, %v4313
        %4330 = vst.msk [vmem:[%s4234 + $0x78] sm:$0xff] %vm1732, %v4314
        %v4331 = vld [vmem:[#allocation5] sm:$0xff]
        %v4332 = vld [vmem:[#allocation5 + $0x8] sm:$0xff]
        %v4333 = vld [vmem:[#allocation5 + $0x10] sm:$0xff]
        %v4334 = vld [vmem:[#allocation5 + $0x18] sm:$0xff]
        %v4335 = vld [vmem:[#allocation5 + $0x20] sm:$0xff]
        %v4336 = vld [vmem:[#allocation5 + $0x28] sm:$0xff]
        %v4337 = vld [vmem:[#allocation5 + $0x30] sm:$0xff]
        %v4338 = vld [vmem:[#allocation5 + $0x38] sm:$0xff]
        %v4339 = vld [vmem:[#allocation5 + $0x40] sm:$0xff]
        %v4340 = vld [vmem:[#allocation5 + $0x48] sm:$0xff]
        %v4341 = vld [vmem:[#allocation5 + $0x50] sm:$0xff]
        %v4342 = vld [vmem:[#allocation5 + $0x58] sm:$0xff]
        %v4343 = vld [vmem:[#allocation5 + $0x60] sm:$0xff]
        %v4344 = vld [vmem:[#allocation5 + $0x68] sm:$0xff]
        %v4345 = vld [vmem:[#allocation5 + $0x70] sm:$0xff]
        %v4346 = vld [vmem:[#allocation5 + $0x78] sm:$0xff]
        %4348 = vset.pattern.permute.xlu0 0
        %4349 = vperm.xlu0 %4348, %v4075
        %v4350 = vpop.permute.xlu0 %4349
        %4353 = vset.pattern.permute.xlu0 0
        %4354 = vperm.xlu0 %4353, %v4077
        %v4355 = vpop.permute.xlu0 %4354
        %4358 = vset.pattern.permute.xlu0 0
        %4359 = vperm.xlu0 %4358, %v4079
        %v4360 = vpop.permute.xlu0 %4359
        %4363 = vset.pattern.permute.xlu0 0
        %4364 = vperm.xlu0 %4363, %v4081
        %v4365 = vpop.permute.xlu0 %4364
        %4368 = vset.pattern.permute.xlu0 0
        %4369 = vperm.xlu0 %4368, %v4083
        %v4370 = vpop.permute.xlu0 %4369
        %4373 = vset.pattern.permute.xlu0 0
        %4374 = vperm.xlu0 %4373, %v4085
        %v4375 = vpop.permute.xlu0 %4374
        %4378 = vset.pattern.permute.xlu0 0
        %4379 = vperm.xlu0 %4378, %v4087
        %v4380 = vpop.permute.xlu0 %4379
        %4383 = vset.pattern.permute.xlu0 0
        %4384 = vperm.xlu0 %4383, %v4089
        %v4385 = vpop.permute.xlu0 %4384
        %4388 = vset.pattern.permute.xlu0 0
        %4389 = vperm.xlu0 %4388, %v4091
        %v4390 = vpop.permute.xlu0 %4389
        %4393 = vset.pattern.permute.xlu0 0
        %4394 = vperm.xlu0 %4393, %v4093
        %v4395 = vpop.permute.xlu0 %4394
        %4398 = vset.pattern.permute.xlu0 0
        %4399 = vperm.xlu0 %4398, %v4095
        %v4400 = vpop.permute.xlu0 %4399
        %4403 = vset.pattern.permute.xlu0 0
        %4404 = vperm.xlu0 %4403, %v4097
        %v4405 = vpop.permute.xlu0 %4404
        %4408 = vset.pattern.permute.xlu0 0
        %4409 = vperm.xlu0 %4408, %v4099
        %v4410 = vpop.permute.xlu0 %4409
        %4413 = vset.pattern.permute.xlu0 0
        %4414 = vperm.xlu0 %4413, %v4101
        %v4415 = vpop.permute.xlu0 %4414
        %4418 = vset.pattern.permute.xlu0 0
        %4419 = vperm.xlu0 %4418, %v4103
        %v4420 = vpop.permute.xlu0 %4419
        %4423 = vset.pattern.permute.xlu0 0
        %4424 = vperm.xlu0 %4423, %v4105
        %v4425 = vpop.permute.xlu0 %4424
        %v4427 = vmul.f32 %v4350, %v4331
        %v4428 = vmul.f32 %v4355, %v4332
        %v4429 = vmul.f32 %v4360, %v4333
        %v4430 = vmul.f32 %v4365, %v4334
        %v4431 = vmul.f32 %v4370, %v4335
        %v4432 = vmul.f32 %v4375, %v4336
        %v4433 = vmul.f32 %v4380, %v4337
        %v4434 = vmul.f32 %v4385, %v4338
        %v4435 = vmul.f32 %v4390, %v4339
        %v4436 = vmul.f32 %v4395, %v4340
        %v4437 = vmul.f32 %v4400, %v4341
        %v4438 = vmul.f32 %v4405, %v4342
        %v4439 = vmul.f32 %v4410, %v4343
        %v4440 = vmul.f32 %v4415, %v4344
        %v4441 = vmul.f32 %v4420, %v4345
        %v4442 = vmul.f32 %v4425, %v4346
        %v4443 = vpack.c.bf16 %v4205, %v4203
        %v4444 = vpack.c.bf16 %v4209, %v4207
        %v4445 = vpack.c.bf16 %v4213, %v4211
        %v4446 = vpack.c.bf16 %v4217, %v4215
        %v4447 = vpack.c.bf16 %v4221, %v4219
        %v4448 = vpack.c.bf16 %v4225, %v4223
        %v4449 = vpack.c.bf16 %v4229, %v4227
        %v4450 = vpack.c.bf16 %v4233, %v4231
        %4451 = vrot.lane.b32.xlu0 %v1250, 32
        %v4452 = vpop.permute.xlu0 %4451
        %4453 = vrot.lane.b32.xlu0 %v1251, 32
        %v4454 = vpop.permute.xlu0 %4453
        %4455 = vrot.lane.b32.xlu0 %v1252, 32
        %v4456 = vpop.permute.xlu0 %4455
        %4457 = vrot.lane.b32.xlu0 %v1253, 32
        %v4458 = vpop.permute.xlu0 %4457
        %4459 = vrot.lane.b32.xlu0 %v1254, 32
        %v4460 = vpop.permute.xlu0 %4459
        %4461 = vrot.lane.b32.xlu0 %v1255, 32
        %v4462 = vpop.permute.xlu0 %4461
        %4463 = vrot.lane.b32.xlu0 %v1256, 32
        %v4464 = vpop.permute.xlu0 %4463
        %4465 = vrot.lane.b32.xlu0 %v1257, 32
        %v4466 = vpop.permute.xlu0 %4465
        %4475 = vmatprep.subr.bf16.mxu0 0
        %4476 = vmatpush1.bf16.msra.mxu0 %v4452
        %4477 = vmatprep.subr.bf16.mxu0 0
        %4478 = vmatpush1.bf16.msra.mxu0 %v4454
        %4479 = vmatprep.subr.bf16.mxu0 0
        %4480 = vmatpush1.bf16.msra.mxu0 %v4456
        %4481 = vmatprep.subr.bf16.mxu0 0
        %4482 = vmatpush1.bf16.msra.mxu0 %v4458
        %4483 = vmatprep.subr.bf16.mxu0 0
        %4484 = vmatpush1.bf16.msra.mxu0 %v4460
        %4485 = vmatprep.subr.bf16.mxu0 0
        %4486 = vmatpush1.bf16.msra.mxu0 %v4462
        %4487 = vmatprep.subr.bf16.mxu0 0
        %4488 = vmatpush1.bf16.msra.mxu0 %v4464
        %4489 = vmatprep.subr.bf16.mxu0 0
        %4490 = vmatpush1.bf16.msra.mxu0 %v4466
        %4491 = vmatprep.subr.bf16.mxu0 0
        %4492 = vmatpush1.bf16.msra.mxu0 0
        %4493 = vmatprep.subr.bf16.mxu0 0
        %4494 = vmatpush1.bf16.msra.mxu0 0
        %4495 = vmatprep.subr.bf16.mxu0 0
        %4496 = vmatpush1.bf16.msra.mxu0 0
        %4497 = vmatprep.subr.bf16.mxu0 0
        %4498 = vmatpush1.bf16.msra.mxu0 0
        %4499 = vmatprep.subr.bf16.mxu0 0
        %4500 = vmatpush1.bf16.msra.mxu0 0
        %4501 = vmatprep.subr.bf16.mxu0 0
        %4502 = vmatpush1.bf16.msra.mxu0 0
        %4503 = vmatprep.subr.bf16.mxu0 0
        %4504 = vmatpush1.bf16.msra.mxu0 0
        %4505 = vmatprep.subr.bf16.mxu0 0
        %4506 = vmatpush1.bf16.msra.mxu0 0
        %4507 = vmatprep.mubr.bf16.mxu0 0
        %4508 = vmatmul.mubr.bf16.gmra.mrb[0].mxu0 %v4443
        %v4509 = vpop.f32.mrb[0].mxu0
        %v4510 = vadd.f32 0.0, %v4509
        %v4511 = vpop.f32.mrb[0].mxu0
        %v4512 = vpop.f32.mrb[0].mxu0
        %v4513 = vadd.f32 0.0, %v4512
        %v4514 = vpop.f32.mrb[0].mxu0
        %4515 = vmatprep.mubr.bf16.mxu0 0
        %4516 = vmatmul.mubr.bf16.gmra.mrb[0].mxu0 %v4444
        %v4517 = vpop.f32.mrb[0].mxu0
        %v4518 = vadd.f32 0.0, %v4517
        %v4519 = vpop.f32.mrb[0].mxu0
        %v4520 = vpop.f32.mrb[0].mxu0
        %v4521 = vadd.f32 0.0, %v4520
        %v4522 = vpop.f32.mrb[0].mxu0
        %4523 = vmatprep.mubr.bf16.mxu0 0
        %4524 = vmatmul.mubr.bf16.gmra.mrb[0].mxu0 %v4445
        %v4525 = vpop.f32.mrb[0].mxu0
        %v4526 = vadd.f32 0.0, %v4525
        %v4527 = vpop.f32.mrb[0].mxu0
        %v4528 = vpop.f32.mrb[0].mxu0
        %v4529 = vadd.f32 0.0, %v4528
        %v4530 = vpop.f32.mrb[0].mxu0
        %4531 = vmatprep.mubr.bf16.mxu0 0
        %4532 = vmatmul.mubr.bf16.gmra.mrb[0].mxu0 %v4446
        %v4533 = vpop.f32.mrb[0].mxu0
        %v4534 = vadd.f32 0.0, %v4533
        %v4535 = vpop.f32.mrb[0].mxu0
        %v4536 = vpop.f32.mrb[0].mxu0
        %v4537 = vadd.f32 0.0, %v4536
        %v4538 = vpop.f32.mrb[0].mxu0
        %4539 = vmatprep.mubr.bf16.mxu0 0
        %4540 = vmatmul.mubr.bf16.gmra.mrb[0].mxu0 %v4447
        %v4541 = vpop.f32.mrb[0].mxu0
        %v4542 = vadd.f32 0.0, %v4541
        %v4543 = vpop.f32.mrb[0].mxu0
        %v4544 = vpop.f32.mrb[0].mxu0
        %v4545 = vadd.f32 0.0, %v4544
        %v4546 = vpop.f32.mrb[0].mxu0
        %4547 = vmatprep.mubr.bf16.mxu0 0
        %4548 = vmatmul.mubr.bf16.gmra.mrb[0].mxu0 %v4448
        %v4549 = vpop.f32.mrb[0].mxu0
        %v4550 = vadd.f32 0.0, %v4549
        %v4551 = vpop.f32.mrb[0].mxu0
        %v4552 = vpop.f32.mrb[0].mxu0
        %v4553 = vadd.f32 0.0, %v4552
        %v4554 = vpop.f32.mrb[0].mxu0
        %4555 = vmatprep.mubr.bf16.mxu0 0
        %4556 = vmatmul.mubr.bf16.gmra.mrb[0].mxu0 %v4449
        %v4557 = vpop.f32.mrb[0].mxu0
        %v4558 = vadd.f32 0.0, %v4557
        %v4559 = vpop.f32.mrb[0].mxu0
        %v4560 = vpop.f32.mrb[0].mxu0
        %v4561 = vadd.f32 0.0, %v4560
        %v4562 = vpop.f32.mrb[0].mxu0
        %4563 = vmatprep.mubr.bf16.mxu0 0
        %4564 = vmatmul.mubr.bf16.gmra.mrb[0].mxu0 %v4450
        %v4565 = vpop.f32.mrb[0].mxu0
        %v4566 = vadd.f32 0.0, %v4565
        %v4567 = vpop.f32.mrb[0].mxu0
        %v4568 = vpop.f32.mrb[0].mxu0
        %v4569 = vadd.f32 0.0, %v4568
        %v4570 = vpop.f32.mrb[0].mxu0
        %4571 = vdwg.mxu0
        %4588 = vrot.lane.b32.xlu0 %v4510, 96
        %v4589 = vpop.permute.xlu0 %4588
        %4590 = vrot.lane.b32.xlu0 %v4513, 96
        %v4591 = vpop.permute.xlu0 %4590
        %4592 = vrot.lane.b32.xlu0 %v4518, 96
        %v4593 = vpop.permute.xlu0 %4592
        %4594 = vrot.lane.b32.xlu0 %v4521, 96
        %v4595 = vpop.permute.xlu0 %4594
        %4596 = vrot.lane.b32.xlu0 %v4526, 96
        %v4597 = vpop.permute.xlu0 %4596
        %4598 = vrot.lane.b32.xlu0 %v4529, 96
        %v4599 = vpop.permute.xlu0 %4598
        %4600 = vrot.lane.b32.xlu0 %v4534, 96
        %v4601 = vpop.permute.xlu0 %4600
        %4602 = vrot.lane.b32.xlu0 %v4537, 96
        %v4603 = vpop.permute.xlu0 %4602
        %4604 = vrot.lane.b32.xlu0 %v4542, 96
        %v4605 = vpop.permute.xlu0 %4604
        %4606 = vrot.lane.b32.xlu0 %v4545, 96
        %v4607 = vpop.permute.xlu0 %4606
        %4608 = vrot.lane.b32.xlu0 %v4550, 96
        %v4609 = vpop.permute.xlu0 %4608
        %4610 = vrot.lane.b32.xlu0 %v4553, 96
        %v4611 = vpop.permute.xlu0 %4610
        %4612 = vrot.lane.b32.xlu0 %v4558, 96
        %v4613 = vpop.permute.xlu0 %4612
        %4614 = vrot.lane.b32.xlu0 %v4561, 96
        %v4615 = vpop.permute.xlu0 %4614
        %4616 = vrot.lane.b32.xlu0 %v4566, 96
        %v4617 = vpop.permute.xlu0 %4616
        %4618 = vrot.lane.b32.xlu0 %v4569, 96
        %v4619 = vpop.permute.xlu0 %4618
        %v4636 = vadd.f32 %v4427, %v4589
        %v4637 = vadd.f32 %v4428, %v4591
        %v4638 = vadd.f32 %v4429, %v4593
        %v4639 = vadd.f32 %v4430, %v4595
        %v4640 = vadd.f32 %v4431, %v4597
        %v4641 = vadd.f32 %v4432, %v4599
        %v4642 = vadd.f32 %v4433, %v4601
        %v4643 = vadd.f32 %v4434, %v4603
        %v4644 = vadd.f32 %v4435, %v4605
        %v4645 = vadd.f32 %v4436, %v4607
        %v4646 = vadd.f32 %v4437, %v4609
        %v4647 = vadd.f32 %v4438, %v4611
        %v4648 = vadd.f32 %v4439, %v4613
        %v4649 = vadd.f32 %v4440, %v4615
        %v4650 = vadd.f32 %v4441, %v4617
        %v4651 = vadd.f32 %v4442, %v4619
        %vm4652 = vcmask 1048320
        %4653 = vst.msk [vmem:[#allocation5] sm:$0xff] %vm4652, %v4636
        %4654 = vst.msk [vmem:[#allocation5 + $0x8] sm:$0xff] %vm4652, %v4637
        %4655 = vst.msk [vmem:[#allocation5 + $0x10] sm:$0xff] %vm4652, %v4638
        %4656 = vst.msk [vmem:[#allocation5 + $0x18] sm:$0xff] %vm4652, %v4639
        %4657 = vst.msk [vmem:[#allocation5 + $0x20] sm:$0xff] %vm4652, %v4640
        %4658 = vst.msk [vmem:[#allocation5 + $0x28] sm:$0xff] %vm4652, %v4641
        %4659 = vst.msk [vmem:[#allocation5 + $0x30] sm:$0xff] %vm4652, %v4642
        %4660 = vst.msk [vmem:[#allocation5 + $0x38] sm:$0xff] %vm4652, %v4643
        %4661 = vst.msk [vmem:[#allocation5 + $0x40] sm:$0xff] %vm4652, %v4644
        %4662 = vst.msk [vmem:[#allocation5 + $0x48] sm:$0xff] %vm4652, %v4645
        %4663 = vst.msk [vmem:[#allocation5 + $0x50] sm:$0xff] %vm4652, %v4646
        %4664 = vst.msk [vmem:[#allocation5 + $0x58] sm:$0xff] %vm4652, %v4647
        %4665 = vst.msk [vmem:[#allocation5 + $0x60] sm:$0xff] %vm4652, %v4648
        %4666 = vst.msk [vmem:[#allocation5 + $0x68] sm:$0xff] %vm4652, %v4649
        %4667 = vst.msk [vmem:[#allocation5 + $0x70] sm:$0xff] %vm4652, %v4650
        %4668 = vst.msk [vmem:[#allocation5 + $0x78] sm:$0xff] %vm4652, %v4651
        %4669 = vst.msk [vmem:[%s3993] sm:$0xff] %vm1732, %v4042
        %4670 = vst.msk [vmem:[%s3993 + $0x8] sm:$0xff] %vm1732, %v4043
        %4671 = vst.msk [vmem:[%s3993 + $0x10] sm:$0xff] %vm1732, %v4044
        %4672 = vst.msk [vmem:[%s3993 + $0x18] sm:$0xff] %vm1732, %v4045
        %4673 = vst.msk [vmem:[%s3993 + $0x20] sm:$0xff] %vm1732, %v4046
        %4674 = vst.msk [vmem:[%s3993 + $0x28] sm:$0xff] %vm1732, %v4047
        %4675 = vst.msk [vmem:[%s3993 + $0x30] sm:$0xff] %vm1732, %v4048
        %4676 = vst.msk [vmem:[%s3993 + $0x38] sm:$0xff] %vm1732, %v4049
        %4677 = vst.msk [vmem:[%s3993 + $0x40] sm:$0xff] %vm1732, %v4050
        %4678 = vst.msk [vmem:[%s3993 + $0x48] sm:$0xff] %vm1732, %v4051
        %4679 = vst.msk [vmem:[%s3993 + $0x50] sm:$0xff] %vm1732, %v4052
        %4680 = vst.msk [vmem:[%s3993 + $0x58] sm:$0xff] %vm1732, %v4053
        %4681 = vst.msk [vmem:[%s3993 + $0x60] sm:$0xff] %vm1732, %v4054
        %4682 = vst.msk [vmem:[%s3993 + $0x68] sm:$0xff] %vm1732, %v4055
        %4683 = vst.msk [vmem:[%s3993 + $0x70] sm:$0xff] %vm1732, %v4056
        %4684 = vst.msk [vmem:[%s3993 + $0x78] sm:$0xff] %vm1732, %v4057
        %p4685 = scmp.eq.s32.totalorder %s39, 1
        // Predicated region
        $region89: #{tpu_custom_call.1} parent=59 // pred_check
          %p4686 = pneg %p4685
        $region90: #{tpu_custom_call.1} parent=59 // pred_check_branch
          %4688 = sbr.rel (%p4686) target = $region92
        $region91: #{tpu_custom_call.1} parent=59 // pred_region
          %v4689 = vld [vmem:[#allocation5] sm:$0xff]
          %v4690 = vld [vmem:[#allocation5 + $0x8] sm:$0xff]
          %v4691 = vld [vmem:[#allocation5 + $0x10] sm:$0xff]
          %v4692 = vld [vmem:[#allocation5 + $0x18] sm:$0xff]
          %v4693 = vld [vmem:[#allocation5 + $0x20] sm:$0xff]
          %v4694 = vld [vmem:[#allocation5 + $0x28] sm:$0xff]
          %v4695 = vld [vmem:[#allocation5 + $0x30] sm:$0xff]
          %v4696 = vld [vmem:[#allocation5 + $0x38] sm:$0xff]
          %v4697 = vld [vmem:[#allocation5 + $0x40] sm:$0xff]
          %v4698 = vld [vmem:[#allocation5 + $0x48] sm:$0xff]
          %v4699 = vld [vmem:[#allocation5 + $0x50] sm:$0xff]
          %v4700 = vld [vmem:[#allocation5 + $0x58] sm:$0xff]
          %v4701 = vld [vmem:[#allocation5 + $0x60] sm:$0xff]
          %v4702 = vld [vmem:[#allocation5 + $0x68] sm:$0xff]
          %v4703 = vld [vmem:[#allocation5 + $0x70] sm:$0xff]
          %v4704 = vld [vmem:[#allocation5 + $0x78] sm:$0xff]
          %v4705 = vld [vmem:[#allocation4] sm:$0xff]
          %v4706 = vld [vmem:[#allocation4 + $0x8] sm:$0xff]
          %v4707 = vld [vmem:[#allocation4 + $0x10] sm:$0xff]
          %v4708 = vld [vmem:[#allocation4 + $0x18] sm:$0xff]
          %v4709 = vld [vmem:[#allocation4 + $0x20] sm:$0xff]
          %v4710 = vld [vmem:[#allocation4 + $0x28] sm:$0xff]
          %v4711 = vld [vmem:[#allocation4 + $0x30] sm:$0xff]
          %v4712 = vld [vmem:[#allocation4 + $0x38] sm:$0xff]
          %v4713 = vld [vmem:[#allocation4 + $0x40] sm:$0xff]
          %v4714 = vld [vmem:[#allocation4 + $0x48] sm:$0xff]
          %v4715 = vld [vmem:[#allocation4 + $0x50] sm:$0xff]
          %v4716 = vld [vmem:[#allocation4 + $0x58] sm:$0xff]
          %v4717 = vld [vmem:[#allocation4 + $0x60] sm:$0xff]
          %v4718 = vld [vmem:[#allocation4 + $0x68] sm:$0xff]
          %v4719 = vld [vmem:[#allocation4 + $0x70] sm:$0xff]
          %v4720 = vld [vmem:[#allocation4 + $0x78] sm:$0xff]
          %v4721 = vrcp.pop %v4705
          %v4722 = vrcp.pop %v4706
          %v4723 = vrcp.pop %v4707
          %v4724 = vrcp.pop %v4708
          %v4725 = vrcp.pop %v4709
          %v4726 = vrcp.pop %v4710
          %v4727 = vrcp.pop %v4711
          %v4728 = vrcp.pop %v4712
          %v4729 = vrcp.pop %v4713
          %v4730 = vrcp.pop %v4714
          %v4731 = vrcp.pop %v4715
          %v4732 = vrcp.pop %v4716
          %v4733 = vrcp.pop %v4717
          %v4734 = vrcp.pop %v4718
          %v4735 = vrcp.pop %v4719
          %v4736 = vrcp.pop %v4720
          %4738 = vset.pattern.permute.xlu0 0
          %4739 = vperm.xlu0 %4738, %v4721
          %v4740 = vpop.permute.xlu0 %4739
          %4743 = vset.pattern.permute.xlu0 0
          %4744 = vperm.xlu0 %4743, %v4722
          %v4745 = vpop.permute.xlu0 %4744
          %4748 = vset.pattern.permute.xlu0 0
          %4749 = vperm.xlu0 %4748, %v4723
          %v4750 = vpop.permute.xlu0 %4749
          %4753 = vset.pattern.permute.xlu0 0
          %4754 = vperm.xlu0 %4753, %v4724
          %v4755 = vpop.permute.xlu0 %4754
          %4758 = vset.pattern.permute.xlu0 0
          %4759 = vperm.xlu0 %4758, %v4725
          %v4760 = vpop.permute.xlu0 %4759
          %4763 = vset.pattern.permute.xlu0 0
          %4764 = vperm.xlu0 %4763, %v4726
          %v4765 = vpop.permute.xlu0 %4764
          %4768 = vset.pattern.permute.xlu0 0
          %4769 = vperm.xlu0 %4768, %v4727
          %v4770 = vpop.permute.xlu0 %4769
          %4773 = vset.pattern.permute.xlu0 0
          %4774 = vperm.xlu0 %4773, %v4728
          %v4775 = vpop.permute.xlu0 %4774
          %4778 = vset.pattern.permute.xlu0 0
          %4779 = vperm.xlu0 %4778, %v4729
          %v4780 = vpop.permute.xlu0 %4779
          %4783 = vset.pattern.permute.xlu0 0
          %4784 = vperm.xlu0 %4783, %v4730
          %v4785 = vpop.permute.xlu0 %4784
          %4788 = vset.pattern.permute.xlu0 0
          %4789 = vperm.xlu0 %4788, %v4731
          %v4790 = vpop.permute.xlu0 %4789
          %4793 = vset.pattern.permute.xlu0 0
          %4794 = vperm.xlu0 %4793, %v4732
          %v4795 = vpop.permute.xlu0 %4794
          %4798 = vset.pattern.permute.xlu0 0
          %4799 = vperm.xlu0 %4798, %v4733
          %v4800 = vpop.permute.xlu0 %4799
          %4803 = vset.pattern.permute.xlu0 0
          %4804 = vperm.xlu0 %4803, %v4734
          %v4805 = vpop.permute.xlu0 %4804
          %4808 = vset.pattern.permute.xlu0 0
          %4809 = vperm.xlu0 %4808, %v4735
          %v4810 = vpop.permute.xlu0 %4809
          %4813 = vset.pattern.permute.xlu0 0
          %4814 = vperm.xlu0 %4813, %v4736
          %v4815 = vpop.permute.xlu0 %4814
          %v4817 = vmul.f32 %v4689, %v4740
          %v4818 = vmul.f32 %v4690, %v4745
          %v4819 = vmul.f32 %v4691, %v4750
          %v4820 = vmul.f32 %v4692, %v4755
          %v4821 = vmul.f32 %v4693, %v4760
          %v4822 = vmul.f32 %v4694, %v4765
          %v4823 = vmul.f32 %v4695, %v4770
          %v4824 = vmul.f32 %v4696, %v4775
          %v4825 = vmul.f32 %v4697, %v4780
          %v4826 = vmul.f32 %v4698, %v4785
          %v4827 = vmul.f32 %v4699, %v4790
          %v4828 = vmul.f32 %v4700, %v4795
          %v4829 = vmul.f32 %v4701, %v4800
          %v4830 = vmul.f32 %v4702, %v4805
          %v4831 = vmul.f32 %v4703, %v4810
          %v4832 = vmul.f32 %v4704, %v4815
          %4833 = vst.msk [vmem:[#allocation5] sm:$0xff] %vm1266, %v4817
          %4834 = vst.msk [vmem:[#allocation5 + $0x8] sm:$0xff] %vm1266, %v4818
          %4835 = vst.msk [vmem:[#allocation5 + $0x10] sm:$0xff] %vm1266, %v4819
          %4836 = vst.msk [vmem:[#allocation5 + $0x18] sm:$0xff] %vm1266, %v4820
          %4837 = vst.msk [vmem:[#allocation5 + $0x20] sm:$0xff] %vm1266, %v4821
          %4838 = vst.msk [vmem:[#allocation5 + $0x28] sm:$0xff] %vm1266, %v4822
          %4839 = vst.msk [vmem:[#allocation5 + $0x30] sm:$0xff] %vm1266, %v4823
          %4840 = vst.msk [vmem:[#allocation5 + $0x38] sm:$0xff] %vm1266, %v4824
          %4841 = vst.msk [vmem:[#allocation5 + $0x40] sm:$0xff] %vm1266, %v4825
          %4842 = vst.msk [vmem:[#allocation5 + $0x48] sm:$0xff] %vm1266, %v4826
          %4843 = vst.msk [vmem:[#allocation5 + $0x50] sm:$0xff] %vm1266, %v4827
          %4844 = vst.msk [vmem:[#allocation5 + $0x58] sm:$0xff] %vm1266, %v4828
          %4845 = vst.msk [vmem:[#allocation5 + $0x60] sm:$0xff] %vm1266, %v4829
          %4846 = vst.msk [vmem:[#allocation5 + $0x68] sm:$0xff] %vm1266, %v4830
          %4847 = vst.msk [vmem:[#allocation5 + $0x70] sm:$0xff] %vm1266, %v4831
          %4848 = vst.msk [vmem:[#allocation5 + $0x78] sm:$0xff] %vm1266, %v4832
          %v4849 = vld [vmem:[#allocation5] sm:$0xff]
          %v4850 = vld [vmem:[#allocation5 + $0x8] sm:$0xff]
          %v4851 = vld [vmem:[#allocation5 + $0x10] sm:$0xff]
          %v4852 = vld [vmem:[#allocation5 + $0x18] sm:$0xff]
          %v4853 = vld [vmem:[#allocation5 + $0x20] sm:$0xff]
          %v4854 = vld [vmem:[#allocation5 + $0x28] sm:$0xff]
          %v4855 = vld [vmem:[#allocation5 + $0x30] sm:$0xff]
          %v4856 = vld [vmem:[#allocation5 + $0x38] sm:$0xff]
          %v4857 = vld [vmem:[#allocation5 + $0x40] sm:$0xff]
          %v4858 = vld [vmem:[#allocation5 + $0x48] sm:$0xff]
          %v4859 = vld [vmem:[#allocation5 + $0x50] sm:$0xff]
          %v4860 = vld [vmem:[#allocation5 + $0x58] sm:$0xff]
          %v4861 = vld [vmem:[#allocation5 + $0x60] sm:$0xff]
          %v4862 = vld [vmem:[#allocation5 + $0x68] sm:$0xff]
          %v4863 = vld [vmem:[#allocation5 + $0x70] sm:$0xff]
          %v4864 = vld [vmem:[#allocation5 + $0x78] sm:$0xff]
          %v4865 = vld [vmem:[%s2456] sm:$0xff]
          %v4866 = vld [vmem:[%s2456 + $0x8] sm:$0xff]
          %v4867 = vld [vmem:[%s2456 + $0x10] sm:$0xff]
          %v4868 = vld [vmem:[%s2456 + $0x18] sm:$0xff]
          %v4869 = vld [vmem:[%s2456 + $0x20] sm:$0xff]
          %v4870 = vld [vmem:[%s2456 + $0x28] sm:$0xff]
          %v4871 = vld [vmem:[%s2456 + $0x30] sm:$0xff]
          %v4872 = vld [vmem:[%s2456 + $0x38] sm:$0xff]
          %v4873 = vld [vmem:[%s2456 + $0x40] sm:$0xff]
          %v4874 = vld [vmem:[%s2456 + $0x48] sm:$0xff]
          %v4875 = vld [vmem:[%s2456 + $0x50] sm:$0xff]
          %v4876 = vld [vmem:[%s2456 + $0x58] sm:$0xff]
          %v4877 = vld [vmem:[%s2456 + $0x60] sm:$0xff]
          %v4878 = vld [vmem:[%s2456 + $0x68] sm:$0xff]
          %v4879 = vld [vmem:[%s2456 + $0x70] sm:$0xff]
          %v4880 = vld [vmem:[%s2456 + $0x78] sm:$0xff]
          %v4881 = vrcp.pop %v4865
          %v4882 = vrcp.pop %v4866
          %v4883 = vrcp.pop %v4867
          %v4884 = vrcp.pop %v4868
          %v4885 = vrcp.pop %v4869
          %v4886 = vrcp.pop %v4870
          %v4887 = vrcp.pop %v4871
          %v4888 = vrcp.pop %v4872
          %v4889 = vrcp.pop %v4873
          %v4890 = vrcp.pop %v4874
          %v4891 = vrcp.pop %v4875
          %v4892 = vrcp.pop %v4876
          %v4893 = vrcp.pop %v4877
          %v4894 = vrcp.pop %v4878
          %v4895 = vrcp.pop %v4879
          %v4896 = vrcp.pop %v4880
          %4898 = vset.pattern.permute.xlu0 0
          %4899 = vperm.xlu0 %4898, %v4881
          %v4900 = vpop.permute.xlu0 %4899
          %4903 = vset.pattern.permute.xlu0 0
          %4904 = vperm.xlu0 %4903, %v4882
          %v4905 = vpop.permute.xlu0 %4904
          %4908 = vset.pattern.permute.xlu0 0
          %4909 = vperm.xlu0 %4908, %v4883
          %v4910 = vpop.permute.xlu0 %4909
          %4913 = vset.pattern.permute.xlu0 0
          %4914 = vperm.xlu0 %4913, %v4884
          %v4915 = vpop.permute.xlu0 %4914
          %4918 = vset.pattern.permute.xlu0 0
          %4919 = vperm.xlu0 %4918, %v4885
          %v4920 = vpop.permute.xlu0 %4919
          %4923 = vset.pattern.permute.xlu0 0
          %4924 = vperm.xlu0 %4923, %v4886
          %v4925 = vpop.permute.xlu0 %4924
          %4928 = vset.pattern.permute.xlu0 0
          %4929 = vperm.xlu0 %4928, %v4887
          %v4930 = vpop.permute.xlu0 %4929
          %4933 = vset.pattern.permute.xlu0 0
          %4934 = vperm.xlu0 %4933, %v4888
          %v4935 = vpop.permute.xlu0 %4934
          %4938 = vset.pattern.permute.xlu0 0
          %4939 = vperm.xlu0 %4938, %v4889
          %v4940 = vpop.permute.xlu0 %4939
          %4943 = vset.pattern.permute.xlu0 0
          %4944 = vperm.xlu0 %4943, %v4890
          %v4945 = vpop.permute.xlu0 %4944
          %4948 = vset.pattern.permute.xlu0 0
          %4949 = vperm.xlu0 %4948, %v4891
          %v4950 = vpop.permute.xlu0 %4949
          %4953 = vset.pattern.permute.xlu0 0
          %4954 = vperm.xlu0 %4953, %v4892
          %v4955 = vpop.permute.xlu0 %4954
          %4958 = vset.pattern.permute.xlu0 0
          %4959 = vperm.xlu0 %4958, %v4893
          %v4960 = vpop.permute.xlu0 %4959
          %4963 = vset.pattern.permute.xlu0 0
          %4964 = vperm.xlu0 %4963, %v4894
          %v4965 = vpop.permute.xlu0 %4964
          %4968 = vset.pattern.permute.xlu0 0
          %4969 = vperm.xlu0 %4968, %v4895
          %v4970 = vpop.permute.xlu0 %4969
          %4973 = vset.pattern.permute.xlu0 0
          %4974 = vperm.xlu0 %4973, %v4896
          %v4975 = vpop.permute.xlu0 %4974
          %v4977 = vmul.f32 %v4849, %v4900
          %v4978 = vmul.f32 %v4850, %v4905
          %v4979 = vmul.f32 %v4851, %v4910
          %v4980 = vmul.f32 %v4852, %v4915
          %v4981 = vmul.f32 %v4853, %v4920
          %v4982 = vmul.f32 %v4854, %v4925
          %v4983 = vmul.f32 %v4855, %v4930
          %v4984 = vmul.f32 %v4856, %v4935
          %v4985 = vmul.f32 %v4857, %v4940
          %v4986 = vmul.f32 %v4858, %v4945
          %v4987 = vmul.f32 %v4859, %v4950
          %v4988 = vmul.f32 %v4860, %v4955
          %v4989 = vmul.f32 %v4861, %v4960
          %v4990 = vmul.f32 %v4862, %v4965
          %v4991 = vmul.f32 %v4863, %v4970
          %v4992 = vmul.f32 %v4864, %v4975
          %4993 = vst.msk [vmem:[#allocation5] sm:$0xff] %vm2882, %v4977
          %4994 = vst.msk [vmem:[#allocation5 + $0x8] sm:$0xff] %vm2882, %v4978
          %4995 = vst.msk [vmem:[#allocation5 + $0x10] sm:$0xff] %vm2882, %v4979
          %4996 = vst.msk [vmem:[#allocation5 + $0x18] sm:$0xff] %vm2882, %v4980
          %4997 = vst.msk [vmem:[#allocation5 + $0x20] sm:$0xff] %vm2882, %v4981
          %4998 = vst.msk [vmem:[#allocation5 + $0x28] sm:$0xff] %vm2882, %v4982
          %4999 = vst.msk [vmem:[#allocation5 + $0x30] sm:$0xff] %vm2882, %v4983
          %5000 = vst.msk [vmem:[#allocation5 + $0x38] sm:$0xff] %vm2882, %v4984
          %5001 = vst.msk [vmem:[#allocation5 + $0x40] sm:$0xff] %vm2882, %v4985
          %5002 = vst.msk [vmem:[#allocation5 + $0x48] sm:$0xff] %vm2882, %v4986
          %5003 = vst.msk [vmem:[#allocation5 + $0x50] sm:$0xff] %vm2882, %v4987
          %5004 = vst.msk [vmem:[#allocation5 + $0x58] sm:$0xff] %vm2882, %v4988
          %5005 = vst.msk [vmem:[#allocation5 + $0x60] sm:$0xff] %vm2882, %v4989
          %5006 = vst.msk [vmem:[#allocation5 + $0x68] sm:$0xff] %vm2882, %v4990
          %5007 = vst.msk [vmem:[#allocation5 + $0x70] sm:$0xff] %vm2882, %v4991
          %5008 = vst.msk [vmem:[#allocation5 + $0x78] sm:$0xff] %vm2882, %v4992
          %v5009 = vld [vmem:[#allocation5] sm:$0xff]
          %v5010 = vld [vmem:[#allocation5 + $0x8] sm:$0xff]
          %v5011 = vld [vmem:[#allocation5 + $0x10] sm:$0xff]
          %v5012 = vld [vmem:[#allocation5 + $0x18] sm:$0xff]
          %v5013 = vld [vmem:[#allocation5 + $0x20] sm:$0xff]
          %v5014 = vld [vmem:[#allocation5 + $0x28] sm:$0xff]
          %v5015 = vld [vmem:[#allocation5 + $0x30] sm:$0xff]
          %v5016 = vld [vmem:[#allocation5 + $0x38] sm:$0xff]
          %v5017 = vld [vmem:[#allocation5 + $0x40] sm:$0xff]
          %v5018 = vld [vmem:[#allocation5 + $0x48] sm:$0xff]
          %v5019 = vld [vmem:[#allocation5 + $0x50] sm:$0xff]
          %v5020 = vld [vmem:[#allocation5 + $0x58] sm:$0xff]
          %v5021 = vld [vmem:[#allocation5 + $0x60] sm:$0xff]
          %v5022 = vld [vmem:[#allocation5 + $0x68] sm:$0xff]
          %v5023 = vld [vmem:[#allocation5 + $0x70] sm:$0xff]
          %v5024 = vld [vmem:[#allocation5 + $0x78] sm:$0xff]
          %v5025 = vld [vmem:[%s3349] sm:$0xff]
          %v5026 = vld [vmem:[%s3349 + $0x8] sm:$0xff]
          %v5027 = vld [vmem:[%s3349 + $0x10] sm:$0xff]
          %v5028 = vld [vmem:[%s3349 + $0x18] sm:$0xff]
          %v5029 = vld [vmem:[%s3349 + $0x20] sm:$0xff]
          %v5030 = vld [vmem:[%s3349 + $0x28] sm:$0xff]
          %v5031 = vld [vmem:[%s3349 + $0x30] sm:$0xff]
          %v5032 = vld [vmem:[%s3349 + $0x38] sm:$0xff]
          %v5033 = vld [vmem:[%s3349 + $0x40] sm:$0xff]
          %v5034 = vld [vmem:[%s3349 + $0x48] sm:$0xff]
          %v5035 = vld [vmem:[%s3349 + $0x50] sm:$0xff]
          %v5036 = vld [vmem:[%s3349 + $0x58] sm:$0xff]
          %v5037 = vld [vmem:[%s3349 + $0x60] sm:$0xff]
          %v5038 = vld [vmem:[%s3349 + $0x68] sm:$0xff]
          %v5039 = vld [vmem:[%s3349 + $0x70] sm:$0xff]
          %v5040 = vld [vmem:[%s3349 + $0x78] sm:$0xff]
          %v5041 = vrcp.pop %v5025
          %v5042 = vrcp.pop %v5026
          %v5043 = vrcp.pop %v5027
          %v5044 = vrcp.pop %v5028
          %v5045 = vrcp.pop %v5029
          %v5046 = vrcp.pop %v5030
          %v5047 = vrcp.pop %v5031
          %v5048 = vrcp.pop %v5032
          %v5049 = vrcp.pop %v5033
          %v5050 = vrcp.pop %v5034
          %v5051 = vrcp.pop %v5035
          %v5052 = vrcp.pop %v5036
          %v5053 = vrcp.pop %v5037
          %v5054 = vrcp.pop %v5038
          %v5055 = vrcp.pop %v5039
          %v5056 = vrcp.pop %v5040
          %5058 = vset.pattern.permute.xlu0 0
          %5059 = vperm.xlu0 %5058, %v5041
          %v5060 = vpop.permute.xlu0 %5059
          %5063 = vset.pattern.permute.xlu0 0
          %5064 = vperm.xlu0 %5063, %v5042
          %v5065 = vpop.permute.xlu0 %5064
          %5068 = vset.pattern.permute.xlu0 0
          %5069 = vperm.xlu0 %5068, %v5043
          %v5070 = vpop.permute.xlu0 %5069
          %5073 = vset.pattern.permute.xlu0 0
          %5074 = vperm.xlu0 %5073, %v5044
          %v5075 = vpop.permute.xlu0 %5074
          %5078 = vset.pattern.permute.xlu0 0
          %5079 = vperm.xlu0 %5078, %v5045
          %v5080 = vpop.permute.xlu0 %5079
          %5083 = vset.pattern.permute.xlu0 0
          %5084 = vperm.xlu0 %5083, %v5046
          %v5085 = vpop.permute.xlu0 %5084
          %5088 = vset.pattern.permute.xlu0 0
          %5089 = vperm.xlu0 %5088, %v5047
          %v5090 = vpop.permute.xlu0 %5089
          %5093 = vset.pattern.permute.xlu0 0
          %5094 = vperm.xlu0 %5093, %v5048
          %v5095 = vpop.permute.xlu0 %5094
          %5098 = vset.pattern.permute.xlu0 0
          %5099 = vperm.xlu0 %5098, %v5049
          %v5100 = vpop.permute.xlu0 %5099
          %5103 = vset.pattern.permute.xlu0 0
          %5104 = vperm.xlu0 %5103, %v5050
          %v5105 = vpop.permute.xlu0 %5104
          %5108 = vset.pattern.permute.xlu0 0
          %5109 = vperm.xlu0 %5108, %v5051
          %v5110 = vpop.permute.xlu0 %5109
          %5113 = vset.pattern.permute.xlu0 0
          %5114 = vperm.xlu0 %5113, %v5052
          %v5115 = vpop.permute.xlu0 %5114
          %5118 = vset.pattern.permute.xlu0 0
          %5119 = vperm.xlu0 %5118, %v5053
          %v5120 = vpop.permute.xlu0 %5119
          %5123 = vset.pattern.permute.xlu0 0
          %5124 = vperm.xlu0 %5123, %v5054
          %v5125 = vpop.permute.xlu0 %5124
          %5128 = vset.pattern.permute.xlu0 0
          %5129 = vperm.xlu0 %5128, %v5055
          %v5130 = vpop.permute.xlu0 %5129
          %5133 = vset.pattern.permute.xlu0 0
          %5134 = vperm.xlu0 %5133, %v5056
          %v5135 = vpop.permute.xlu0 %5134
          %v5137 = vmul.f32 %v5009, %v5060
          %v5138 = vmul.f32 %v5010, %v5065
          %v5139 = vmul.f32 %v5011, %v5070
          %v5140 = vmul.f32 %v5012, %v5075
          %v5141 = vmul.f32 %v5013, %v5080
          %v5142 = vmul.f32 %v5014, %v5085
          %v5143 = vmul.f32 %v5015, %v5090
          %v5144 = vmul.f32 %v5016, %v5095
          %v5145 = vmul.f32 %v5017, %v5100
          %v5146 = vmul.f32 %v5018, %v5105
          %v5147 = vmul.f32 %v5019, %v5110
          %v5148 = vmul.f32 %v5020, %v5115
          %v5149 = vmul.f32 %v5021, %v5120
          %v5150 = vmul.f32 %v5022, %v5125
          %v5151 = vmul.f32 %v5023, %v5130
          %v5152 = vmul.f32 %v5024, %v5135
          %5153 = vst.msk [vmem:[#allocation5] sm:$0xff] %vm3767, %v5137
          %5154 = vst.msk [vmem:[#allocation5 + $0x8] sm:$0xff] %vm3767, %v5138
          %5155 = vst.msk [vmem:[#allocation5 + $0x10] sm:$0xff] %vm3767, %v5139
          %5156 = vst.msk [vmem:[#allocation5 + $0x18] sm:$0xff] %vm3767, %v5140
          %5157 = vst.msk [vmem:[#allocation5 + $0x20] sm:$0xff] %vm3767, %v5141
          %5158 = vst.msk [vmem:[#allocation5 + $0x28] sm:$0xff] %vm3767, %v5142
          %5159 = vst.msk [vmem:[#allocation5 + $0x30] sm:$0xff] %vm3767, %v5143
          %5160 = vst.msk [vmem:[#allocation5 + $0x38] sm:$0xff] %vm3767, %v5144
          %5161 = vst.msk [vmem:[#allocation5 + $0x40] sm:$0xff] %vm3767, %v5145
          %5162 = vst.msk [vmem:[#allocation5 + $0x48] sm:$0xff] %vm3767, %v5146
          %5163 = vst.msk [vmem:[#allocation5 + $0x50] sm:$0xff] %vm3767, %v5147
          %5164 = vst.msk [vmem:[#allocation5 + $0x58] sm:$0xff] %vm3767, %v5148
          %5165 = vst.msk [vmem:[#allocation5 + $0x60] sm:$0xff] %vm3767, %v5149
          %5166 = vst.msk [vmem:[#allocation5 + $0x68] sm:$0xff] %vm3767, %v5150
          %5167 = vst.msk [vmem:[#allocation5 + $0x70] sm:$0xff] %vm3767, %v5151
          %5168 = vst.msk [vmem:[#allocation5 + $0x78] sm:$0xff] %vm3767, %v5152
          %v5169 = vld [vmem:[#allocation5] sm:$0xff]
          %v5170 = vld [vmem:[#allocation5 + $0x8] sm:$0xff]
          %v5171 = vld [vmem:[#allocation5 + $0x10] sm:$0xff]
          %v5172 = vld [vmem:[#allocation5 + $0x18] sm:$0xff]
          %v5173 = vld [vmem:[#allocation5 + $0x20] sm:$0xff]
          %v5174 = vld [vmem:[#allocation5 + $0x28] sm:$0xff]
          %v5175 = vld [vmem:[#allocation5 + $0x30] sm:$0xff]
          %v5176 = vld [vmem:[#allocation5 + $0x38] sm:$0xff]
          %v5177 = vld [vmem:[#allocation5 + $0x40] sm:$0xff]
          %v5178 = vld [vmem:[#allocation5 + $0x48] sm:$0xff]
          %v5179 = vld [vmem:[#allocation5 + $0x50] sm:$0xff]
          %v5180 = vld [vmem:[#allocation5 + $0x58] sm:$0xff]
          %v5181 = vld [vmem:[#allocation5 + $0x60] sm:$0xff]
          %v5182 = vld [vmem:[#allocation5 + $0x68] sm:$0xff]
          %v5183 = vld [vmem:[#allocation5 + $0x70] sm:$0xff]
          %v5184 = vld [vmem:[#allocation5 + $0x78] sm:$0xff]
          %v5185 = vld [vmem:[%s4234] sm:$0xff]
          %v5186 = vld [vmem:[%s4234 + $0x8] sm:$0xff]
          %v5187 = vld [vmem:[%s4234 + $0x10] sm:$0xff]
          %v5188 = vld [vmem:[%s4234 + $0x18] sm:$0xff]
          %v5189 = vld [vmem:[%s4234 + $0x20] sm:$0xff]
          %v5190 = vld [vmem:[%s4234 + $0x28] sm:$0xff]
          %v5191 = vld [vmem:[%s4234 + $0x30] sm:$0xff]
          %v5192 = vld [vmem:[%s4234 + $0x38] sm:$0xff]
          %v5193 = vld [vmem:[%s4234 + $0x40] sm:$0xff]
          %v5194 = vld [vmem:[%s4234 + $0x48] sm:$0xff]
          %v5195 = vld [vmem:[%s4234 + $0x50] sm:$0xff]
          %v5196 = vld [vmem:[%s4234 + $0x58] sm:$0xff]
          %v5197 = vld [vmem:[%s4234 + $0x60] sm:$0xff]
          %v5198 = vld [vmem:[%s4234 + $0x68] sm:$0xff]
          %v5199 = vld [vmem:[%s4234 + $0x70] sm:$0xff]
          %v5200 = vld [vmem:[%s4234 + $0x78] sm:$0xff]
          %v5201 = vrcp.pop %v5185
          %v5202 = vrcp.pop %v5186
          %v5203 = vrcp.pop %v5187
          %v5204 = vrcp.pop %v5188
          %v5205 = vrcp.pop %v5189
          %v5206 = vrcp.pop %v5190
          %v5207 = vrcp.pop %v5191
          %v5208 = vrcp.pop %v5192
          %v5209 = vrcp.pop %v5193
          %v5210 = vrcp.pop %v5194
          %v5211 = vrcp.pop %v5195
          %v5212 = vrcp.pop %v5196
          %v5213 = vrcp.pop %v5197
          %v5214 = vrcp.pop %v5198
          %v5215 = vrcp.pop %v5199
          %v5216 = vrcp.pop %v5200
          %5218 = vset.pattern.permute.xlu0 0
          %5219 = vperm.xlu0 %5218, %v5201
          %v5220 = vpop.permute.xlu0 %5219
          %5223 = vset.pattern.permute.xlu0 0
          %5224 = vperm.xlu0 %5223, %v5202
          %v5225 = vpop.permute.xlu0 %5224
          %5228 = vset.pattern.permute.xlu0 0
          %5229 = vperm.xlu0 %5228, %v5203
          %v5230 = vpop.permute.xlu0 %5229
          %5233 = vset.pattern.permute.xlu0 0
          %5234 = vperm.xlu0 %5233, %v5204
          %v5235 = vpop.permute.xlu0 %5234
          %5238 = vset.pattern.permute.xlu0 0
          %5239 = vperm.xlu0 %5238, %v5205
          %v5240 = vpop.permute.xlu0 %5239
          %5243 = vset.pattern.permute.xlu0 0
          %5244 = vperm.xlu0 %5243, %v5206
          %v5245 = vpop.permute.xlu0 %5244
          %5248 = vset.pattern.permute.xlu0 0
          %5249 = vperm.xlu0 %5248, %v5207
          %v5250 = vpop.permute.xlu0 %5249
          %5253 = vset.pattern.permute.xlu0 0
          %5254 = vperm.xlu0 %5253, %v5208
          %v5255 = vpop.permute.xlu0 %5254
          %5258 = vset.pattern.permute.xlu0 0
          %5259 = vperm.xlu0 %5258, %v5209
          %v5260 = vpop.permute.xlu0 %5259
          %5263 = vset.pattern.permute.xlu0 0
          %5264 = vperm.xlu0 %5263, %v5210
          %v5265 = vpop.permute.xlu0 %5264
          %5268 = vset.pattern.permute.xlu0 0
          %5269 = vperm.xlu0 %5268, %v5211
          %v5270 = vpop.permute.xlu0 %5269
          %5273 = vset.pattern.permute.xlu0 0
          %5274 = vperm.xlu0 %5273, %v5212
          %v5275 = vpop.permute.xlu0 %5274
          %5278 = vset.pattern.permute.xlu0 0
          %5279 = vperm.xlu0 %5278, %v5213
          %v5280 = vpop.permute.xlu0 %5279
          %5283 = vset.pattern.permute.xlu0 0
          %5284 = vperm.xlu0 %5283, %v5214
          %v5285 = vpop.permute.xlu0 %5284
          %5288 = vset.pattern.permute.xlu0 0
          %5289 = vperm.xlu0 %5288, %v5215
          %v5290 = vpop.permute.xlu0 %5289
          %5293 = vset.pattern.permute.xlu0 0
          %5294 = vperm.xlu0 %5293, %v5216
          %v5295 = vpop.permute.xlu0 %5294
          %v5297 = vmul.f32 %v5169, %v5220
          %v5298 = vmul.f32 %v5170, %v5225
          %v5299 = vmul.f32 %v5171, %v5230
          %v5300 = vmul.f32 %v5172, %v5235
          %v5301 = vmul.f32 %v5173, %v5240
          %v5302 = vmul.f32 %v5174, %v5245
          %v5303 = vmul.f32 %v5175, %v5250
          %v5304 = vmul.f32 %v5176, %v5255
          %v5305 = vmul.f32 %v5177, %v5260
          %v5306 = vmul.f32 %v5178, %v5265
          %v5307 = vmul.f32 %v5179, %v5270
          %v5308 = vmul.f32 %v5180, %v5275
          %v5309 = vmul.f32 %v5181, %v5280
          %v5310 = vmul.f32 %v5182, %v5285
          %v5311 = vmul.f32 %v5183, %v5290
          %v5312 = vmul.f32 %v5184, %v5295
          %5313 = vst.msk [vmem:[#allocation5] sm:$0xff] %vm4652, %v5297
          %5314 = vst.msk [vmem:[#allocation5 + $0x8] sm:$0xff] %vm4652, %v5298
          %5315 = vst.msk [vmem:[#allocation5 + $0x10] sm:$0xff] %vm4652, %v5299
          %5316 = vst.msk [vmem:[#allocation5 + $0x18] sm:$0xff] %vm4652, %v5300
          %5317 = vst.msk [vmem:[#allocation5 + $0x20] sm:$0xff] %vm4652, %v5301
          %5318 = vst.msk [vmem:[#allocation5 + $0x28] sm:$0xff] %vm4652, %v5302
          %5319 = vst.msk [vmem:[#allocation5 + $0x30] sm:$0xff] %vm4652, %v5303
          %5320 = vst.msk [vmem:[#allocation5 + $0x38] sm:$0xff] %vm4652, %v5304
          %5321 = vst.msk [vmem:[#allocation5 + $0x40] sm:$0xff] %vm4652, %v5305
          %5322 = vst.msk [vmem:[#allocation5 + $0x48] sm:$0xff] %vm4652, %v5306
          %5323 = vst.msk [vmem:[#allocation5 + $0x50] sm:$0xff] %vm4652, %v5307
          %5324 = vst.msk [vmem:[#allocation5 + $0x58] sm:$0xff] %vm4652, %v5308
          %5325 = vst.msk [vmem:[#allocation5 + $0x60] sm:$0xff] %vm4652, %v5309
          %5326 = vst.msk [vmem:[#allocation5 + $0x68] sm:$0xff] %vm4652, %v5310
          %5327 = vst.msk [vmem:[#allocation5 + $0x70] sm:$0xff] %vm4652, %v5311
          %5328 = vst.msk [vmem:[#allocation5 + $0x78] sm:$0xff] %vm4652, %v5312
          %v5329 = vld [vmem:[#allocation5] sm:$0xff]
          %v5330 = vld [vmem:[#allocation5 + $0x8] sm:$0xff]
          %v5331 = vld [vmem:[#allocation5 + $0x10] sm:$0xff]
          %v5332 = vld [vmem:[#allocation5 + $0x18] sm:$0xff]
          %v5333 = vld [vmem:[#allocation5 + $0x20] sm:$0xff]
          %v5334 = vld [vmem:[#allocation5 + $0x28] sm:$0xff]
          %v5335 = vld [vmem:[#allocation5 + $0x30] sm:$0xff]
          %v5336 = vld [vmem:[#allocation5 + $0x38] sm:$0xff]
          %v5337 = vld [vmem:[#allocation5 + $0x40] sm:$0xff]
          %v5338 = vld [vmem:[#allocation5 + $0x48] sm:$0xff]
          %v5339 = vld [vmem:[#allocation5 + $0x50] sm:$0xff]
          %v5340 = vld [vmem:[#allocation5 + $0x58] sm:$0xff]
          %v5341 = vld [vmem:[#allocation5 + $0x60] sm:$0xff]
          %v5342 = vld [vmem:[#allocation5 + $0x68] sm:$0xff]
          %v5343 = vld [vmem:[#allocation5 + $0x70] sm:$0xff]
          %v5344 = vld [vmem:[#allocation5 + $0x78] sm:$0xff]
          %v5345 = vpack.c.bf16 %v5330, %v5329
          %v5346 = vpack.c.bf16 %v5332, %v5331
          %v5347 = vpack.c.bf16 %v5334, %v5333
          %v5348 = vpack.c.bf16 %v5336, %v5335
          %v5349 = vpack.c.bf16 %v5338, %v5337
          %v5350 = vpack.c.bf16 %v5340, %v5339
          %v5351 = vpack.c.bf16 %v5342, %v5341
          %v5352 = vpack.c.bf16 %v5344, %v5343
          %v5353 = vld [vmem:[#allocation15] sm:$0xf]
          %v5354 = vld [vmem:[#allocation15 + $0x4] sm:$0xf]
          %v5355 = vld [vmem:[#allocation15 + $0x8] sm:$0xf]
          %v5356 = vld [vmem:[#allocation15 + $0xc] sm:$0xf]
          %v5357 = vld [vmem:[#allocation15 + $0x10] sm:$0xf]
          %v5358 = vld [vmem:[#allocation15 + $0x14] sm:$0xf]
          %v5359 = vld [vmem:[#allocation15 + $0x18] sm:$0xf]
          %v5360 = vld [vmem:[#allocation15 + $0x1c] sm:$0xf]
          %v5361 = vld [vmem:[#allocation15 + $0x20] sm:$0xf]
          %v5362 = vld [vmem:[#allocation15 + $0x24] sm:$0xf]
          %v5363 = vld [vmem:[#allocation15 + $0x28] sm:$0xf]
          %v5364 = vld [vmem:[#allocation15 + $0x2c] sm:$0xf]
          %v5365 = vld [vmem:[#allocation15 + $0x30] sm:$0xf]
          %v5366 = vld [vmem:[#allocation15 + $0x34] sm:$0xf]
          %v5367 = vld [vmem:[#allocation15 + $0x38] sm:$0xf]
          %v5368 = vld [vmem:[#allocation15 + $0x3c] sm:$0xf]
          %v5369 = vld [vmem:[%s9] sm:$0x1]
          %v5371 = vlaneseq
          %v5372 = vshrl.u32 %v5371, 7
          %v5373 = vsub.s32 0, %v5372
          %v5374 = vrot.slane %v5369, %v5373
          %v5392 = vunpack.c.l.b16 %v5353
          %v5393 = vunpack.c.l.b16 %v5354
          %v5394 = vunpack.c.l.b16 %v5355
          %v5395 = vunpack.c.l.b16 %v5356
          %v5396 = vunpack.c.l.b16 %v5357
          %v5397 = vunpack.c.l.b16 %v5358
          %v5398 = vunpack.c.l.b16 %v5359
          %v5399 = vunpack.c.l.b16 %v5360
          %v5400 = vunpack.c.l.b16 %v5361
          %v5401 = vunpack.c.l.b16 %v5362
          %v5402 = vunpack.c.l.b16 %v5363
          %v5403 = vunpack.c.l.b16 %v5364
          %v5404 = vunpack.c.l.b16 %v5365
          %v5405 = vunpack.c.l.b16 %v5366
          %v5406 = vunpack.c.l.b16 %v5367
          %v5407 = vunpack.c.l.b16 %v5368
          %v5408 = vpack.c.b16 %v5393, %v5392
          %v5409 = vpack.c.b16 %v5395, %v5394
          %v5410 = vpack.c.b16 %v5397, %v5396
          %v5411 = vpack.c.b16 %v5399, %v5398
          %v5412 = vpack.c.b16 %v5401, %v5400
          %v5413 = vpack.c.b16 %v5403, %v5402
          %v5414 = vpack.c.b16 %v5405, %v5404
          %v5415 = vpack.c.b16 %v5407, %v5406
          %5424 = vmatprep.subr.bf16.mxu0 0
          %5425 = vmatpush1.bf16.msra.mxu0 %v5408
          %5426 = vmatprep.subr.bf16.mxu0 0
          %5427 = vmatpush1.bf16.msra.mxu0 %v5409
          %5428 = vmatprep.subr.bf16.mxu0 0
          %5429 = vmatpush1.bf16.msra.mxu0 %v5410
          %5430 = vmatprep.subr.bf16.mxu0 0
          %5431 = vmatpush1.bf16.msra.mxu0 %v5411
          %5432 = vmatprep.subr.bf16.mxu0 0
          %5433 = vmatpush1.bf16.msra.mxu0 %v5412
          %5434 = vmatprep.subr.bf16.mxu0 0
          %5435 = vmatpush1.bf16.msra.mxu0 %v5413
          %5436 = vmatprep.subr.bf16.mxu0 0
          %5437 = vmatpush1.bf16.msra.mxu0 %v5414
          %5438 = vmatprep.subr.bf16.mxu0 0
          %5439 = vmatpush1.bf16.msra.mxu0 %v5415
          %5440 = vmatprep.subr.bf16.mxu0 0
          %5441 = vmatpush1.bf16.msra.mxu0 0
          %5442 = vmatprep.subr.bf16.mxu0 0
          %5443 = vmatpush1.bf16.msra.mxu0 0
          %5444 = vmatprep.subr.bf16.mxu0 0
          %5445 = vmatpush1.bf16.msra.mxu0 0
          %5446 = vmatprep.subr.bf16.mxu0 0
          %5447 = vmatpush1.bf16.msra.mxu0 0
          %5448 = vmatprep.subr.bf16.mxu0 0
          %5449 = vmatpush1.bf16.msra.mxu0 0
          %5450 = vmatprep.subr.bf16.mxu0 0
          %5451 = vmatpush1.bf16.msra.mxu0 0
          %5452 = vmatprep.subr.bf16.mxu0 0
          %5453 = vmatpush1.bf16.msra.mxu0 0
          %5454 = vmatprep.subr.bf16.mxu0 0
          %5455 = vmatpush1.bf16.msra.mxu0 0
          %5456 = vmatprep.mubr.bf16.mxu0 0
          %5457 = vmatmul.mubr.bf16.gmra.mrb[0].mxu0 %v5345
          %v5458 = vpop.f32.mrb[0].mxu0
          %v5459 = vadd.f32 %v5374, %v5458
          %v5460 = vpop.f32.mrb[0].mxu0
          %v5461 = vpop.f32.mrb[0].mxu0
          %v5462 = vadd.f32 %v5374, %v5461
          %v5463 = vpop.f32.mrb[0].mxu0
          %5464 = vmatprep.mubr.bf16.mxu0 0
          %5465 = vmatmul.mubr.bf16.gmra.mrb[0].mxu0 %v5346
          %v5466 = vpop.f32.mrb[0].mxu0
          %v5467 = vadd.f32 %v5374, %v5466
          %v5468 = vpop.f32.mrb[0].mxu0
          %v5469 = vpop.f32.mrb[0].mxu0
          %v5470 = vadd.f32 %v5374, %v5469
          %v5471 = vpop.f32.mrb[0].mxu0
          %5472 = vmatprep.mubr.bf16.mxu0 0
          %5473 = vmatmul.mubr.bf16.gmra.mrb[0].mxu0 %v5347
          %v5474 = vpop.f32.mrb[0].mxu0
          %v5475 = vadd.f32 %v5374, %v5474
          %v5476 = vpop.f32.mrb[0].mxu0
          %v5477 = vpop.f32.mrb[0].mxu0
          %v5478 = vadd.f32 %v5374, %v5477
          %v5479 = vpop.f32.mrb[0].mxu0
          %5480 = vmatprep.mubr.bf16.mxu0 0
          %5481 = vmatmul.mubr.bf16.gmra.mrb[0].mxu0 %v5348
          %v5482 = vpop.f32.mrb[0].mxu0
          %v5483 = vadd.f32 %v5374, %v5482
          %v5484 = vpop.f32.mrb[0].mxu0
          %v5485 = vpop.f32.mrb[0].mxu0
          %v5486 = vadd.f32 %v5374, %v5485
          %v5487 = vpop.f32.mrb[0].mxu0
          %5488 = vmatprep.mubr.bf16.mxu0 0
          %5489 = vmatmul.mubr.bf16.gmra.mrb[0].mxu0 %v5349
          %v5490 = vpop.f32.mrb[0].mxu0
          %v5491 = vadd.f32 %v5374, %v5490
          %v5492 = vpop.f32.mrb[0].mxu0
          %v5493 = vpop.f32.mrb[0].mxu0
          %v5494 = vadd.f32 %v5374, %v5493
          %v5495 = vpop.f32.mrb[0].mxu0
          %5496 = vmatprep.mubr.bf16.mxu0 0
          %5497 = vmatmul.mubr.bf16.gmra.mrb[0].mxu0 %v5350
          %v5498 = vpop.f32.mrb[0].mxu0
          %v5499 = vadd.f32 %v5374, %v5498
          %v5500 = vpop.f32.mrb[0].mxu0
          %v5501 = vpop.f32.mrb[0].mxu0
          %v5502 = vadd.f32 %v5374, %v5501
          %v5503 = vpop.f32.mrb[0].mxu0
          %5504 = vmatprep.mubr.bf16.mxu0 0
          %5505 = vmatmul.mubr.bf16.gmra.mrb[0].mxu0 %v5351
          %v5506 = vpop.f32.mrb[0].mxu0
          %v5507 = vadd.f32 %v5374, %v5506
          %v5508 = vpop.f32.mrb[0].mxu0
          %v5509 = vpop.f32.mrb[0].mxu0
          %v5510 = vadd.f32 %v5374, %v5509
          %v5511 = vpop.f32.mrb[0].mxu0
          %5512 = vmatprep.mubr.bf16.mxu0 0
          %5513 = vmatmul.mubr.bf16.gmra.mrb[0].mxu0 %v5352
          %v5514 = vpop.f32.mrb[0].mxu0
          %v5515 = vadd.f32 %v5374, %v5514
          %v5516 = vpop.f32.mrb[0].mxu0
          %v5517 = vpop.f32.mrb[0].mxu0
          %v5518 = vadd.f32 %v5374, %v5517
          %v5519 = vpop.f32.mrb[0].mxu0
          %5520 = vdwg.mxu0
          %5521 = vst [vmem:[%s504] sm:$0xff] %v5459
          %5522 = vst [vmem:[%s504 + $0x8] sm:$0xff] %v5462
          %5523 = vst [vmem:[%s504 + $0x10] sm:$0xff] %v5467
          %5524 = vst [vmem:[%s504 + $0x18] sm:$0xff] %v5470
          %5525 = vst [vmem:[%s504 + $0x20] sm:$0xff] %v5475
          %5526 = vst [vmem:[%s504 + $0x28] sm:$0xff] %v5478
          %5527 = vst [vmem:[%s504 + $0x30] sm:$0xff] %v5483
          %5528 = vst [vmem:[%s504 + $0x38] sm:$0xff] %v5486
          %5529 = vst [vmem:[%s504 + $0x40] sm:$0xff] %v5491
          %5530 = vst [vmem:[%s504 + $0x48] sm:$0xff] %v5494
          %5531 = vst [vmem:[%s504 + $0x50] sm:$0xff] %v5499
          %5532 = vst [vmem:[%s504 + $0x58] sm:$0xff] %v5502
          %5533 = vst [vmem:[%s504 + $0x60] sm:$0xff] %v5507
          %5534 = vst [vmem:[%s504 + $0x68] sm:$0xff] %v5510
          %5535 = vst [vmem:[%s504 + $0x70] sm:$0xff] %v5515
          %5536 = vst [vmem:[%s504 + $0x78] sm:$0xff] %v5518
        $region92: #{tpu_custom_call.1} parent=59 // pred_fallthru
          _
        %s5537 = sand.u32 %s285, 1
        %s5538 = scalar_lea.sflag [#allocation8], %s5537
        %s5539 = sand.u32 %s285, 1
        %s5540 = smul.addr %s5539, 128
        %s5541 = scalar_lea.vmem [#allocation17], %s5540
        // Predicated region
        $region93: #{tpu_custom_call.1} parent=59 // pred_check
          %p5542 = pneg %p295
        $region94: #{tpu_custom_call.1} parent=59 // pred_check_branch
          %5544 = sbr.rel (%p5542) target = $region96
        $region95: #{tpu_custom_call.1} parent=59 // pred_region
          %s5545 = smul.u32 16, %s38
          %s5547 = ssub.s32 2048, 2048
          %5548 = vsyncadd %s5538, %s5547
          %s5549 = smul.addr %s37, 32
          %s5550 = sadd.s32 %s5545, %s5549
          %s5551 = smul.addr %s5550, 128
          %s5552 = scalar_lea.hbm %s10, %s5551
          %s5553 = sshll.u32 %s5541, 4
          %s5554 = int_to_ptr.vmem [resolvable:$true] %s5553
          %5559 = dma.vmem_to_hbm [thread:$0]  %s5554, 2048, %s5552, %s5538, 128, 128, 8
        $region96: #{tpu_custom_call.1} parent=59 // pred_fallthru
          _
      $region60: #{tpu_custom_call.1} parent=5 // pred_fallthru
        _
      %p5560 = scmp.le.s32.totalorder 2, %s27
      // Predicated region
      $region97: #{tpu_custom_call.1} parent=5 // pred_check
        %p5561 = pneg %p5560
      $region98: #{tpu_custom_call.1} parent=5 // pred_check_branch
        %5563 = sbr.rel (%p5561) target = $region100
      $region99: #{tpu_custom_call.1} parent=5 // pred_region
        %s5564 = ssub.s32 %s27, 2
        // Predicated region
        $region101: #{tpu_custom_call.1} parent=99 // pred_check
          %p5565 = pneg %p301
        $region102: #{tpu_custom_call.1} parent=99 // pred_check_branch
          %5567 = sbr.rel (%p5565) target = $region104
        $region103: #{tpu_custom_call.1} parent=99 // pred_region
          %s5568 = sand.u32 %s286, 1
          %s5569 = scalar_lea.sflag [#allocation8], %s5568
          %s5570 = sand.u32 %s286, 1
          %s5571 = smul.addr %s5570, 128
          %s5572 = scalar_lea.vmem [#allocation17], %s5571
          %5573 = dma.done %s5569, 2048
        $region104: #{tpu_custom_call.1} parent=99 // pred_fallthru
          _
      $region100: #{tpu_custom_call.1} parent=5 // pred_fallthru
        _
    $region6: #{tpu_custom_call.1} parent=1 // loop_footer
      %s31 = sadd.s32 1, %s27
    $region7: #{tpu_custom_call.1} parent=1 // loop_footer_branch
      %26 = sbr.rel target = $region3
    $region8: #{tpu_custom_call.1} parent=1 // loop_exit
      _
    %5574 = vsyncpa [#allocation7], 1
    %s5575 = scalar_lea.sflag [#allocation7], 1
    %5576 = vsyncpa %s5575, 1
    %5577 = vsyncpa [#allocation10], 1
    %s5578 = scalar_lea.sflag [#allocation10], 1
    %5579 = vsyncpa %s5578, 1
    %5580 = vsyncpa [#allocation13], 1
    %5581 = vsyncpa [#allocation16], 1
    %5582 = vsyncpa [#allocation8], 1
    %s5583 = scalar_lea.sflag [#allocation8], 1
    %5584 = vsyncpa %s5583, 1

</llo_original>
